<compile_context>
chip_gen: v7x
topology: tpu7x:2x2x1
jax: 0.10.0
libtpu: 0.0.40
codegen_flags: <defaults>
</compile_context>

<pallas_src>
import functools

import jax
import jax.numpy as jnp
from jax import lax
from jax.experimental import pallas as pl
from jax.experimental.pallas import tpu as pltpu


_PHASE1_TEMP_BYTES = 4 << 20       # cap on the f32 matmul temporary in phase 1
_RECURRENCE_FULL_UNROLL = 16       # fully unroll the serial loop up to this T
_RECURRENCE_UNROLL = 4             # fori_loop unroll factor for larger T


def _lstm_gates(g, c, H):
    """PyTorch LSTM gate order: i, f, g, o."""
    i = jax.nn.sigmoid(g[:, 0 * H:1 * H])
    f = jax.nn.sigmoid(g[:, 1 * H:2 * H])
    gg = jnp.tanh(g[:, 2 * H:3 * H])
    o = jax.nn.sigmoid(g[:, 3 * H:4 * H])
    c_new = f * c + i * gg
    h_new = o * jnp.tanh(c_new)
    return h_new, c_new


# ----------------------------------------------------------------------------
# Pallas kernel: bidirectional single-layer LSTM over a full sequence for one
# batch tile.  Grid is over the batch axis only; the whole time loop lives
# inside the kernel (the recurrence is serial).
# ----------------------------------------------------------------------------
def _bidir_lstm_kernel(xs_ref, wih_ref, b_ref, whhf_ref, whhb_ref, out_ref,
                       gx_scr, outf_scr, outb_scr, *, hidden_dim, t_chunk):
    """
    xs_ref  : (T, tn, P)   bf16 input patches, sequence-major
    wih_ref : (P, 8H)      bf16 [W_ih_fwd | W_ih_bwd], PyTorch gate order i,f,g,o
    b_ref   : (1, 8H)      f32  [b_fwd | b_bwd]  (b_ih + b_hh per direction)
    whhf_ref: (H, 4H)      f32  forward  W_hh^T
    whhb_ref: (H, 4H)      f32  backward W_hh^T
    out_ref : (T, tn, 2H)  f32  [h_fwd | h_bwd] per timestep
    gx_scr  : (T, tn, 8H)  bf16 precomputed input projections (VMEM scratch)
    outf_scr, outb_scr: (T, tn, H) f32 deferred per-direction outputs
    """
    H = hidden_dim
    T, tn, P = xs_ref.shape

    wih = wih_ref[...]
    bias = b_ref[...]            # (1, 8H): stride-0 sublane broadcast in the add
    whh_f = whhf_ref[...]
    whh_b = whhb_ref[...]

    # ---- Phase 1: input projections for every timestep, off the serial path.
    # A few long (t_chunk*tn, P) x (P, 8H) matmuls instead of T short ones;
    # bias added once per chunk; result stored as bf16.
    for t0 in range(0, T, t_chunk):
        x_blk = xs_ref[t0:t0 + t_chunk].reshape(t_chunk * tn, P)
        g_blk = jnp.dot(x_blk, wih, preferred_element_type=jnp.float32) + bias
        gx_scr[t0:t0 + t_chunk] = g_blk.astype(gx_scr.dtype).reshape(
            t_chunk, tn, 8 * H)

    # ---- Phase 2: serial bidirectional recurrence.  Forward scans t = s,
    # backward scans t = T-1-s in the same step.  h/c live in the loop carry
    # (per direction -> lane-offset-0 values, no half-lane masked stores), and
    # the per-step outputs go to per-direction VMEM scratches; out_ref is
    # assembled in bulk after the loop (off the critical path).
    def step(s, carry):
        h_f, c_f, h_b, c_b = carry
        tb = T - 1 - s
        rec_f = jnp.dot(h_f, whh_f, preferred_element_type=jnp.float32)  # (tn,4H)
        rec_b = jnp.dot(h_b, whh_b, preferred_element_type=jnp.float32)
        g_f = rec_f + gx_scr[s, :, 0:4 * H].astype(jnp.float32)
        g_b = rec_b + gx_scr[tb, :, 4 * H:8 * H].astype(jnp.float32)
        h_f, c_f = _lstm_gates(g_f, c_f, H)
        h_b, c_b = _lstm_gates(g_b, c_b, H)
        outf_scr[s] = h_f
        outb_scr[tb] = h_b
        return h_f, c_f, h_b, c_b

    z = jnp.zeros((tn, H), jnp.float32)      # matches get_init_hidden (zeros)
    carry = (z, z, z, z)
    if T <= _RECURRENCE_FULL_UNROLL:
        for s in range(T):
            carry = step(s, carry)
    else:
        carry = lax.fori_loop(0, T, step, carry, unroll=_RECURRENCE_UNROLL)

    # ---- Bulk writeback of the fused [fwd | bwd] output.
    out_ref[:, :, 0:H] = outf_scr[...]
    out_ref[:, :, H:2 * H] = outb_scr[...]


# ----------------------------------------------------------------------------
# Tiling / VMEM-budget helpers.
# ----------------------------------------------------------------------------
def _phase1_chunk(T, tn, H):
    """Largest divisor of T whose f32 matmul temp stays under the cap."""
    row_bytes = tn * 8 * H * 4
    best = 1
    for c in range(1, T + 1):
        if T % c == 0 and c * row_bytes <= _PHASE1_TEMP_BYTES:
            best = c
    return best


def _tile_vmem_bytes(T, tn, P, H):
    t_chunk = _phase1_chunk(T, tn, H)
    xs_blk = 2 * T * tn * P * 2                  # bf16 input block, double-buffered
    out_blk = 2 * T * tn * 2 * H * 4             # f32 output block, double-buffered
    gx = T * tn * 8 * H * 2                      # bf16 projections scratch
    out_scr = 2 * T * tn * H * 4                 # deferred fwd/bwd outputs
    p1 = 2 * t_chunk * tn * 8 * H * 4            # phase-1 f32 temp (+ epilogue slack)
    state = 4 * tn * H * 4                       # h/c carries if spilled
    w = 2 * (P * 8 * H * 2 + 2 * H * 4 * H * 4 + 8 * H * 4)   # weights + bias
    return xs_blk + out_blk + gx + out_scr + p1 + state + w


def _vmem_budget_and_limit():
    """(tile budget, vmem_limit_bytes) per TPU generation; conservative fallback."""
    try:
        kind = jax.devices()[0].device_kind.lower()
    except Exception:
        kind = ""
    if "v7" in kind:                                   # 64 MiB physical VMEM
        return 40 << 20, 56 << 20
    if any(v in kind for v in ("v4", "v5", "v6")):     # 128 MiB physical VMEM
        return 88 << 20, 100 << 20
    return 24 << 20, None                              # unknown: default scoped limit


def _choose_batch_tile(N, T, P, H, budget):
    """Largest sublane-aligned divisor of N that fits the VMEM budget, preferring
    >= 2 (ideally an even number of) grid steps for megacore + DMA overlap."""
    cands = sorted({d for d in range(8, N + 1, 8) if N % d == 0} | {N})
    fitting = [c for c in cands if _tile_vmem_bytes(T, c, P, H) <= budget]
    if not fitting:
        fitting = [cands[0]]
    multi = [c for c in fitting if N // c >= 2]
    pool = multi or fitting
    even = [c for c in pool if (N // c) % 2 == 0]
    return max(even or pool)


def bidir_lstm_pallas(xs, params, hidden_dim, *, batch_tile=None):
    """xs: (T, N, P) f32 -> (T, N, 2H) f32 with [..., :H] = fwd, [..., H:] = bwd."""
    T, N, P = xs.shape
    H = hidden_dim

    # Fused input weights [fwd | bwd] streamed in bf16 (default MXU precision
    # runs a bf16 pass anyway); recurrent weights/bias stay f32 (tiny).
    wih = jnp.concatenate([params["w_ih_f"].T, params["w_ih_b"].T],
                          axis=1).astype(jnp.bfloat16)                   # (P, 8H)
    whh_f = params["w_hh_f"].T.astype(jnp.float32)                       # (H, 4H)
    whh_b = params["w_hh_b"].T.astype(jnp.float32)                       # (H, 4H)
    b = jnp.concatenate([params["b_ih_f"] + params["b_hh_f"],
                         params["b_ih_b"] + params["b_hh_b"]]
                        ).reshape(1, 8 * H).astype(jnp.float32)          # (1, 8H)
    xs = xs.astype(jnp.bfloat16)

    budget, vmem_limit = _vmem_budget_and_limit()
    if batch_tile is None:
        batch_tile = _choose_batch_tile(N, T, P, H, budget)
    assert N % batch_tile == 0, (N, batch_tile)
    t_chunk = _phase1_chunk(T, batch_tile, H)

    kernel = functools.partial(_bidir_lstm_kernel, hidden_dim=H, t_chunk=t_chunk)
    cp_kwargs = dict(dimension_semantics=("parallel",))
    if vmem_limit is not None:
        cp_kwargs["vmem_limit_bytes"] = vmem_limit

    return pl.pallas_call(
        kernel,
        out_shape=jax.ShapeDtypeStruct((T, N, 2 * H), jnp.float32),
        grid=(N // batch_tile,),
        in_specs=[
            pl.BlockSpec((T, batch_tile, P), lambda i: (0, i, 0)),
            pl.BlockSpec((P, 8 * H), lambda i: (0, 0)),
            pl.BlockSpec((1, 8 * H), lambda i: (0, 0)),
            pl.BlockSpec((H, 4 * H), lambda i: (0, 0)),
            pl.BlockSpec((H, 4 * H), lambda i: (0, 0)),
        ],
        out_specs=pl.BlockSpec((T, batch_tile, 2 * H), lambda i: (0, i, 0)),
        scratch_shapes=[
            pltpu.VMEM((T, batch_tile, 8 * H), jnp.bfloat16),   # gx (projections)
            pltpu.VMEM((T, batch_tile, H), jnp.float32),        # fwd outputs
            pltpu.VMEM((T, batch_tile, H), jnp.float32),        # bwd outputs
        ],
        compiler_params=pltpu.CompilerParams(**cp_kwargs),
    )(xs, wih, b, whh_f, whh_b)


# ----------------------------------------------------------------------------
# Pure-JAX reference LSTM (full precision) for a correctness check.
# ----------------------------------------------------------------------------
def bidir_lstm_ref(xs, params, hidden_dim):
    H = hidden_dim
    T, N, P = xs.shape

    def run_dir(xseq, w_ih, w_hh, b_ih, b_hh):
        wih = w_ih.T
        whh = w_hh.T
        b = (b_ih + b_hh).reshape(1, 4 * H)

        def step(carry, x):
            h, c = carry
            g = (jnp.dot(x, wih, precision=lax.Precision.HIGHEST)
                 + jnp.dot(h, whh, precision=lax.Precision.HIGHEST) + b)
            i = jax.nn.sigmoid(g[:, 0 * H:1 * H])
            f = jax.nn.sigmoid(g[:, 1 * H:2 * H])
            gg = jnp.tanh(g[:, 2 * H:3 * H])
            o = jax.nn.sigmoid(g[:, 3 * H:4 * H])
            c = f * c + i * gg
            h = o * jnp.tanh(c)
            return (h, c), h

        h0 = jnp.zeros((N, H), jnp.float32)
        c0 = jnp.zeros((N, H), jnp.float32)
        _, hs = lax.scan(step, (h0, c0), xseq)
        return hs

    fwd = run_dir(xs, params["w_ih_f"], params["w_hh_f"],
                  params["b_ih_f"], params["b_hh_f"])
    bwd = run_dir(xs[::-1], params["w_ih_b"], params["w_hh_b"],
                  params["b_ih_b"], params["b_hh_b"])[::-1]
    return jnp.concatenate([fwd, bwd], axis=-1)


# ----------------------------------------------------------------------------
# ReNetLayer forward (patchify + layout glue in JAX, RNN hot-path in Pallas).
# ----------------------------------------------------------------------------
def renet_layer_forward(x, params, window_size, hidden_dim, direction="H",
                        rnn_fn=None):
    if rnn_fn is None:
        rnn_fn = bidir_lstm_pallas
    B, C, Himg, Wimg = x.shape
    ws0, ws1 = window_size
    Hp, Wp = Himg // ws0, Wimg // ws1
    P = ws0 * ws1 * C

    # get_valid_patches: patches[b, hp, wp, :] flattened over (c, i, j)
    patches = x.reshape(B, C, Hp, ws0, Wp, ws1).transpose(0, 2, 4, 1, 3, 5)
    patches = patches.reshape(B, Hp, Wp, P)

    if direction == "H":
        # sequence along Hp, groups G = Wp  ->  xs[hp, wp*B + b] = patches[b, hp, wp]
        xs = patches.transpose(1, 2, 0, 3).reshape(Hp, Wp * B, P)
        T, G = Hp, Wp
    elif direction == "V":
        # sequence along Wp, groups G = Hp  ->  xs[wp, hp*B + b] = patches[b, hp, wp]
        xs = patches.transpose(2, 1, 0, 3).reshape(Wp, Hp * B, P)
        T, G = Wp, Hp
    else:
        raise NotImplementedError

    out = rnn_fn(xs, params, hidden_dim)            # (T, G*B, 2H) fused fwd|bwd
    out = out.reshape(T, G, B, 2 * hidden_dim)      # free reshape (contiguous)

    if direction == "V":
        # (T=Wp, G=Hp, B, 2H) -> (B, 2H, Hp, Wp)
        fm = out.transpose(2, 3, 1, 0)
    else:
        # (T=Hp, G=Wp, B, 2H) -> (B, 2H, Hp, Wp)
        fm = out.transpose(2, 3, 0, 1)
    return fm


# ----------------------------------------------------------------------------
# Deterministic parameter init (nn.LSTM shapes, uniform(+-1/sqrt(H))).
# ----------------------------------------------------------------------------
def init_lstm_params(key, input_size, hidden_dim):
    H = hidden_dim
    bound = 1.0 / (H ** 0.5)
    ks = jax.random.split(key, 8)

    def u(k, shape):
        return jax.random.uniform(k, shape, jnp.float32, -bound, bound)

    return {
        "w_ih_f": u(ks[0], (4 * H, input_size)),
        "w_hh_f": u(ks[1], (4 * H, H)),
        "b_ih_f": u(ks[2], (4 * H,)),
        "b_hh_f": u(ks[3], (4 * H,)),
        "w_ih_b": u(ks[4], (4 * H, input_size)),
        "w_hh_b": u(ks[5], (4 * H, H)),
        "b_ih_b": u(ks[6], (4 * H,)),
        "b_hh_b": u(ks[7], (4 * H,)),
    }


if __name__ == "__main__":
    key = jax.random.PRNGKey(0)
    B, C, Himg, Wimg = 2, 4, 16, 16
    ws = 2
    hidden = 32

    kx, kp = jax.random.split(key)
    x = jax.random.normal(kx, (B, C, Himg, Wimg), jnp.float32)
    P = ws * ws * C
    params = init_lstm_params(kp, P, hidden)

    # Check both sweep directions against a full-precision pure-JAX reference.
    # The kernel streams xs/W_ih/gx in bf16 with f32 MXU accumulation, so the
    # tolerance is looser than bit-exact f32.
    for direction in ("H", "V"):
        fm = renet_layer_forward(x, params, (ws, ws), hidden, direction=direction)
        fm = jax.block_until_ready(fm)
        assert fm.shape == (B, 2 * hidden, Himg // ws, Wimg // ws), fm.shape

        ref = renet_layer_forward(x, params, (ws, ws), hidden,
                                  direction=direction, rnn_fn=bidir_lstm_ref)
        ref = jax.block_until_ready(ref)
        max_err = float(jnp.max(jnp.abs(fm - ref)))
        assert max_err < 5e-2, f"direction={direction}: mismatch vs ref: {max_err}"

    print("KERNEL_OK")
</pallas_src>

<mosaic_0001>
module attributes {stable_mosaic.version = 11 : i64} {
  func.func @_bidir_lstm_kernel(%arg0: i32, %arg1: memref<8x8x16xbf16, #tpu.memory_space<vmem>>, %arg2: memref<16x256xbf16, #tpu.memory_space<vmem>>, %arg3: memref<1x256xf32, #tpu.memory_space<vmem>>, %arg4: memref<32x128xf32, #tpu.memory_space<vmem>>, %arg5: memref<32x128xf32, #tpu.memory_space<vmem>>, %arg6: memref<8x8x64xf32, #tpu.memory_space<vmem>>, %arg7: memref<8x8x256xbf16, #tpu.memory_space<vmem>>, %arg8: memref<8x8x32xf32, #tpu.memory_space<vmem>>, %arg9: memref<8x8x32xf32, #tpu.memory_space<vmem>>) attributes {dimension_semantics = [#tpu.dimension_semantics<parallel>], iteration_bounds = array<i64: 2>, scalar_prefetch = 0 : i64, scratch_operands = 3 : i64, tpu.core_type = #tpu.core_type<tc>, window_params = [{transform_indices = @transform_0, window_bounds = array<i64: 8, 8, 16>}, {pipeline_mode = #tpu.pipeline_mode<synchronous>, transform_indices = @transform_1, window_bounds = array<i64: 16, 256>}, {pipeline_mode = #tpu.pipeline_mode<synchronous>, transform_indices = @transform_2, window_bounds = array<i64: 1, 256>}, {pipeline_mode = #tpu.pipeline_mode<synchronous>, transform_indices = @transform_3, window_bounds = array<i64: 32, 128>}, {pipeline_mode = #tpu.pipeline_mode<synchronous>, transform_indices = @transform_4, window_bounds = array<i64: 32, 128>}, {transform_indices = @transform_5, window_bounds = array<i64: 8, 8, 64>}]} {
    %c0 = arith.constant 0 : index
    %c0_0 = arith.constant 0 : index
    %0 = vector.load %arg2[%c0, %c0_0] : memref<16x256xbf16, #tpu.memory_space<vmem>>, vector<16x256xbf16>
    %c0_1 = arith.constant 0 : index
    %c0_2 = arith.constant 0 : index
    %1 = vector.load %arg3[%c0_1, %c0_2] : memref<1x256xf32, #tpu.memory_space<vmem>>, vector<1x256xf32>
    %c0_3 = arith.constant 0 : index
    %c0_4 = arith.constant 0 : index
    %2 = vector.load %arg4[%c0_3, %c0_4] : memref<32x128xf32, #tpu.memory_space<vmem>>, vector<32x128xf32>
    %c0_5 = arith.constant 0 : index
    %c0_6 = arith.constant 0 : index
    %3 = vector.load %arg5[%c0_5, %c0_6] : memref<32x128xf32, #tpu.memory_space<vmem>>, vector<32x128xf32>
    %c0_7 = arith.constant 0 : index
    %c0_8 = arith.constant 0 : index
    %c0_9 = arith.constant 0 : index
    %4 = vector.load %arg1[%c0_7, %c0_8, %c0_9] : memref<8x8x16xbf16, #tpu.memory_space<vmem>>, vector<8x8x16xbf16>
    %5 = vector.shape_cast %4 : vector<8x8x16xbf16> to vector<64x16xbf16>
    %cst = arith.constant dense<0.000000e+00> : vector<64x256xf32>
    %6 = tpu.matmul %5, %0, %cst {dimension_numbers = #tpu.dot_dimension_numbers<[1], [0], [0], [1], [0, 0, 1, 1], [], []>} : vector<64x16xbf16>, vector<16x256xbf16>, vector<64x256xf32> -> vector<64x256xf32>
    %7 = vector.broadcast %1 : vector<1x256xf32> to vector<64x256xf32>
    %8 = arith.addf %6, %7 : vector<64x256xf32>
    %9 = arith.truncf %8 : vector<64x256xf32> to vector<64x256xbf16>
    %10 = vector.shape_cast %9 : vector<64x256xbf16> to vector<8x8x256xbf16>
    %c0_10 = arith.constant 0 : index
    %c0_11 = arith.constant 0 : index
    %c0_12 = arith.constant 0 : index
    %11 = vector.load %arg7[%c0_10, %c0_11, %c0_12] : memref<8x8x256xbf16, #tpu.memory_space<vmem>>, vector<8x8x256xbf16>
    tpu.vector_store %arg7[%c0_10, %c0_11, %c0_12], %10 {strides = array<i32>} : memref<8x8x256xbf16, #tpu.memory_space<vmem>>, vector<8x8x256xbf16>,
    %cst_13 = arith.constant 0.000000e+00 : f32
    %12 = vector.broadcast %cst_13 : f32 to vector<8x32xf32>
    %cst_14 = arith.constant dense<0.000000e+00> : vector<8x128xf32>
    %13 = tpu.matmul %12, %2, %cst_14 {dimension_numbers = #tpu.dot_dimension_numbers<[1], [0], [0], [1], [0, 0, 1, 1], [], []>} : vector<8x32xf32>, vector<32x128xf32>, vector<8x128xf32> -> vector<8x128xf32>
    %cst_15 = arith.constant dense<0.000000e+00> : vector<8x128xf32>
    %14 = tpu.matmul %12, %3, %cst_15 {dimension_numbers = #tpu.dot_dimension_numbers<[1], [0], [0], [1], [0, 0, 1, 1], [], []>} : vector<8x32xf32>, vector<32x128xf32>, vector<8x128xf32> -> vector<8x128xf32>
    %c0_16 = arith.constant 0 : index
    %c0_17 = arith.constant 0 : index
    %c0_18 = arith.constant 0 : index
    %15 = vector.load %arg7[%c0_16, %c0_17, %c0_18] : memref<8x8x256xbf16, #tpu.memory_space<vmem>>, vector<1x8x128xbf16>
    %16 = vector.shape_cast %15 : vector<1x8x128xbf16> to vector<8x128xbf16>
    %17 = arith.extf %16 : vector<8x128xbf16> to vector<8x128xf32>
    %18 = arith.addf %13, %17 : vector<8x128xf32>
    %c7 = arith.constant 7 : index
    %c0_19 = arith.constant 0 : index
    %c128 = arith.constant 128 : index
    %19 = vector.load %arg7[%c7, %c0_19, %c128] : memref<8x8x256xbf16, #tpu.memory_space<vmem>>, vector<1x8x128xbf16>
    %20 = vector.shape_cast %19 : vector<1x8x128xbf16> to vector<8x128xbf16>
    %21 = arith.extf %20 : vector<8x128xbf16> to vector<8x128xf32>
    %22 = arith.addf %14, %21 : vector<8x128xf32>
    %23 = vector.extract_strided_slice %18 {offsets = [0, 0], sizes = [8, 32], strides = [1, 1]} : vector<8x128xf32> to vector<8x32xf32>
    %24 = arith.negf %23 : vector<8x32xf32>
    %25 = math.exp %24 : vector<8x32xf32>
    %cst_20 = arith.constant 1.000000e+00 : f32
    %26 = vector.broadcast %cst_20 : f32 to vector<8x32xf32>
    %27 = arith.addf %26, %25 : vector<8x32xf32>
    %28 = arith.divf %26, %27 : vector<8x32xf32>
    %29 = vector.extract_strided_slice %18 {offsets = [0, 32], sizes = [8, 32], strides = [1, 1]} : vector<8x128xf32> to vector<8x32xf32>
    %30 = arith.negf %29 : vector<8x32xf32>
    %31 = math.exp %30 : vector<8x32xf32>
    %cst_21 = arith.constant 1.000000e+00 : f32
    %32 = vector.broadcast %cst_21 : f32 to vector<8x32xf32>
    %33 = arith.addf %32, %31 : vector<8x32xf32>
    %34 = arith.divf %32, %33 : vector<8x32xf32>
    %35 = vector.extract_strided_slice %18 {offsets = [0, 64], sizes = [8, 32], strides = [1, 1]} : vector<8x128xf32> to vector<8x32xf32>
    %36 = math.tanh %35 : vector<8x32xf32>
    %37 = vector.extract_strided_slice %18 {offsets = [0, 96], sizes = [8, 32], strides = [1, 1]} : vector<8x128xf32> to vector<8x32xf32>
    %38 = arith.negf %37 : vector<8x32xf32>
    %39 = math.exp %38 : vector<8x32xf32>
    %cst_22 = arith.constant 1.000000e+00 : f32
    %40 = vector.broadcast %cst_22 : f32 to vector<8x32xf32>
    %41 = arith.addf %40, %39 : vector<8x32xf32>
    %42 = arith.divf %40, %41 : vector<8x32xf32>
    %43 = arith.mulf %34, %12 : vector<8x32xf32>
    %44 = arith.mulf %28, %36 : vector<8x32xf32>
    %45 = arith.addf %43, %44 : vector<8x32xf32>
    %46 = math.tanh %45 : vector<8x32xf32>
    %47 = arith.mulf %42, %46 : vector<8x32xf32>
    %48 = vector.extract_strided_slice %22 {offsets = [0, 0], sizes = [8, 32], strides = [1, 1]} : vector<8x128xf32> to vector<8x32xf32>
    %49 = arith.negf %48 : vector<8x32xf32>
    %50 = math.exp %49 : vector<8x32xf32>
    %cst_23 = arith.constant 1.000000e+00 : f32
    %51 = vector.broadcast %cst_23 : f32 to vector<8x32xf32>
    %52 = arith.addf %51, %50 : vector<8x32xf32>
    %53 = arith.divf %51, %52 : vector<8x32xf32>
    %54 = vector.extract_strided_slice %22 {offsets = [0, 32], sizes = [8, 32], strides = [1, 1]} : vector<8x128xf32> to vector<8x32xf32>
    %55 = arith.negf %54 : vector<8x32xf32>
    %56 = math.exp %55 : vector<8x32xf32>
    %cst_24 = arith.constant 1.000000e+00 : f32
    %57 = vector.broadcast %cst_24 : f32 to vector<8x32xf32>
    %58 = arith.addf %57, %56 : vector<8x32xf32>
    %59 = arith.divf %57, %58 : vector<8x32xf32>
    %60 = vector.extract_strided_slice %22 {offsets = [0, 64], sizes = [8, 32], strides = [1, 1]} : vector<8x128xf32> to vector<8x32xf32>
    %61 = math.tanh %60 : vector<8x32xf32>
    %62 = vector.extract_strided_slice %22 {offsets = [0, 96], sizes = [8, 32], strides = [1, 1]} : vector<8x128xf32> to vector<8x32xf32>
    %63 = arith.negf %62 : vector<8x32xf32>
    %64 = math.exp %63 : vector<8x32xf32>
    %cst_25 = arith.constant 1.000000e+00 : f32
    %65 = vector.broadcast %cst_25 : f32 to vector<8x32xf32>
    %66 = arith.addf %65, %64 : vector<8x32xf32>
    %67 = arith.divf %65, %66 : vector<8x32xf32>
    %68 = arith.mulf %59, %12 : vector<8x32xf32>
    %69 = arith.mulf %53, %61 : vector<8x32xf32>
    %70 = arith.addf %68, %69 : vector<8x32xf32>
    %71 = math.tanh %70 : vector<8x32xf32>
    %72 = arith.mulf %67, %71 : vector<8x32xf32>
    %c0_26 = arith.constant 0 : index
    %c0_27 = arith.constant 0 : index
    %c0_28 = arith.constant 0 : index
    %73 = vector.load %arg8[%c0_26, %c0_27, %c0_28] : memref<8x8x32xf32, #tpu.memory_space<vmem>>, vector<1x8x32xf32>
    %74 = vector.shape_cast %73 : vector<1x8x32xf32> to vector<8x32xf32>
    %75 = vector.shape_cast %47 : vector<8x32xf32> to vector<1x8x32xf32>
    tpu.vector_store %arg8[%c0_26, %c0_27, %c0_28], %75 {strides = array<i32>} : memref<8x8x32xf32, #tpu.memory_space<vmem>>, vector<1x8x32xf32>,
    %c7_29 = arith.constant 7 : index
    %c0_30 = arith.constant 0 : index
    %c0_31 = arith.constant 0 : index
    %76 = vector.load %arg9[%c7_29, %c0_30, %c0_31] : memref<8x8x32xf32, #tpu.memory_space<vmem>>, vector<1x8x32xf32>
    %77 = vector.shape_cast %76 : vector<1x8x32xf32> to vector<8x32xf32>
    %78 = vector.shape_cast %72 : vector<8x32xf32> to vector<1x8x32xf32>
    tpu.vector_store %arg9[%c7_29, %c0_30, %c0_31], %78 {strides = array<i32>} : memref<8x8x32xf32, #tpu.memory_space<vmem>>, vector<1x8x32xf32>,
    %cst_32 = arith.constant dense<0.000000e+00> : vector<8x128xf32>
    %79 = tpu.matmul %47, %2, %cst_32 {dimension_numbers = #tpu.dot_dimension_numbers<[1], [0], [0], [1], [0, 0, 1, 1], [], []>} : vector<8x32xf32>, vector<32x128xf32>, vector<8x128xf32> -> vector<8x128xf32>
    %cst_33 = arith.constant dense<0.000000e+00> : vector<8x128xf32>
    %80 = tpu.matmul %72, %3, %cst_33 {dimension_numbers = #tpu.dot_dimension_numbers<[1], [0], [0], [1], [0, 0, 1, 1], [], []>} : vector<8x32xf32>, vector<32x128xf32>, vector<8x128xf32> -> vector<8x128xf32>
    %c1 = arith.constant 1 : index
    %c0_34 = arith.constant 0 : index
    %c0_35 = arith.constant 0 : index
    %81 = vector.load %arg7[%c1, %c0_34, %c0_35] : memref<8x8x256xbf16, #tpu.memory_space<vmem>>, vector<1x8x128xbf16>
    %82 = vector.shape_cast %81 : vector<1x8x128xbf16> to vector<8x128xbf16>
    %83 = arith.extf %82 : vector<8x128xbf16> to vector<8x128xf32>
    %84 = arith.addf %79, %83 : vector<8x128xf32>
    %c6 = arith.constant 6 : index
    %c0_36 = arith.constant 0 : index
    %c128_37 = arith.constant 128 : index
    %85 = vector.load %arg7[%c6, %c0_36, %c128_37] : memref<8x8x256xbf16, #tpu.memory_space<vmem>>, vector<1x8x128xbf16>
    %86 = vector.shape_cast %85 : vector<1x8x128xbf16> to vector<8x128xbf16>
    %87 = arith.extf %86 : vector<8x128xbf16> to vector<8x128xf32>
    %88 = arith.addf %80, %87 : vector<8x128xf32>
    %89 = vector.extract_strided_slice %84 {offsets = [0, 0], sizes = [8, 32], strides = [1, 1]} : vector<8x128xf32> to vector<8x32xf32>
    %90 = arith.negf %89 : vector<8x32xf32>
    %91 = math.exp %90 : vector<8x32xf32>
    %cst_38 = arith.constant 1.000000e+00 : f32
    %92 = vector.broadcast %cst_38 : f32 to vector<8x32xf32>
    %93 = arith.addf %92, %91 : vector<8x32xf32>
    %94 = arith.divf %92, %93 : vector<8x32xf32>
    %95 = vector.extract_strided_slice %84 {offsets = [0, 32], sizes = [8, 32], strides = [1, 1]} : vector<8x128xf32> to vector<8x32xf32>
    %96 = arith.negf %95 : vector<8x32xf32>
    %97 = math.exp %96 : vector<8x32xf32>
    %cst_39 = arith.constant 1.000000e+00 : f32
    %98 = vector.broadcast %cst_39 : f32 to vector<8x32xf32>
    %99 = arith.addf %98, %97 : vector<8x32xf32>
    %100 = arith.divf %98, %99 : vector<8x32xf32>
    %101 = vector.extract_strided_slice %84 {offsets = [0, 64], sizes = [8, 32], strides = [1, 1]} : vector<8x128xf32> to vector<8x32xf32>
    %102 = math.tanh %101 : vector<8x32xf32>
    %103 = vector.extract_strided_slice %84 {offsets = [0, 96], sizes = [8, 32], strides = [1, 1]} : vector<8x128xf32> to vector<8x32xf32>
    %104 = arith.negf %103 : vector<8x32xf32>
    %105 = math.exp %104 : vector<8x32xf32>
    %cst_40 = arith.constant 1.000000e+00 : f32
    %106 = vector.broadcast %cst_40 : f32 to vector<8x32xf32>
    %107 = arith.addf %106, %105 : vector<8x32xf32>
    %108 = arith.divf %106, %107 : vector<8x32xf32>
    %109 = arith.mulf %100, %45 : vector<8x32xf32>
    %110 = arith.mulf %94, %102 : vector<8x32xf32>
    %111 = arith.addf %109, %110 : vector<8x32xf32>
    %112 = math.tanh %111 : vector<8x32xf32>
    %113 = arith.mulf %108, %112 : vector<8x32xf32>
    %114 = vector.extract_strided_slice %88 {offsets = [0, 0], sizes = [8, 32], strides = [1, 1]} : vector<8x128xf32> to vector<8x32xf32>
    %115 = arith.negf %114 : vector<8x32xf32>
    %116 = math.exp %115 : vector<8x32xf32>
    %cst_41 = arith.constant 1.000000e+00 : f32
    %117 = vector.broadcast %cst_41 : f32 to vector<8x32xf32>
    %118 = arith.addf %117, %116 : vector<8x32xf32>
    %119 = arith.divf %117, %118 : vector<8x32xf32>
    %120 = vector.extract_strided_slice %88 {offsets = [0, 32], sizes = [8, 32], strides = [1, 1]} : vector<8x128xf32> to vector<8x32xf32>
    %121 = arith.negf %120 : vector<8x32xf32>
    %122 = math.exp %121 : vector<8x32xf32>
    %cst_42 = arith.constant 1.000000e+00 : f32
    %123 = vector.broadcast %cst_42 : f32 to vector<8x32xf32>
    %124 = arith.addf %123, %122 : vector<8x32xf32>
    %125 = arith.divf %123, %124 : vector<8x32xf32>
    %126 = vector.extract_strided_slice %88 {offsets = [0, 64], sizes = [8, 32], strides = [1, 1]} : vector<8x128xf32> to vector<8x32xf32>
    %127 = math.tanh %126 : vector<8x32xf32>
    %128 = vector.extract_strided_slice %88 {offsets = [0, 96], sizes = [8, 32], strides = [1, 1]} : vector<8x128xf32> to vector<8x32xf32>
    %129 = arith.negf %128 : vector<8x32xf32>
    %130 = math.exp %129 : vector<8x32xf32>
    %cst_43 = arith.constant 1.000000e+00 : f32
    %131 = vector.broadcast %cst_43 : f32 to vector<8x32xf32>
    %132 = arith.addf %131, %130 : vector<8x32xf32>
    %133 = arith.divf %131, %132 : vector<8x32xf32>
    %134 = arith.mulf %125, %70 : vector<8x32xf32>
    %135 = arith.mulf %119, %127 : vector<8x32xf32>
    %136 = arith.addf %134, %135 : vector<8x32xf32>
    %137 = math.tanh %136 : vector<8x32xf32>
    %138 = arith.mulf %133, %137 : vector<8x32xf32>
    %c1_44 = arith.constant 1 : index
    %c0_45 = arith.constant 0 : index
    %c0_46 = arith.constant 0 : index
    %139 = vector.load %arg8[%c1_44, %c0_45, %c0_46] : memref<8x8x32xf32, #tpu.memory_space<vmem>>, vector<1x8x32xf32>
    %140 = vector.shape_cast %139 : vector<1x8x32xf32> to vector<8x32xf32>
    %141 = vector.shape_cast %113 : vector<8x32xf32> to vector<1x8x32xf32>
    tpu.vector_store %arg8[%c1_44, %c0_45, %c0_46], %141 {strides = array<i32>} : memref<8x8x32xf32, #tpu.memory_space<vmem>>, vector<1x8x32xf32>,
    %c6_47 = arith.constant 6 : index
    %c0_48 = arith.constant 0 : index
    %c0_49 = arith.constant 0 : index
    %142 = vector.load %arg9[%c6_47, %c0_48, %c0_49] : memref<8x8x32xf32, #tpu.memory_space<vmem>>, vector<1x8x32xf32>
    %143 = vector.shape_cast %142 : vector<1x8x32xf32> to vector<8x32xf32>
    %144 = vector.shape_cast %138 : vector<8x32xf32> to vector<1x8x32xf32>
    tpu.vector_store %arg9[%c6_47, %c0_48, %c0_49], %144 {strides = array<i32>} : memref<8x8x32xf32, #tpu.memory_space<vmem>>, vector<1x8x32xf32>,
    %cst_50 = arith.constant dense<0.000000e+00> : vector<8x128xf32>
    %145 = tpu.matmul %113, %2, %cst_50 {dimension_numbers = #tpu.dot_dimension_numbers<[1], [0], [0], [1], [0, 0, 1, 1], [], []>} : vector<8x32xf32>, vector<32x128xf32>, vector<8x128xf32> -> vector<8x128xf32>
    %cst_51 = arith.constant dense<0.000000e+00> : vector<8x128xf32>
    %146 = tpu.matmul %138, %3, %cst_51 {dimension_numbers = #tpu.dot_dimension_numbers<[1], [0], [0], [1], [0, 0, 1, 1], [], []>} : vector<8x32xf32>, vector<32x128xf32>, vector<8x128xf32> -> vector<8x128xf32>
    %c2 = arith.constant 2 : index
    %c0_52 = arith.constant 0 : index
    %c0_53 = arith.constant 0 : index
    %147 = vector.load %arg7[%c2, %c0_52, %c0_53] : memref<8x8x256xbf16, #tpu.memory_space<vmem>>, vector<1x8x128xbf16>
    %148 = vector.shape_cast %147 : vector<1x8x128xbf16> to vector<8x128xbf16>
    %149 = arith.extf %148 : vector<8x128xbf16> to vector<8x128xf32>
    %150 = arith.addf %145, %149 : vector<8x128xf32>
    %c5 = arith.constant 5 : index
    %c0_54 = arith.constant 0 : index
    %c128_55 = arith.constant 128 : index
    %151 = vector.load %arg7[%c5, %c0_54, %c128_55] : memref<8x8x256xbf16, #tpu.memory_space<vmem>>, vector<1x8x128xbf16>
    %152 = vector.shape_cast %151 : vector<1x8x128xbf16> to vector<8x128xbf16>
    %153 = arith.extf %152 : vector<8x128xbf16> to vector<8x128xf32>
    %154 = arith.addf %146, %153 : vector<8x128xf32>
    %155 = vector.extract_strided_slice %150 {offsets = [0, 0], sizes = [8, 32], strides = [1, 1]} : vector<8x128xf32> to vector<8x32xf32>
    %156 = arith.negf %155 : vector<8x32xf32>
    %157 = math.exp %156 : vector<8x32xf32>
    %cst_56 = arith.constant 1.000000e+00 : f32
    %158 = vector.broadcast %cst_56 : f32 to vector<8x32xf32>
    %159 = arith.addf %158, %157 : vector<8x32xf32>
    %160 = arith.divf %158, %159 : vector<8x32xf32>
    %161 = vector.extract_strided_slice %150 {offsets = [0, 32], sizes = [8, 32], strides = [1, 1]} : vector<8x128xf32> to vector<8x32xf32>
    %162 = arith.negf %161 : vector<8x32xf32>
    %163 = math.exp %162 : vector<8x32xf32>
    %cst_57 = arith.constant 1.000000e+00 : f32
    %164 = vector.broadcast %cst_57 : f32 to vector<8x32xf32>
    %165 = arith.addf %164, %163 : vector<8x32xf32>
    %166 = arith.divf %164, %165 : vector<8x32xf32>
    %167 = vector.extract_strided_slice %150 {offsets = [0, 64], sizes = [8, 32], strides = [1, 1]} : vector<8x128xf32> to vector<8x32xf32>
    %168 = math.tanh %167 : vector<8x32xf32>
    %169 = vector.extract_strided_slice %150 {offsets = [0, 96], sizes = [8, 32], strides = [1, 1]} : vector<8x128xf32> to vector<8x32xf32>
    %170 = arith.negf %169 : vector<8x32xf32>
    %171 = math.exp %170 : vector<8x32xf32>
    %cst_58 = arith.constant 1.000000e+00 : f32
    %172 = vector.broadcast %cst_58 : f32 to vector<8x32xf32>
    %173 = arith.addf %172, %171 : vector<8x32xf32>
    %174 = arith.divf %172, %173 : vector<8x32xf32>
    %175 = arith.mulf %166, %111 : vector<8x32xf32>
    %176 = arith.mulf %160, %168 : vector<8x32xf32>
    %177 = arith.addf %175, %176 : vector<8x32xf32>
    %178 = math.tanh %177 : vector<8x32xf32>
    %179 = arith.mulf %174, %178 : vector<8x32xf32>
    %180 = vector.extract_strided_slice %154 {offsets = [0, 0], sizes = [8, 32], strides = [1, 1]} : vector<8x128xf32> to vector<8x32xf32>
    %181 = arith.negf %180 : vector<8x32xf32>
    %182 = math.exp %181 : vector<8x32xf32>
    %cst_59 = arith.constant 1.000000e+00 : f32
    %183 = vector.broadcast %cst_59 : f32 to vector<8x32xf32>
    %184 = arith.addf %183, %182 : vector<8x32xf32>
    %185 = arith.divf %183, %184 : vector<8x32xf32>
    %186 = vector.extract_strided_slice %154 {offsets = [0, 32], sizes = [8, 32], strides = [1, 1]} : vector<8x128xf32> to vector<8x32xf32>
    %187 = arith.negf %186 : vector<8x32xf32>
    %188 = math.exp %187 : vector<8x32xf32>
    %cst_60 = arith.constant 1.000000e+00 : f32
    %189 = vector.broadcast %cst_60 : f32 to vector<8x32xf32>
    %190 = arith.addf %189, %188 : vector<8x32xf32>
    %191 = arith.divf %189, %190 : vector<8x32xf32>
    %192 = vector.extract_strided_slice %154 {offsets = [0, 64], sizes = [8, 32], strides = [1, 1]} : vector<8x128xf32> to vector<8x32xf32>
    %193 = math.tanh %192 : vector<8x32xf32>
    %194 = vector.extract_strided_slice %154 {offsets = [0, 96], sizes = [8, 32], strides = [1, 1]} : vector<8x128xf32> to vector<8x32xf32>
    %195 = arith.negf %194 : vector<8x32xf32>
    %196 = math.exp %195 : vector<8x32xf32>
    %cst_61 = arith.constant 1.000000e+00 : f32
    %197 = vector.broadcast %cst_61 : f32 to vector<8x32xf32>
    %198 = arith.addf %197, %196 : vector<8x32xf32>
    %199 = arith.divf %197, %198 : vector<8x32xf32>
    %200 = arith.mulf %191, %136 : vector<8x32xf32>
    %201 = arith.mulf %185, %193 : vector<8x32xf32>
    %202 = arith.addf %200, %201 : vector<8x32xf32>
    %203 = math.tanh %202 : vector<8x32xf32>
    %204 = arith.mulf %199, %203 : vector<8x32xf32>
    %c2_62 = arith.constant 2 : index
    %c0_63 = arith.constant 0 : index
    %c0_64 = arith.constant 0 : index
    %205 = vector.load %arg8[%c2_62, %c0_63, %c0_64] : memref<8x8x32xf32, #tpu.memory_space<vmem>>, vector<1x8x32xf32>
    %206 = vector.shape_cast %205 : vector<1x8x32xf32> to vector<8x32xf32>
    %207 = vector.shape_cast %179 : vector<8x32xf32> to vector<1x8x32xf32>
    tpu.vector_store %arg8[%c2_62, %c0_63, %c0_64], %207 {strides = array<i32>} : memref<8x8x32xf32, #tpu.memory_space<vmem>>, vector<1x8x32xf32>,
    %c5_65 = arith.constant 5 : index
    %c0_66 = arith.constant 0 : index
    %c0_67 = arith.constant 0 : index
    %208 = vector.load %arg9[%c5_65, %c0_66, %c0_67] : memref<8x8x32xf32, #tpu.memory_space<vmem>>, vector<1x8x32xf32>
    %209 = vector.shape_cast %208 : vector<1x8x32xf32> to vector<8x32xf32>
    %210 = vector.shape_cast %204 : vector<8x32xf32> to vector<1x8x32xf32>
    tpu.vector_store %arg9[%c5_65, %c0_66, %c0_67], %210 {strides = array<i32>} : memref<8x8x32xf32, #tpu.memory_space<vmem>>, vector<1x8x32xf32>,
    %cst_68 = arith.constant dense<0.000000e+00> : vector<8x128xf32>
    %211 = tpu.matmul %179, %2, %cst_68 {dimension_numbers = #tpu.dot_dimension_numbers<[1], [0], [0], [1], [0, 0, 1, 1], [], []>} : vector<8x32xf32>, vector<32x128xf32>, vector<8x128xf32> -> vector<8x128xf32>
    %cst_69 = arith.constant dense<0.000000e+00> : vector<8x128xf32>
    %212 = tpu.matmul %204, %3, %cst_69 {dimension_numbers = #tpu.dot_dimension_numbers<[1], [0], [0], [1], [0, 0, 1, 1], [], []>} : vector<8x32xf32>, vector<32x128xf32>, vector<8x128xf32> -> vector<8x128xf32>
    %c3 = arith.constant 3 : index
    %c0_70 = arith.constant 0 : index
    %c0_71 = arith.constant 0 : index
    %213 = vector.load %arg7[%c3, %c0_70, %c0_71] : memref<8x8x256xbf16, #tpu.memory_space<vmem>>, vector<1x8x128xbf16>
    %214 = vector.shape_cast %213 : vector<1x8x128xbf16> to vector<8x128xbf16>
    %215 = arith.extf %214 : vector<8x128xbf16> to vector<8x128xf32>
    %216 = arith.addf %211, %215 : vector<8x128xf32>
    %c4 = arith.constant 4 : index
    %c0_72 = arith.constant 0 : index
    %c128_73 = arith.constant 128 : index
    %217 = vector.load %arg7[%c4, %c0_72, %c128_73] : memref<8x8x256xbf16, #tpu.memory_space<vmem>>, vector<1x8x128xbf16>
    %218 = vector.shape_cast %217 : vector<1x8x128xbf16> to vector<8x128xbf16>
    %219 = arith.extf %218 : vector<8x128xbf16> to vector<8x128xf32>
    %220 = arith.addf %212, %219 : vector<8x128xf32>
    %221 = vector.extract_strided_slice %216 {offsets = [0, 0], sizes = [8, 32], strides = [1, 1]} : vector<8x128xf32> to vector<8x32xf32>
    %222 = arith.negf %221 : vector<8x32xf32>
    %223 = math.exp %222 : vector<8x32xf32>
    %cst_74 = arith.constant 1.000000e+00 : f32
    %224 = vector.broadcast %cst_74 : f32 to vector<8x32xf32>
    %225 = arith.addf %224, %223 : vector<8x32xf32>
    %226 = arith.divf %224, %225 : vector<8x32xf32>
    %227 = vector.extract_strided_slice %216 {offsets = [0, 32], sizes = [8, 32], strides = [1, 1]} : vector<8x128xf32> to vector<8x32xf32>
    %228 = arith.negf %227 : vector<8x32xf32>
    %229 = math.exp %228 : vector<8x32xf32>
    %cst_75 = arith.constant 1.000000e+00 : f32
    %230 = vector.broadcast %cst_75 : f32 to vector<8x32xf32>
    %231 = arith.addf %230, %229 : vector<8x32xf32>
    %232 = arith.divf %230, %231 : vector<8x32xf32>
    %233 = vector.extract_strided_slice %216 {offsets = [0, 64], sizes = [8, 32], strides = [1, 1]} : vector<8x128xf32> to vector<8x32xf32>
    %234 = math.tanh %233 : vector<8x32xf32>
    %235 = vector.extract_strided_slice %216 {offsets = [0, 96], sizes = [8, 32], strides = [1, 1]} : vector<8x128xf32> to vector<8x32xf32>
    %236 = arith.negf %235 : vector<8x32xf32>
    %237 = math.exp %236 : vector<8x32xf32>
    %cst_76 = arith.constant 1.000000e+00 : f32
    %238 = vector.broadcast %cst_76 : f32 to vector<8x32xf32>
    %239 = arith.addf %238, %237 : vector<8x32xf32>
    %240 = arith.divf %238, %239 : vector<8x32xf32>
    %241 = arith.mulf %232, %177 : vector<8x32xf32>
    %242 = arith.mulf %226, %234 : vector<8x32xf32>
    %243 = arith.addf %241, %242 : vector<8x32xf32>
    %244 = math.tanh %243 : vector<8x32xf32>
    %245 = arith.mulf %240, %244 : vector<8x32xf32>
    %246 = vector.extract_strided_slice %220 {offsets = [0, 0], sizes = [8, 32], strides = [1, 1]} : vector<8x128xf32> to vector<8x32xf32>
    %247 = arith.negf %246 : vector<8x32xf32>
    %248 = math.exp %247 : vector<8x32xf32>
    %cst_77 = arith.constant 1.000000e+00 : f32
    %249 = vector.broadcast %cst_77 : f32 to vector<8x32xf32>
    %250 = arith.addf %249, %248 : vector<8x32xf32>
    %251 = arith.divf %249, %250 : vector<8x32xf32>
    %252 = vector.extract_strided_slice %220 {offsets = [0, 32], sizes = [8, 32], strides = [1, 1]} : vector<8x128xf32> to vector<8x32xf32>
    %253 = arith.negf %252 : vector<8x32xf32>
    %254 = math.exp %253 : vector<8x32xf32>
    %cst_78 = arith.constant 1.000000e+00 : f32
    %255 = vector.broadcast %cst_78 : f32 to vector<8x32xf32>
    %256 = arith.addf %255, %254 : vector<8x32xf32>
    %257 = arith.divf %255, %256 : vector<8x32xf32>
    %258 = vector.extract_strided_slice %220 {offsets = [0, 64], sizes = [8, 32], strides = [1, 1]} : vector<8x128xf32> to vector<8x32xf32>
    %259 = math.tanh %258 : vector<8x32xf32>
    %260 = vector.extract_strided_slice %220 {offsets = [0, 96], sizes = [8, 32], strides = [1, 1]} : vector<8x128xf32> to vector<8x32xf32>
    %261 = arith.negf %260 : vector<8x32xf32>
    %262 = math.exp %261 : vector<8x32xf32>
    %cst_79 = arith.constant 1.000000e+00 : f32
    %263 = vector.broadcast %cst_79 : f32 to vector<8x32xf32>
    %264 = arith.addf %263, %262 : vector<8x32xf32>
    %265 = arith.divf %263, %264 : vector<8x32xf32>
    %266 = arith.mulf %257, %202 : vector<8x32xf32>
    %267 = arith.mulf %251, %259 : vector<8x32xf32>
    %268 = arith.addf %266, %267 : vector<8x32xf32>
    %269 = math.tanh %268 : vector<8x32xf32>
    %270 = arith.mulf %265, %269 : vector<8x32xf32>
    %c3_80 = arith.constant 3 : index
    %c0_81 = arith.constant 0 : index
    %c0_82 = arith.constant 0 : index
    %271 = vector.load %arg8[%c3_80, %c0_81, %c0_82] : memref<8x8x32xf32, #tpu.memory_space<vmem>>, vector<1x8x32xf32>
    %272 = vector.shape_cast %271 : vector<1x8x32xf32> to vector<8x32xf32>
    %273 = vector.shape_cast %245 : vector<8x32xf32> to vector<1x8x32xf32>
    tpu.vector_store %arg8[%c3_80, %c0_81, %c0_82], %273 {strides = array<i32>} : memref<8x8x32xf32, #tpu.memory_space<vmem>>, vector<1x8x32xf32>,
    %c4_83 = arith.constant 4 : index
    %c0_84 = arith.constant 0 : index
    %c0_85 = arith.constant 0 : index
    %274 = vector.load %arg9[%c4_83, %c0_84, %c0_85] : memref<8x8x32xf32, #tpu.memory_space<vmem>>, vector<1x8x32xf32>
    %275 = vector.shape_cast %274 : vector<1x8x32xf32> to vector<8x32xf32>
    %276 = vector.shape_cast %270 : vector<8x32xf32> to vector<1x8x32xf32>
    tpu.vector_store %arg9[%c4_83, %c0_84, %c0_85], %276 {strides = array<i32>} : memref<8x8x32xf32, #tpu.memory_space<vmem>>, vector<1x8x32xf32>,
    %cst_86 = arith.constant dense<0.000000e+00> : vector<8x128xf32>
    %277 = tpu.matmul %245, %2, %cst_86 {dimension_numbers = #tpu.dot_dimension_numbers<[1], [0], [0], [1], [0, 0, 1, 1], [], []>} : vector<8x32xf32>, vector<32x128xf32>, vector<8x128xf32> -> vector<8x128xf32>
    %cst_87 = arith.constant dense<0.000000e+00> : vector<8x128xf32>
    %278 = tpu.matmul %270, %3, %cst_87 {dimension_numbers = #tpu.dot_dimension_numbers<[1], [0], [0], [1], [0, 0, 1, 1], [], []>} : vector<8x32xf32>, vector<32x128xf32>, vector<8x128xf32> -> vector<8x128xf32>
    %c4_88 = arith.constant 4 : index
    %c0_89 = arith.constant 0 : index
    %c0_90 = arith.constant 0 : index
    %279 = vector.load %arg7[%c4_88, %c0_89, %c0_90] : memref<8x8x256xbf16, #tpu.memory_space<vmem>>, vector<1x8x128xbf16>
    %280 = vector.shape_cast %279 : vector<1x8x128xbf16> to vector<8x128xbf16>
    %281 = arith.extf %280 : vector<8x128xbf16> to vector<8x128xf32>
    %282 = arith.addf %277, %281 : vector<8x128xf32>
    %c3_91 = arith.constant 3 : index
    %c0_92 = arith.constant 0 : index
    %c128_93 = arith.constant 128 : index
    %283 = vector.load %arg7[%c3_91, %c0_92, %c128_93] : memref<8x8x256xbf16, #tpu.memory_space<vmem>>, vector<1x8x128xbf16>
    %284 = vector.shape_cast %283 : vector<1x8x128xbf16> to vector<8x128xbf16>
    %285 = arith.extf %284 : vector<8x128xbf16> to vector<8x128xf32>
    %286 = arith.addf %278, %285 : vector<8x128xf32>
    %287 = vector.extract_strided_slice %282 {offsets = [0, 0], sizes = [8, 32], strides = [1, 1]} : vector<8x128xf32> to vector<8x32xf32>
    %288 = arith.negf %287 : vector<8x32xf32>
    %289 = math.exp %288 : vector<8x32xf32>
    %cst_94 = arith.constant 1.000000e+00 : f32
    %290 = vector.broadcast %cst_94 : f32 to vector<8x32xf32>
    %291 = arith.addf %290, %289 : vector<8x32xf32>
    %292 = arith.divf %290, %291 : vector<8x32xf32>
    %293 = vector.extract_strided_slice %282 {offsets = [0, 32], sizes = [8, 32], strides = [1, 1]} : vector<8x128xf32> to vector<8x32xf32>
    %294 = arith.negf %293 : vector<8x32xf32>
    %295 = math.exp %294 : vector<8x32xf32>
    %cst_95 = arith.constant 1.000000e+00 : f32
    %296 = vector.broadcast %cst_95 : f32 to vector<8x32xf32>
    %297 = arith.addf %296, %295 : vector<8x32xf32>
    %298 = arith.divf %296, %297 : vector<8x32xf32>
    %299 = vector.extract_strided_slice %282 {offsets = [0, 64], sizes = [8, 32], strides = [1, 1]} : vector<8x128xf32> to vector<8x32xf32>
    %300 = math.tanh %299 : vector<8x32xf32>
    %301 = vector.extract_strided_slice %282 {offsets = [0, 96], sizes = [8, 32], strides = [1, 1]} : vector<8x128xf32> to vector<8x32xf32>
    %302 = arith.negf %301 : vector<8x32xf32>
    %303 = math.exp %302 : vector<8x32xf32>
    %cst_96 = arith.constant 1.000000e+00 : f32
    %304 = vector.broadcast %cst_96 : f32 to vector<8x32xf32>
    %305 = arith.addf %304, %303 : vector<8x32xf32>
    %306 = arith.divf %304, %305 : vector<8x32xf32>
    %307 = arith.mulf %298, %243 : vector<8x32xf32>
    %308 = arith.mulf %292, %300 : vector<8x32xf32>
    %309 = arith.addf %307, %308 : vector<8x32xf32>
    %310 = math.tanh %309 : vector<8x32xf32>
    %311 = arith.mulf %306, %310 : vector<8x32xf32>
    %312 = vector.extract_strided_slice %286 {offsets = [0, 0], sizes = [8, 32], strides = [1, 1]} : vector<8x128xf32> to vector<8x32xf32>
    %313 = arith.negf %312 : vector<8x32xf32>
    %314 = math.exp %313 : vector<8x32xf32>
    %cst_97 = arith.constant 1.000000e+00 : f32
    %315 = vector.broadcast %cst_97 : f32 to vector<8x32xf32>
    %316 = arith.addf %315, %314 : vector<8x32xf32>
    %317 = arith.divf %315, %316 : vector<8x32xf32>
    %318 = vector.extract_strided_slice %286 {offsets = [0, 32], sizes = [8, 32], strides = [1, 1]} : vector<8x128xf32> to vector<8x32xf32>
    %319 = arith.negf %318 : vector<8x32xf32>
    %320 = math.exp %319 : vector<8x32xf32>
    %cst_98 = arith.constant 1.000000e+00 : f32
    %321 = vector.broadcast %cst_98 : f32 to vector<8x32xf32>
    %322 = arith.addf %321, %320 : vector<8x32xf32>
    %323 = arith.divf %321, %322 : vector<8x32xf32>
    %324 = vector.extract_strided_slice %286 {offsets = [0, 64], sizes = [8, 32], strides = [1, 1]} : vector<8x128xf32> to vector<8x32xf32>
    %325 = math.tanh %324 : vector<8x32xf32>
    %326 = vector.extract_strided_slice %286 {offsets = [0, 96], sizes = [8, 32], strides = [1, 1]} : vector<8x128xf32> to vector<8x32xf32>
    %327 = arith.negf %326 : vector<8x32xf32>
    %328 = math.exp %327 : vector<8x32xf32>
    %cst_99 = arith.constant 1.000000e+00 : f32
    %329 = vector.broadcast %cst_99 : f32 to vector<8x32xf32>
    %330 = arith.addf %329, %328 : vector<8x32xf32>
    %331 = arith.divf %329, %330 : vector<8x32xf32>
    %332 = arith.mulf %323, %268 : vector<8x32xf32>
    %333 = arith.mulf %317, %325 : vector<8x32xf32>
    %334 = arith.addf %332, %333 : vector<8x32xf32>
    %335 = math.tanh %334 : vector<8x32xf32>
    %336 = arith.mulf %331, %335 : vector<8x32xf32>
    %c4_100 = arith.constant 4 : index
    %c0_101 = arith.constant 0 : index
    %c0_102 = arith.constant 0 : index
    %337 = vector.load %arg8[%c4_100, %c0_101, %c0_102] : memref<8x8x32xf32, #tpu.memory_space<vmem>>, vector<1x8x32xf32>
    %338 = vector.shape_cast %337 : vector<1x8x32xf32> to vector<8x32xf32>
    %339 = vector.shape_cast %311 : vector<8x32xf32> to vector<1x8x32xf32>
    tpu.vector_store %arg8[%c4_100, %c0_101, %c0_102], %339 {strides = array<i32>} : memref<8x8x32xf32, #tpu.memory_space<vmem>>, vector<1x8x32xf32>,
    %c3_103 = arith.constant 3 : index
    %c0_104 = arith.constant 0 : index
    %c0_105 = arith.constant 0 : index
    %340 = vector.load %arg9[%c3_103, %c0_104, %c0_105] : memref<8x8x32xf32, #tpu.memory_space<vmem>>, vector<1x8x32xf32>
    %341 = vector.shape_cast %340 : vector<1x8x32xf32> to vector<8x32xf32>
    %342 = vector.shape_cast %336 : vector<8x32xf32> to vector<1x8x32xf32>
    tpu.vector_store %arg9[%c3_103, %c0_104, %c0_105], %342 {strides = array<i32>} : memref<8x8x32xf32, #tpu.memory_space<vmem>>, vector<1x8x32xf32>,
    %cst_106 = arith.constant dense<0.000000e+00> : vector<8x128xf32>
    %343 = tpu.matmul %311, %2, %cst_106 {dimension_numbers = #tpu.dot_dimension_numbers<[1], [0], [0], [1], [0, 0, 1, 1], [], []>} : vector<8x32xf32>, vector<32x128xf32>, vector<8x128xf32> -> vector<8x128xf32>
    %cst_107 = arith.constant dense<0.000000e+00> : vector<8x128xf32>
    %344 = tpu.matmul %336, %3, %cst_107 {dimension_numbers = #tpu.dot_dimension_numbers<[1], [0], [0], [1], [0, 0, 1, 1], [], []>} : vector<8x32xf32>, vector<32x128xf32>, vector<8x128xf32> -> vector<8x128xf32>
    %c5_108 = arith.constant 5 : index
    %c0_109 = arith.constant 0 : index
    %c0_110 = arith.constant 0 : index
    %345 = vector.load %arg7[%c5_108, %c0_109, %c0_110] : memref<8x8x256xbf16, #tpu.memory_space<vmem>>, vector<1x8x128xbf16>
    %346 = vector.shape_cast %345 : vector<1x8x128xbf16> to vector<8x128xbf16>
    %347 = arith.extf %346 : vector<8x128xbf16> to vector<8x128xf32>
    %348 = arith.addf %343, %347 : vector<8x128xf32>
    %c2_111 = arith.constant 2 : index
    %c0_112 = arith.constant 0 : index
    %c128_113 = arith.constant 128 : index
    %349 = vector.load %arg7[%c2_111, %c0_112, %c128_113] : memref<8x8x256xbf16, #tpu.memory_space<vmem>>, vector<1x8x128xbf16>
    %350 = vector.shape_cast %349 : vector<1x8x128xbf16> to vector<8x128xbf16>
    %351 = arith.extf %350 : vector<8x128xbf16> to vector<8x128xf32>
    %352 = arith.addf %344, %351 : vector<8x128xf32>
    %353 = vector.extract_strided_slice %348 {offsets = [0, 0], sizes = [8, 32], strides = [1, 1]} : vector<8x128xf32> to vector<8x32xf32>
    %354 = arith.negf %353 : vector<8x32xf32>
    %355 = math.exp %354 : vector<8x32xf32>
    %cst_114 = arith.constant 1.000000e+00 : f32
    %356 = vector.broadcast %cst_114 : f32 to vector<8x32xf32>
    %357 = arith.addf %356, %355 : vector<8x32xf32>
    %358 = arith.divf %356, %357 : vector<8x32xf32>
    %359 = vector.extract_strided_slice %348 {offsets = [0, 32], sizes = [8, 32], strides = [1, 1]} : vector<8x128xf32> to vector<8x32xf32>
    %360 = arith.negf %359 : vector<8x32xf32>
    %361 = math.exp %360 : vector<8x32xf32>
    %cst_115 = arith.constant 1.000000e+00 : f32
    %362 = vector.broadcast %cst_115 : f32 to vector<8x32xf32>
    %363 = arith.addf %362, %361 : vector<8x32xf32>
    %364 = arith.divf %362, %363 : vector<8x32xf32>
    %365 = vector.extract_strided_slice %348 {offsets = [0, 64], sizes = [8, 32], strides = [1, 1]} : vector<8x128xf32> to vector<8x32xf32>
    %366 = math.tanh %365 : vector<8x32xf32>
    %367 = vector.extract_strided_slice %348 {offsets = [0, 96], sizes = [8, 32], strides = [1, 1]} : vector<8x128xf32> to vector<8x32xf32>
    %368 = arith.negf %367 : vector<8x32xf32>
    %369 = math.exp %368 : vector<8x32xf32>
    %cst_116 = arith.constant 1.000000e+00 : f32
    %370 = vector.broadcast %cst_116 : f32 to vector<8x32xf32>
    %371 = arith.addf %370, %369 : vector<8x32xf32>
    %372 = arith.divf %370, %371 : vector<8x32xf32>
    %373 = arith.mulf %364, %309 : vector<8x32xf32>
    %374 = arith.mulf %358, %366 : vector<8x32xf32>
    %375 = arith.addf %373, %374 : vector<8x32xf32>
    %376 = math.tanh %375 : vector<8x32xf32>
    %377 = arith.mulf %372, %376 : vector<8x32xf32>
    %378 = vector.extract_strided_slice %352 {offsets = [0, 0], sizes = [8, 32], strides = [1, 1]} : vector<8x128xf32> to vector<8x32xf32>
    %379 = arith.negf %378 : vector<8x32xf32>
    %380 = math.exp %379 : vector<8x32xf32>
    %cst_117 = arith.constant 1.000000e+00 : f32
    %381 = vector.broadcast %cst_117 : f32 to vector<8x32xf32>
    %382 = arith.addf %381, %380 : vector<8x32xf32>
    %383 = arith.divf %381, %382 : vector<8x32xf32>
    %384 = vector.extract_strided_slice %352 {offsets = [0, 32], sizes = [8, 32], strides = [1, 1]} : vector<8x128xf32> to vector<8x32xf32>
    %385 = arith.negf %384 : vector<8x32xf32>
    %386 = math.exp %385 : vector<8x32xf32>
    %cst_118 = arith.constant 1.000000e+00 : f32
    %387 = vector.broadcast %cst_118 : f32 to vector<8x32xf32>
    %388 = arith.addf %387, %386 : vector<8x32xf32>
    %389 = arith.divf %387, %388 : vector<8x32xf32>
    %390 = vector.extract_strided_slice %352 {offsets = [0, 64], sizes = [8, 32], strides = [1, 1]} : vector<8x128xf32> to vector<8x32xf32>
    %391 = math.tanh %390 : vector<8x32xf32>
    %392 = vector.extract_strided_slice %352 {offsets = [0, 96], sizes = [8, 32], strides = [1, 1]} : vector<8x128xf32> to vector<8x32xf32>
    %393 = arith.negf %392 : vector<8x32xf32>
    %394 = math.exp %393 : vector<8x32xf32>
    %cst_119 = arith.constant 1.000000e+00 : f32
    %395 = vector.broadcast %cst_119 : f32 to vector<8x32xf32>
    %396 = arith.addf %395, %394 : vector<8x32xf32>
    %397 = arith.divf %395, %396 : vector<8x32xf32>
    %398 = arith.mulf %389, %334 : vector<8x32xf32>
    %399 = arith.mulf %383, %391 : vector<8x32xf32>
    %400 = arith.addf %398, %399 : vector<8x32xf32>
    %401 = math.tanh %400 : vector<8x32xf32>
    %402 = arith.mulf %397, %401 : vector<8x32xf32>
    %c5_120 = arith.constant 5 : index
    %c0_121 = arith.constant 0 : index
    %c0_122 = arith.constant 0 : index
    %403 = vector.load %arg8[%c5_120, %c0_121, %c0_122] : memref<8x8x32xf32, #tpu.memory_space<vmem>>, vector<1x8x32xf32>
    %404 = vector.shape_cast %403 : vector<1x8x32xf32> to vector<8x32xf32>
    %405 = vector.shape_cast %377 : vector<8x32xf32> to vector<1x8x32xf32>
    tpu.vector_store %arg8[%c5_120, %c0_121, %c0_122], %405 {strides = array<i32>} : memref<8x8x32xf32, #tpu.memory_space<vmem>>, vector<1x8x32xf32>,
    %c2_123 = arith.constant 2 : index
    %c0_124 = arith.constant 0 : index
    %c0_125 = arith.constant 0 : index
    %406 = vector.load %arg9[%c2_123, %c0_124, %c0_125] : memref<8x8x32xf32, #tpu.memory_space<vmem>>, vector<1x8x32xf32>
    %407 = vector.shape_cast %406 : vector<1x8x32xf32> to vector<8x32xf32>
    %408 = vector.shape_cast %402 : vector<8x32xf32> to vector<1x8x32xf32>
    tpu.vector_store %arg9[%c2_123, %c0_124, %c0_125], %408 {strides = array<i32>} : memref<8x8x32xf32, #tpu.memory_space<vmem>>, vector<1x8x32xf32>,
    %cst_126 = arith.constant dense<0.000000e+00> : vector<8x128xf32>
    %409 = tpu.matmul %377, %2, %cst_126 {dimension_numbers = #tpu.dot_dimension_numbers<[1], [0], [0], [1], [0, 0, 1, 1], [], []>} : vector<8x32xf32>, vector<32x128xf32>, vector<8x128xf32> -> vector<8x128xf32>
    %cst_127 = arith.constant dense<0.000000e+00> : vector<8x128xf32>
    %410 = tpu.matmul %402, %3, %cst_127 {dimension_numbers = #tpu.dot_dimension_numbers<[1], [0], [0], [1], [0, 0, 1, 1], [], []>} : vector<8x32xf32>, vector<32x128xf32>, vector<8x128xf32> -> vector<8x128xf32>
    %c6_128 = arith.constant 6 : index
    %c0_129 = arith.constant 0 : index
    %c0_130 = arith.constant 0 : index
    %411 = vector.load %arg7[%c6_128, %c0_129, %c0_130] : memref<8x8x256xbf16, #tpu.memory_space<vmem>>, vector<1x8x128xbf16>
    %412 = vector.shape_cast %411 : vector<1x8x128xbf16> to vector<8x128xbf16>
    %413 = arith.extf %412 : vector<8x128xbf16> to vector<8x128xf32>
    %414 = arith.addf %409, %413 : vector<8x128xf32>
    %c1_131 = arith.constant 1 : index
    %c0_132 = arith.constant 0 : index
    %c128_133 = arith.constant 128 : index
    %415 = vector.load %arg7[%c1_131, %c0_132, %c128_133] : memref<8x8x256xbf16, #tpu.memory_space<vmem>>, vector<1x8x128xbf16>
    %416 = vector.shape_cast %415 : vector<1x8x128xbf16> to vector<8x128xbf16>
    %417 = arith.extf %416 : vector<8x128xbf16> to vector<8x128xf32>
    %418 = arith.addf %410, %417 : vector<8x128xf32>
    %419 = vector.extract_strided_slice %414 {offsets = [0, 0], sizes = [8, 32], strides = [1, 1]} : vector<8x128xf32> to vector<8x32xf32>
    %420 = arith.negf %419 : vector<8x32xf32>
    %421 = math.exp %420 : vector<8x32xf32>
    %cst_134 = arith.constant 1.000000e+00 : f32
    %422 = vector.broadcast %cst_134 : f32 to vector<8x32xf32>
    %423 = arith.addf %422, %421 : vector<8x32xf32>
    %424 = arith.divf %422, %423 : vector<8x32xf32>
    %425 = vector.extract_strided_slice %414 {offsets = [0, 32], sizes = [8, 32], strides = [1, 1]} : vector<8x128xf32> to vector<8x32xf32>
    %426 = arith.negf %425 : vector<8x32xf32>
    %427 = math.exp %426 : vector<8x32xf32>
    %cst_135 = arith.constant 1.000000e+00 : f32
    %428 = vector.broadcast %cst_135 : f32 to vector<8x32xf32>
    %429 = arith.addf %428, %427 : vector<8x32xf32>
    %430 = arith.divf %428, %429 : vector<8x32xf32>
    %431 = vector.extract_strided_slice %414 {offsets = [0, 64], sizes = [8, 32], strides = [1, 1]} : vector<8x128xf32> to vector<8x32xf32>
    %432 = math.tanh %431 : vector<8x32xf32>
    %433 = vector.extract_strided_slice %414 {offsets = [0, 96], sizes = [8, 32], strides = [1, 1]} : vector<8x128xf32> to vector<8x32xf32>
    %434 = arith.negf %433 : vector<8x32xf32>
    %435 = math.exp %434 : vector<8x32xf32>
    %cst_136 = arith.constant 1.000000e+00 : f32
    %436 = vector.broadcast %cst_136 : f32 to vector<8x32xf32>
    %437 = arith.addf %436, %435 : vector<8x32xf32>
    %438 = arith.divf %436, %437 : vector<8x32xf32>
    %439 = arith.mulf %430, %375 : vector<8x32xf32>
    %440 = arith.mulf %424, %432 : vector<8x32xf32>
    %441 = arith.addf %439, %440 : vector<8x32xf32>
    %442 = math.tanh %441 : vector<8x32xf32>
    %443 = arith.mulf %438, %442 : vector<8x32xf32>
    %444 = vector.extract_strided_slice %418 {offsets = [0, 0], sizes = [8, 32], strides = [1, 1]} : vector<8x128xf32> to vector<8x32xf32>
    %445 = arith.negf %444 : vector<8x32xf32>
    %446 = math.exp %445 : vector<8x32xf32>
    %cst_137 = arith.constant 1.000000e+00 : f32
    %447 = vector.broadcast %cst_137 : f32 to vector<8x32xf32>
    %448 = arith.addf %447, %446 : vector<8x32xf32>
    %449 = arith.divf %447, %448 : vector<8x32xf32>
    %450 = vector.extract_strided_slice %418 {offsets = [0, 32], sizes = [8, 32], strides = [1, 1]} : vector<8x128xf32> to vector<8x32xf32>
    %451 = arith.negf %450 : vector<8x32xf32>
    %452 = math.exp %451 : vector<8x32xf32>
    %cst_138 = arith.constant 1.000000e+00 : f32
    %453 = vector.broadcast %cst_138 : f32 to vector<8x32xf32>
    %454 = arith.addf %453, %452 : vector<8x32xf32>
    %455 = arith.divf %453, %454 : vector<8x32xf32>
    %456 = vector.extract_strided_slice %418 {offsets = [0, 64], sizes = [8, 32], strides = [1, 1]} : vector<8x128xf32> to vector<8x32xf32>
    %457 = math.tanh %456 : vector<8x32xf32>
    %458 = vector.extract_strided_slice %418 {offsets = [0, 96], sizes = [8, 32], strides = [1, 1]} : vector<8x128xf32> to vector<8x32xf32>
    %459 = arith.negf %458 : vector<8x32xf32>
    %460 = math.exp %459 : vector<8x32xf32>
    %cst_139 = arith.constant 1.000000e+00 : f32
    %461 = vector.broadcast %cst_139 : f32 to vector<8x32xf32>
    %462 = arith.addf %461, %460 : vector<8x32xf32>
    %463 = arith.divf %461, %462 : vector<8x32xf32>
    %464 = arith.mulf %455, %400 : vector<8x32xf32>
    %465 = arith.mulf %449, %457 : vector<8x32xf32>
    %466 = arith.addf %464, %465 : vector<8x32xf32>
    %467 = math.tanh %466 : vector<8x32xf32>
    %468 = arith.mulf %463, %467 : vector<8x32xf32>
    %c6_140 = arith.constant 6 : index
    %c0_141 = arith.constant 0 : index
    %c0_142 = arith.constant 0 : index
    %469 = vector.load %arg8[%c6_140, %c0_141, %c0_142] : memref<8x8x32xf32, #tpu.memory_space<vmem>>, vector<1x8x32xf32>
    %470 = vector.shape_cast %469 : vector<1x8x32xf32> to vector<8x32xf32>
    %471 = vector.shape_cast %443 : vector<8x32xf32> to vector<1x8x32xf32>
    tpu.vector_store %arg8[%c6_140, %c0_141, %c0_142], %471 {strides = array<i32>} : memref<8x8x32xf32, #tpu.memory_space<vmem>>, vector<1x8x32xf32>,
    %c1_143 = arith.constant 1 : index
    %c0_144 = arith.constant 0 : index
    %c0_145 = arith.constant 0 : index
    %472 = vector.load %arg9[%c1_143, %c0_144, %c0_145] : memref<8x8x32xf32, #tpu.memory_space<vmem>>, vector<1x8x32xf32>
    %473 = vector.shape_cast %472 : vector<1x8x32xf32> to vector<8x32xf32>
    %474 = vector.shape_cast %468 : vector<8x32xf32> to vector<1x8x32xf32>
    tpu.vector_store %arg9[%c1_143, %c0_144, %c0_145], %474 {strides = array<i32>} : memref<8x8x32xf32, #tpu.memory_space<vmem>>, vector<1x8x32xf32>,
    %cst_146 = arith.constant dense<0.000000e+00> : vector<8x128xf32>
    %475 = tpu.matmul %443, %2, %cst_146 {dimension_numbers = #tpu.dot_dimension_numbers<[1], [0], [0], [1], [0, 0, 1, 1], [], []>} : vector<8x32xf32>, vector<32x128xf32>, vector<8x128xf32> -> vector<8x128xf32>
    %cst_147 = arith.constant dense<0.000000e+00> : vector<8x128xf32>
    %476 = tpu.matmul %468, %3, %cst_147 {dimension_numbers = #tpu.dot_dimension_numbers<[1], [0], [0], [1], [0, 0, 1, 1], [], []>} : vector<8x32xf32>, vector<32x128xf32>, vector<8x128xf32> -> vector<8x128xf32>
    %c7_148 = arith.constant 7 : index
    %c0_149 = arith.constant 0 : index
    %c0_150 = arith.constant 0 : index
    %477 = vector.load %arg7[%c7_148, %c0_149, %c0_150] : memref<8x8x256xbf16, #tpu.memory_space<vmem>>, vector<1x8x128xbf16>
    %478 = vector.shape_cast %477 : vector<1x8x128xbf16> to vector<8x128xbf16>
    %479 = arith.extf %478 : vector<8x128xbf16> to vector<8x128xf32>
    %480 = arith.addf %475, %479 : vector<8x128xf32>
    %c0_151 = arith.constant 0 : index
    %c0_152 = arith.constant 0 : index
    %c128_153 = arith.constant 128 : index
    %481 = vector.load %arg7[%c0_151, %c0_152, %c128_153] : memref<8x8x256xbf16, #tpu.memory_space<vmem>>, vector<1x8x128xbf16>
    %482 = vector.shape_cast %481 : vector<1x8x128xbf16> to vector<8x128xbf16>
    %483 = arith.extf %482 : vector<8x128xbf16> to vector<8x128xf32>
    %484 = arith.addf %476, %483 : vector<8x128xf32>
    %485 = vector.extract_strided_slice %480 {offsets = [0, 0], sizes = [8, 32], strides = [1, 1]} : vector<8x128xf32> to vector<8x32xf32>
    %486 = arith.negf %485 : vector<8x32xf32>
    %487 = math.exp %486 : vector<8x32xf32>
    %cst_154 = arith.constant 1.000000e+00 : f32
    %488 = vector.broadcast %cst_154 : f32 to vector<8x32xf32>
    %489 = arith.addf %488, %487 : vector<8x32xf32>
    %490 = arith.divf %488, %489 : vector<8x32xf32>
    %491 = vector.extract_strided_slice %480 {offsets = [0, 32], sizes = [8, 32], strides = [1, 1]} : vector<8x128xf32> to vector<8x32xf32>
    %492 = arith.negf %491 : vector<8x32xf32>
    %493 = math.exp %492 : vector<8x32xf32>
    %cst_155 = arith.constant 1.000000e+00 : f32
    %494 = vector.broadcast %cst_155 : f32 to vector<8x32xf32>
    %495 = arith.addf %494, %493 : vector<8x32xf32>
    %496 = arith.divf %494, %495 : vector<8x32xf32>
    %497 = vector.extract_strided_slice %480 {offsets = [0, 64], sizes = [8, 32], strides = [1, 1]} : vector<8x128xf32> to vector<8x32xf32>
    %498 = math.tanh %497 : vector<8x32xf32>
    %499 = vector.extract_strided_slice %480 {offsets = [0, 96], sizes = [8, 32], strides = [1, 1]} : vector<8x128xf32> to vector<8x32xf32>
    %500 = arith.negf %499 : vector<8x32xf32>
    %501 = math.exp %500 : vector<8x32xf32>
    %cst_156 = arith.constant 1.000000e+00 : f32
    %502 = vector.broadcast %cst_156 : f32 to vector<8x32xf32>
    %503 = arith.addf %502, %501 : vector<8x32xf32>
    %504 = arith.divf %502, %503 : vector<8x32xf32>
    %505 = arith.mulf %496, %441 : vector<8x32xf32>
    %506 = arith.mulf %490, %498 : vector<8x32xf32>
    %507 = arith.addf %505, %506 : vector<8x32xf32>
    %508 = math.tanh %507 : vector<8x32xf32>
    %509 = arith.mulf %504, %508 : vector<8x32xf32>
    %510 = vector.extract_strided_slice %484 {offsets = [0, 0], sizes = [8, 32], strides = [1, 1]} : vector<8x128xf32> to vector<8x32xf32>
    %511 = arith.negf %510 : vector<8x32xf32>
    %512 = math.exp %511 : vector<8x32xf32>
    %cst_157 = arith.constant 1.000000e+00 : f32
    %513 = vector.broadcast %cst_157 : f32 to vector<8x32xf32>
    %514 = arith.addf %513, %512 : vector<8x32xf32>
    %515 = arith.divf %513, %514 : vector<8x32xf32>
    %516 = vector.extract_strided_slice %484 {offsets = [0, 32], sizes = [8, 32], strides = [1, 1]} : vector<8x128xf32> to vector<8x32xf32>
    %517 = arith.negf %516 : vector<8x32xf32>
    %518 = math.exp %517 : vector<8x32xf32>
    %cst_158 = arith.constant 1.000000e+00 : f32
    %519 = vector.broadcast %cst_158 : f32 to vector<8x32xf32>
    %520 = arith.addf %519, %518 : vector<8x32xf32>
    %521 = arith.divf %519, %520 : vector<8x32xf32>
    %522 = vector.extract_strided_slice %484 {offsets = [0, 64], sizes = [8, 32], strides = [1, 1]} : vector<8x128xf32> to vector<8x32xf32>
    %523 = math.tanh %522 : vector<8x32xf32>
    %524 = vector.extract_strided_slice %484 {offsets = [0, 96], sizes = [8, 32], strides = [1, 1]} : vector<8x128xf32> to vector<8x32xf32>
    %525 = arith.negf %524 : vector<8x32xf32>
    %526 = math.exp %525 : vector<8x32xf32>
    %cst_159 = arith.constant 1.000000e+00 : f32
    %527 = vector.broadcast %cst_159 : f32 to vector<8x32xf32>
    %528 = arith.addf %527, %526 : vector<8x32xf32>
    %529 = arith.divf %527, %528 : vector<8x32xf32>
    %530 = arith.mulf %521, %466 : vector<8x32xf32>
    %531 = arith.mulf %515, %523 : vector<8x32xf32>
    %532 = arith.addf %530, %531 : vector<8x32xf32>
    %533 = math.tanh %532 : vector<8x32xf32>
    %534 = arith.mulf %529, %533 : vector<8x32xf32>
    %c7_160 = arith.constant 7 : index
    %c0_161 = arith.constant 0 : index
    %c0_162 = arith.constant 0 : index
    %535 = vector.load %arg8[%c7_160, %c0_161, %c0_162] : memref<8x8x32xf32, #tpu.memory_space<vmem>>, vector<1x8x32xf32>
    %536 = vector.shape_cast %535 : vector<1x8x32xf32> to vector<8x32xf32>
    %537 = vector.shape_cast %509 : vector<8x32xf32> to vector<1x8x32xf32>
    tpu.vector_store %arg8[%c7_160, %c0_161, %c0_162], %537 {strides = array<i32>} : memref<8x8x32xf32, #tpu.memory_space<vmem>>, vector<1x8x32xf32>,
    %c0_163 = arith.constant 0 : index
    %c0_164 = arith.constant 0 : index
    %c0_165 = arith.constant 0 : index
    %538 = vector.load %arg9[%c0_163, %c0_164, %c0_165] : memref<8x8x32xf32, #tpu.memory_space<vmem>>, vector<1x8x32xf32>
    %539 = vector.shape_cast %538 : vector<1x8x32xf32> to vector<8x32xf32>
    %540 = vector.shape_cast %534 : vector<8x32xf32> to vector<1x8x32xf32>
    tpu.vector_store %arg9[%c0_163, %c0_164, %c0_165], %540 {strides = array<i32>} : memref<8x8x32xf32, #tpu.memory_space<vmem>>, vector<1x8x32xf32>,
    %c0_166 = arith.constant 0 : index
    %c0_167 = arith.constant 0 : index
    %c0_168 = arith.constant 0 : index
    %541 = vector.load %arg8[%c0_166, %c0_167, %c0_168] : memref<8x8x32xf32, #tpu.memory_space<vmem>>, vector<8x8x32xf32>
    %c0_169 = arith.constant 0 : index
    %c0_170 = arith.constant 0 : index
    %c0_171 = arith.constant 0 : index
    %542 = vector.load %arg6[%c0_169, %c0_170, %c0_171] : memref<8x8x64xf32, #tpu.memory_space<vmem>>, vector<8x8x32xf32>
    tpu.vector_store %arg6[%c0_169, %c0_170, %c0_171], %541 {strides = array<i32>} : memref<8x8x64xf32, #tpu.memory_space<vmem>>, vector<8x8x32xf32>,
    %c0_172 = arith.constant 0 : index
    %c0_173 = arith.constant 0 : index
    %c0_174 = arith.constant 0 : index
    %543 = vector.load %arg9[%c0_172, %c0_173, %c0_174] : memref<8x8x32xf32, #tpu.memory_space<vmem>>, vector<8x8x32xf32>
    %c0_175 = arith.constant 0 : index
    %c0_176 = arith.constant 0 : index
    %c32 = arith.constant 32 : index
    %544 = vector.load %arg6[%c0_175, %c0_176, %c32] : memref<8x8x64xf32, #tpu.memory_space<vmem>>, vector<8x8x32xf32>
    tpu.vector_store %arg6[%c0_175, %c0_176, %c32], %543 {strides = array<i32>} : memref<8x8x64xf32, #tpu.memory_space<vmem>>, vector<8x8x32xf32>,
    return
  }
  func.func @transform_0(%arg0: i32) -> (i32, i32, i32) {
    %c0_i32 = arith.constant 0 : i32
    %c0_i32_0 = arith.constant 0 : i32
    %c0_i32_1 = arith.constant 0 : i32
    return %c0_i32, %arg0, %c0_i32_0 : i32, i32, i32
  }
  func.func @transform_1(%arg0: i32) -> (i32, i32) {
    %c0_i32 = arith.constant 0 : i32
    %c0_i32_0 = arith.constant 0 : i32
    %c0_i32_1 = arith.constant 0 : i32
    return %c0_i32, %c0_i32_0 : i32, i32
  }
  func.func @transform_2(%arg0: i32) -> (i32, i32) {
    %c0_i32 = arith.constant 0 : i32
    %c0_i32_0 = arith.constant 0 : i32
    %c0_i32_1 = arith.constant 0 : i32
    return %c0_i32, %c0_i32_0 : i32, i32
  }
  func.func @transform_3(%arg0: i32) -> (i32, i32) {
    %c0_i32 = arith.constant 0 : i32
    %c0_i32_0 = arith.constant 0 : i32
    %c0_i32_1 = arith.constant 0 : i32
    return %c0_i32, %c0_i32_0 : i32, i32
  }
  func.func @transform_4(%arg0: i32) -> (i32, i32) {
    %c0_i32 = arith.constant 0 : i32
    %c0_i32_0 = arith.constant 0 : i32
    %c0_i32_1 = arith.constant 0 : i32
    return %c0_i32, %c0_i32_0 : i32, i32
  }
  func.func @transform_5(%arg0: i32) -> (i32, i32, i32) {
    %c0_i32 = arith.constant 0 : i32
    %c0_i32_0 = arith.constant 0 : i32
    %c0_i32_1 = arith.constant 0 : i32
    return %c0_i32, %arg0, %c0_i32_0 : i32, i32, i32
  }
}

</mosaic_0001>

<llo_original>
// kernel: tpu_custom_call.1
$region0: #{tpu_custom_call.1}
  #allocation0 [shape = 'u32[]', space=smem, size = 0x4, offset = 0x4, fixed_abs, tag = 'smem constant byte address 0x4 - core index']
  #allocation1 [shape = 'u32[144,128]{1,0:T(1,128)}', space=vmem, size = 0x12000, scoped, tag = 'internal scratch']
  #allocation2 [shape = 'bf16[8,8,256]{2,1,0:T(8,128)(2,1)}', space=vmem, size = 0x8000, scoped, tag = 'scratch operand']
  #allocation3 [shape = 'f32[8,8,32]{2,1,0:T(8,128)}', space=vmem, size = 0x8000, scoped, tag = 'scratch operand']
  #allocation4 [shape = 'f32[8,8,32]{2,1,0:T(8,128)}', space=vmem, size = 0x8000, scoped, tag = 'scratch operand']
  %s0 = inlined_call_operand.hbm [shape: bf16[8,16,16], index: 0, kind: input, shape index: {}]
  %s1 = inlined_call_operand.hbm [shape: bf16[16,256], index: 1, kind: input, shape index: {}]
  %s2 = inlined_call_operand.vmem [shape: f32[1,256], index: 2, kind: input, shape index: {}]
  %s3 = inlined_call_operand.hbm [shape: f32[32,128], index: 3, kind: input, shape index: {}]
  %s4 = inlined_call_operand.hbm [shape: f32[32,128], index: 4, kind: input, shape index: {}]
  %s5 = inlined_call_operand.hbm [shape: f32[8,16,64], index: 5, kind: output, shape index: {}]
  %s6 = sld [smem:[#allocation0]]
  $region69: #{tpu_custom_call.1} parent=0
    _
  %s8 = ssub.s32 1, %s6
  %s9 = scalar_select 0, %s8, %s6
  $region1: #{tpu_custom_call.1} parent=0
    #allocation5 [shape = 'u8[32768]{0}', space=vmem, size = 0x8000, scoped, tag = 'input window, operand 0']
    #allocation6 [shape = 's32[2]{0}', space=sflag, size = 0x8, scoped, tag = 'scoped memory for tpu_custom_call.1']
    #allocation7 [shape = 's32[2]{0}', space=sflag, size = 0x8, scoped, tag = 'scoped memory for tpu_custom_call.1']
    #allocation8 [shape = 'u8[8192]{0}', space=vmem, size = 0x2000, scoped, tag = 'input window, operand 1, single buffered']
    #allocation9 [shape = 's32[1]{0}', space=sflag, size = 0x4, scoped, tag = 'scoped memory for tpu_custom_call.1']
    #allocation10 [shape = 'u8[16384]{0}', space=vmem, size = 0x4000, scoped, tag = 'input window, operand 3, single buffered']
    #allocation11 [shape = 'u8[16384]{0}', space=vmem, size = 0x4000, scoped, tag = 'input window, operand 4, single buffered']
    #allocation12 [shape = 's32[1]{0}', space=sflag, size = 0x4, scoped, tag = 'scoped memory for tpu_custom_call.1']
    #allocation13 [shape = 'u8[65536]{0}', space=vmem, size = 0x10000, scoped, tag = 'output window, operand 0']
    %10 = vsyncpa [#allocation6], 0
    %s11 = scalar_lea.sflag [#allocation6], 1
    %12 = vsyncpa %s11, 0
    %13 = vsyncpa [#allocation9], 0
    %14 = vsyncpa [#allocation12], 0
    %15 = vsyncpa [#allocation7], 0
    %s16 = scalar_lea.sflag [#allocation7], 1
    %17 = vsyncpa %s16, 0
    loop: start=0, step=1, limit=4
    $region2: #{tpu_custom_call.1} parent=1 // loop_pre_header
      _
    $region3: #{tpu_custom_call.1} parent=1 // loop_header
      %s19 = sphi 0, %s23
      %p20 = scmp.ge.s32.totalorder %s19, 4
      %s29 = sphi 0, %s31
      %s32 = sphi 0, %s29
      %s33 = sphi 0, %s32
      %s49 = sphi 0, %s33
      %s53 = sphi 0, %s53
      %s55 = sphi 0, %s53
      %s56 = sphi 0, %s55
      %s70 = sphi 0, %s56
      %s74 = sphi 0, %s74
      %s76 = sphi 0, %s74
      %s77 = sphi 0, %s76
      %s91 = sphi 0, %s77
      %s95 = sphi 0, %s95
      %s97 = sphi 0, %s95
      %s98 = sphi 0, %s97
      %s112 = sphi 0, %s98
      %s116 = sphi 0, %s116
      %s118 = sphi 0, %s116
      %s119 = sphi 0, %s118
      %s133 = sphi 0, %s119
      %s139 = sphi 0, %s141
      %s142 = sphi 0, %s139
      %s143 = sphi 0, %s142
      %s159 = sphi 0, %s143
    $region4: #{tpu_custom_call.1} parent=1 // loop_header_branch
      %22 = sbr.rel (%p20) target = $region8
    $region5: #{tpu_custom_call.1} parent=1 // loop_body
      %s24 = ssub.s32 %s19, 1
      %s25 = ssub.s32 %s19, 2
      %s26 = sadd.s32 %s19, 1
      %s27 = ssub.s32 %s19, %s26
      %p28 = scmp.eq.s32.totalorder %s27, 0
      %s30 = sadd.s32 %s29, 1
      %s31 = scalar_select %p28, %s29, %s30
      %p34 = pneg %p28
      %p35 = scmp.eq.s32.totalorder %s19, 1
      %p36 = por %p34, %p35
      %p37 = scmp.ne.s32.totalorder %s29, %s32
      %p38 = scmp.eq.s32.totalorder %s19, 0
      %p39 = por %p37, %p38
      %p40 = scmp.ne.s32.totalorder %s29, %s32
      %p41 = scmp.eq.s32.totalorder %s24, 1
      %p42 = por %p40, %p41
      %p43 = scmp.ne.s32.totalorder %s32, %s33
      %p44 = scmp.eq.s32.totalorder %s24, 0
      %p45 = por %p43, %p44
      %p46 = scmp.ne.s32.totalorder %s32, %s33
      %p47 = scmp.eq.s32.totalorder %s25, 1
      %p48 = por %p46, %p47
      %p50 = scmp.ne.s32.totalorder %s33, %s49
      %p51 = scmp.eq.s32.totalorder %s25, 0
      %p52 = por %p50, %p51
      %s54 = sadd.s32 %s53, 1
      %p57 = scmp.eq.s32.totalorder %s19, 1
      %p58 = scmp.ne.s32.totalorder %s53, %s55
      %p59 = scmp.eq.s32.totalorder %s19, 0
      %p60 = por %p58, %p59
      %p61 = scmp.ne.s32.totalorder %s53, %s55
      %p62 = scmp.eq.s32.totalorder %s24, 1
      %p63 = por %p61, %p62
      %p64 = scmp.ne.s32.totalorder %s55, %s56
      %p65 = scmp.eq.s32.totalorder %s24, 0
      %p66 = por %p64, %p65
      %p67 = scmp.ne.s32.totalorder %s55, %s56
      %p68 = scmp.eq.s32.totalorder %s25, 1
      %p69 = por %p67, %p68
      %p71 = scmp.ne.s32.totalorder %s56, %s70
      %p72 = scmp.eq.s32.totalorder %s25, 0
      %p73 = por %p71, %p72
      %s75 = sadd.s32 %s74, 1
      %p78 = scmp.eq.s32.totalorder %s19, 1
      %p79 = scmp.ne.s32.totalorder %s74, %s76
      %p80 = scmp.eq.s32.totalorder %s19, 0
      %p81 = por %p79, %p80
      %p82 = scmp.ne.s32.totalorder %s74, %s76
      %p83 = scmp.eq.s32.totalorder %s24, 1
      %p84 = por %p82, %p83
      %p85 = scmp.ne.s32.totalorder %s76, %s77
      %p86 = scmp.eq.s32.totalorder %s24, 0
      %p87 = por %p85, %p86
      %p88 = scmp.ne.s32.totalorder %s76, %s77
      %p89 = scmp.eq.s32.totalorder %s25, 1
      %p90 = por %p88, %p89
      %p92 = scmp.ne.s32.totalorder %s77, %s91
      %p93 = scmp.eq.s32.totalorder %s25, 0
      %p94 = por %p92, %p93
      %s96 = sadd.s32 %s95, 1
      %p99 = scmp.eq.s32.totalorder %s19, 1
      %p100 = scmp.ne.s32.totalorder %s95, %s97
      %p101 = scmp.eq.s32.totalorder %s19, 0
      %p102 = por %p100, %p101
      %p103 = scmp.ne.s32.totalorder %s95, %s97
      %p104 = scmp.eq.s32.totalorder %s24, 1
      %p105 = por %p103, %p104
      %p106 = scmp.ne.s32.totalorder %s97, %s98
      %p107 = scmp.eq.s32.totalorder %s24, 0
      %p108 = por %p106, %p107
      %p109 = scmp.ne.s32.totalorder %s97, %s98
      %p110 = scmp.eq.s32.totalorder %s25, 1
      %p111 = por %p109, %p110
      %p113 = scmp.ne.s32.totalorder %s98, %s112
      %p114 = scmp.eq.s32.totalorder %s25, 0
      %p115 = por %p113, %p114
      %s117 = sadd.s32 %s116, 1
      %p120 = scmp.eq.s32.totalorder %s19, 1
      %p121 = scmp.ne.s32.totalorder %s116, %s118
      %p122 = scmp.eq.s32.totalorder %s19, 0
      %p123 = por %p121, %p122
      %p124 = scmp.ne.s32.totalorder %s116, %s118
      %p125 = scmp.eq.s32.totalorder %s24, 1
      %p126 = por %p124, %p125
      %p127 = scmp.ne.s32.totalorder %s118, %s119
      %p128 = scmp.eq.s32.totalorder %s24, 0
      %p129 = por %p127, %p128
      %p130 = scmp.ne.s32.totalorder %s118, %s119
      %p131 = scmp.eq.s32.totalorder %s25, 1
      %p132 = por %p130, %p131
      %p134 = scmp.ne.s32.totalorder %s119, %s133
      %p135 = scmp.eq.s32.totalorder %s25, 0
      %p136 = por %p134, %p135
      %s137 = ssub.s32 %s19, %s26
      %p138 = scmp.eq.s32.totalorder %s137, 0
      %s140 = sadd.s32 %s139, 1
      %s141 = scalar_select %p138, %s139, %s140
      %p144 = pneg %p138
      %p145 = scmp.eq.s32.totalorder %s19, 1
      %p146 = por %p144, %p145
      %p147 = scmp.ne.s32.totalorder %s139, %s142
      %p148 = scmp.eq.s32.totalorder %s19, 0
      %p149 = por %p147, %p148
      %p150 = scmp.ne.s32.totalorder %s139, %s142
      %p151 = scmp.eq.s32.totalorder %s24, 1
      %p152 = por %p150, %p151
      %p153 = scmp.ne.s32.totalorder %s142, %s143
      %p154 = scmp.eq.s32.totalorder %s24, 0
      %p155 = por %p153, %p154
      %p156 = scmp.ne.s32.totalorder %s142, %s143
      %p157 = scmp.eq.s32.totalorder %s25, 1
      %p158 = por %p156, %p157
      %p160 = scmp.ne.s32.totalorder %s143, %s159
      %p161 = scmp.eq.s32.totalorder %s25, 0
      %p162 = por %p160, %p161
      %p163 = scmp.le.s32.totalorder 1, %s19
      %p164 = scmp.lt.s32.totalorder %s19, 3
      %p165 = pnand %p163, %p164
      %p166 = pneg %p165
      // Predicated region
      $region9: #{tpu_custom_call.1} parent=5 // pred_check
        _
      $region10: #{tpu_custom_call.1} parent=5 // pred_check_branch
        %168 = sbr.rel (%p165) target = $region12
      $region11: #{tpu_custom_call.1} parent=5 // pred_region
        %s169 = ssub.s32 %s19, 1
        // Predicated region
        $region13: #{tpu_custom_call.1} parent=11 // pred_check
          %p170 = pneg %p66
        $region14: #{tpu_custom_call.1} parent=11 // pred_check_branch
          %172 = sbr.rel (%p170) target = $region16
        $region15: #{tpu_custom_call.1} parent=11 // pred_region
          %s174 = ssub.s32 256, 256
          %175 = vsyncadd [#allocation9], %s174
          %s176 = sshll.u32 [#allocation8], 4
          %s177 = int_to_ptr.vmem [resolvable:$true] %s176
          %182 = dma.hbm_to_vmem [thread:$0]  %s1, 256, %s177, [#allocation9], 128, 128, 8
        $region16: #{tpu_custom_call.1} parent=11 // pred_fallthru
          _
        // Predicated region
        $region17: #{tpu_custom_call.1} parent=11 // pred_check
          %p183 = pneg %p87
        $region18: #{tpu_custom_call.1} parent=11 // pred_check_branch
          %185 = sbr.rel (%p183) target = $region20
        $region19: #{tpu_custom_call.1} parent=11 // pred_region
          _
        $region20: #{tpu_custom_call.1} parent=11 // pred_fallthru
          _
        // Predicated region
        $region21: #{tpu_custom_call.1} parent=11 // pred_check
          %p186 = pneg %p108
        $region22: #{tpu_custom_call.1} parent=11 // pred_check_branch
          %188 = sbr.rel (%p186) target = $region24
        $region23: #{tpu_custom_call.1} parent=11 // pred_region
          %s190 = ssub.s32 512, 512
          %191 = vsyncadd [#allocation9], %s190
          %s192 = sshll.u32 [#allocation10], 4
          %s193 = int_to_ptr.vmem [resolvable:$true] %s192
          %198 = dma.hbm_to_vmem [thread:$0]  %s3, 512, %s193, [#allocation9], 128, 128, 8
        $region24: #{tpu_custom_call.1} parent=11 // pred_fallthru
          _
        // Predicated region
        $region25: #{tpu_custom_call.1} parent=11 // pred_check
          %p199 = pneg %p129
        $region26: #{tpu_custom_call.1} parent=11 // pred_check_branch
          %201 = sbr.rel (%p199) target = $region28
        $region27: #{tpu_custom_call.1} parent=11 // pred_region
          %s203 = ssub.s32 512, 512
          %204 = vsyncadd [#allocation12], %s203
          %s205 = sshll.u32 [#allocation11], 4
          %s206 = int_to_ptr.vmem [resolvable:$true] %s205
          %211 = dma.hbm_to_vmem [thread:$0]  %s4, 512, %s206, [#allocation12], 128, 128, 8
        $region28: #{tpu_custom_call.1} parent=11 // pred_fallthru
          _
      $region12: #{tpu_custom_call.1} parent=5 // pred_fallthru
        _
      %p212 = scmp.lt.s32.totalorder %s19, 2
      // Predicated region
      $region29: #{tpu_custom_call.1} parent=5 // pred_check
        %p213 = pneg %p212
      $region30: #{tpu_custom_call.1} parent=5 // pred_check_branch
        %215 = sbr.rel (%p213) target = $region32
      $region31: #{tpu_custom_call.1} parent=5 // pred_region
        // Predicated region
        $region33: #{tpu_custom_call.1} parent=31 // pred_check
          %p216 = pneg %p39
        $region34: #{tpu_custom_call.1} parent=31 // pred_check_branch
          %218 = sbr.rel (%p216) target = $region36
        $region35: #{tpu_custom_call.1} parent=31 // pred_region
          %s219 = sand.u32 %s29, 1
          %s220 = scalar_lea.sflag [#allocation6], %s219
          %s221 = sand.u32 %s29, 1
          %s222 = smul.addr %s221, 32
          %s223 = scalar_lea.vmem [#allocation5], %s222
          %s225 = ssub.s32 512, 512
          %226 = vsyncadd %s220, %s225
          %s227 = smul.addr %s19, 64
          %s228 = scalar_lea.hbm %s0, %s227
          %s229 = sshll.u32 %s223, 4
          %s230 = int_to_ptr.vmem [resolvable:$true] %s229
          %235 = dma.hbm_to_vmem [thread:$0]  %s228, 512, %s230, %s220, 128, 64, 4
        $region36: #{tpu_custom_call.1} parent=31 // pred_fallthru
          _
      $region32: #{tpu_custom_call.1} parent=5 // pred_fallthru
        _
      %p236 = scmp.le.s32.totalorder 1, %s19
      %p237 = scmp.lt.s32.totalorder %s19, 3
      %p238 = pnand %p236, %p237
      %p239 = pneg %p238
      // Predicated region
      $region37: #{tpu_custom_call.1} parent=5 // pred_check
        _
      $region38: #{tpu_custom_call.1} parent=5 // pred_check_branch
        %241 = sbr.rel (%p238) target = $region40
      $region39: #{tpu_custom_call.1} parent=5 // pred_region
        %s242 = ssub.s32 %s19, 1
        %s243 = sand.u32 %s32, 1
        %s244 = scalar_lea.sflag [#allocation6], %s243
        %s245 = sand.u32 %s32, 1
        %s246 = smul.addr %s245, 32
        %s247 = scalar_lea.vmem [#allocation5], %s246
        // Predicated region
        $region41: #{tpu_custom_call.1} parent=39 // pred_check
          %p248 = pneg %p45
        $region42: #{tpu_custom_call.1} parent=39 // pred_check_branch
          %250 = sbr.rel (%p248) target = $region44
        $region43: #{tpu_custom_call.1} parent=39 // pred_region
          %251 = dma.done %s244, 512
        $region44: #{tpu_custom_call.1} parent=39 // pred_fallthru
          _
        // Predicated region
        $region45: #{tpu_custom_call.1} parent=39 // pred_check
          %p252 = pneg %p66
        $region46: #{tpu_custom_call.1} parent=39 // pred_check_branch
          %254 = sbr.rel (%p252) target = $region48
        $region47: #{tpu_custom_call.1} parent=39 // pred_region
          %255 = dma.done [#allocation9], 256
        $region48: #{tpu_custom_call.1} parent=39 // pred_fallthru
          _
        // Predicated region
        $region49: #{tpu_custom_call.1} parent=39 // pred_check
          %p256 = pneg %p108
        $region50: #{tpu_custom_call.1} parent=39 // pred_check_branch
          %258 = sbr.rel (%p256) target = $region52
        $region51: #{tpu_custom_call.1} parent=39 // pred_region
          %259 = dma.done [#allocation9], 512
        $region52: #{tpu_custom_call.1} parent=39 // pred_fallthru
          _
        // Predicated region
        $region53: #{tpu_custom_call.1} parent=39 // pred_check
          %p260 = pneg %p129
        $region54: #{tpu_custom_call.1} parent=39 // pred_check_branch
          %262 = sbr.rel (%p260) target = $region56
        $region55: #{tpu_custom_call.1} parent=39 // pred_region
          %263 = dma.done [#allocation12], 512
        $region56: #{tpu_custom_call.1} parent=39 // pred_fallthru
          _
        %s264 = sand.u32 %s32, 1
        %s265 = scalar_lea.sflag [#allocation6], %s264
        %s266 = sand.u32 %s32, 1
        %s267 = smul.addr %s266, 32
        %s268 = scalar_lea.vmem [#allocation5], %s267
        %p269 = pneg %p45
        %p270 = pneg %p42
        %p271 = pneg %p66
        %p272 = pneg %p63
        %p273 = pneg %p87
        %p274 = pneg %p84
        %p275 = pneg %p108
        %p276 = pneg %p105
        %p277 = pneg %p129
        %p278 = pneg %p126
        %p279 = pneg %p155
        %p280 = pneg %p152
        %s281 = sand.u32 %s142, 1
        %s282 = scalar_lea.sflag [#allocation7], %s281
        %s283 = sand.u32 %s142, 1
        %s284 = smul.addr %s283, 64
        %s285 = scalar_lea.vmem [#allocation13], %s284
        %v287 = vld [vmem:[#allocation8] sm:$0xff]
        %v288 = vld [vmem:[#allocation8 + $0x8] sm:$0xff]
        %v289 = vld [vmem:[%s2] sm:$0x3]
        %v290 = vld [vmem:[#allocation10] sm:$0xff]
        %v291 = vld [vmem:[#allocation10 + $0x8] sm:$0xff]
        %v292 = vld [vmem:[#allocation10 + $0x10] sm:$0xff]
        %v293 = vld [vmem:[#allocation10 + $0x18] sm:$0xff]
        %v294 = vld [vmem:[#allocation11] sm:$0xff]
        %v295 = vld [vmem:[#allocation11 + $0x8] sm:$0xff]
        %v296 = vld [vmem:[#allocation11 + $0x10] sm:$0xff]
        %v297 = vld [vmem:[#allocation11 + $0x18] sm:$0xff]
        %v298 = vld [vmem:[%s247] sm:$0xf]
        %v299 = vld [vmem:[%s247 + $0x4] sm:$0xf]
        %v300 = vld [vmem:[%s247 + $0x8] sm:$0xf]
        %v301 = vld [vmem:[%s247 + $0xc] sm:$0xf]
        %v302 = vld [vmem:[%s247 + $0x10] sm:$0xf]
        %v303 = vld [vmem:[%s247 + $0x14] sm:$0xf]
        %v304 = vld [vmem:[%s247 + $0x18] sm:$0xf]
        %v305 = vld [vmem:[%s247 + $0x1c] sm:$0xf]
        %v307 = vlaneseq
        %v308 = vshrl.u32 %v307, 7
        %v309 = vsub.s32 0, %v308
        %v310 = vrot.slane %v289, %v309
        %v311 = vlaneseq
        %v312 = vshrl.u32 %v311, 7
        %v313 = vsub.s32 1, %v312
        %v314 = vrot.slane %v289, %v313
        %v325 = vunpack.c.l.b16 %v298
        %v326 = vunpack.c.l.b16 %v299
        %v327 = vunpack.c.l.b16 %v300
        %v328 = vunpack.c.l.b16 %v301
        %v329 = vunpack.c.l.b16 %v302
        %v330 = vunpack.c.l.b16 %v303
        %v331 = vunpack.c.l.b16 %v304
        %v332 = vunpack.c.l.b16 %v305
        %v333 = vpack.c.b16 %v326, %v325
        %v334 = vpack.c.b16 %v328, %v327
        %v335 = vpack.c.b16 %v330, %v329
        %v336 = vpack.c.b16 %v332, %v331
        %v339 = vunpack.c.l.b16 %v287
        %v340 = vunpack.c.h.b16 %v287
        %v341 = vunpack.c.l.b16 %v288
        %v342 = vunpack.c.h.b16 %v288
        %v343 = vpack.c.b16 %v341, %v339
        %v344 = vpack.c.b16 %v342, %v340
        %vm347 = vcmask 130048
        %v349 = vsel %vm347, %v333, 0
        %v352 = vsel %vm347, %v334, 0
        %v355 = vsel %vm347, %v335, 0
        %v358 = vsel %vm347, %v336, 0
        %360 = vmatprep.subr.bf16.mxu0 %v344
        %361 = vmatpush1.bf16.msra.mxu0 %v343
        %362 = vmatprep.subr.bf16.mxu0 0
        %363 = vmatpush1.bf16.msra.mxu0 0
        %364 = vmatprep.subr.bf16.mxu0 0
        %365 = vmatpush1.bf16.msra.mxu0 0
        %366 = vmatprep.subr.bf16.mxu0 0
        %367 = vmatpush1.bf16.msra.mxu0 0
        %368 = vmatprep.subr.bf16.mxu0 0
        %369 = vmatpush1.bf16.msra.mxu0 0
        %370 = vmatprep.subr.bf16.mxu0 0
        %371 = vmatpush1.bf16.msra.mxu0 0
        %372 = vmatprep.subr.bf16.mxu0 0
        %373 = vmatpush1.bf16.msra.mxu0 0
        %374 = vmatprep.subr.bf16.mxu0 0
        %375 = vmatpush1.bf16.msra.mxu0 0
        %376 = vmatprep.subr.bf16.mxu0 0
        %377 = vmatpush1.bf16.msra.mxu0 0
        %378 = vmatprep.subr.bf16.mxu0 0
        %379 = vmatpush1.bf16.msra.mxu0 0
        %380 = vmatprep.subr.bf16.mxu0 0
        %381 = vmatpush1.bf16.msra.mxu0 0
        %382 = vmatprep.subr.bf16.mxu0 0
        %383 = vmatpush1.bf16.msra.mxu0 0
        %384 = vmatprep.subr.bf16.mxu0 0
        %385 = vmatpush1.bf16.msra.mxu0 0
        %386 = vmatprep.subr.bf16.mxu0 0
        %387 = vmatpush1.bf16.msra.mxu0 0
        %388 = vmatprep.subr.bf16.mxu0 0
        %389 = vmatpush1.bf16.msra.mxu0 0
        %390 = vmatprep.subr.bf16.mxu0 0
        %391 = vmatpush1.bf16.msra.mxu0 0
        %392 = vmatprep.mubr.bf16.mxu0 0
        %393 = vmatmul.mubr.bf16.gmra.mrb[0].mxu0 %v349
        %v394 = vpop.f32.mrb[0].mxu0
        %v395 = vadd.f32 %v310, %v394
        %v396 = vpop.f32.mrb[0].mxu0
        %v397 = vadd.f32 %v314, %v396
        %v398 = vpop.f32.mrb[0].mxu0
        %v399 = vadd.f32 %v310, %v398
        %v400 = vpop.f32.mrb[0].mxu0
        %v401 = vadd.f32 %v314, %v400
        %402 = vmatprep.mubr.bf16.mxu0 0
        %403 = vmatmul.mubr.bf16.gmra.mrb[0].mxu0 %v352
        %v404 = vpop.f32.mrb[0].mxu0
        %v405 = vadd.f32 %v310, %v404
        %v406 = vpop.f32.mrb[0].mxu0
        %v407 = vadd.f32 %v314, %v406
        %v408 = vpop.f32.mrb[0].mxu0
        %v409 = vadd.f32 %v310, %v408
        %v410 = vpop.f32.mrb[0].mxu0
        %v411 = vadd.f32 %v314, %v410
        %412 = vmatprep.mubr.bf16.mxu0 0
        %413 = vmatmul.mubr.bf16.gmra.mrb[0].mxu0 %v355
        %v414 = vpop.f32.mrb[0].mxu0
        %v415 = vadd.f32 %v310, %v414
        %v416 = vpop.f32.mrb[0].mxu0
        %v417 = vadd.f32 %v314, %v416
        %v418 = vpop.f32.mrb[0].mxu0
        %v419 = vadd.f32 %v310, %v418
        %v420 = vpop.f32.mrb[0].mxu0
        %v421 = vadd.f32 %v314, %v420
        %422 = vmatprep.mubr.bf16.mxu0 0
        %423 = vmatmul.mubr.bf16.gmra.mrb[0].mxu0 %v358
        %v424 = vpop.f32.mrb[0].mxu0
        %v425 = vadd.f32 %v310, %v424
        %v426 = vpop.f32.mrb[0].mxu0
        %v427 = vadd.f32 %v314, %v426
        %v428 = vpop.f32.mrb[0].mxu0
        %v429 = vadd.f32 %v310, %v428
        %v430 = vpop.f32.mrb[0].mxu0
        %v431 = vadd.f32 %v314, %v430
        %432 = vdwg.mxu0
        %v433 = vpack.c.bf16 %v399, %v395
        %v434 = vpack.c.bf16 %v401, %v397
        %v435 = vpack.c.bf16 %v409, %v405
        %v436 = vpack.c.bf16 %v411, %v407
        %v437 = vpack.c.bf16 %v419, %v415
        %v438 = vpack.c.bf16 %v421, %v417
        %v439 = vpack.c.bf16 %v429, %v425
        %v440 = vpack.c.bf16 %v431, %v427
        %v449 = vunpack.c.l.b16 %v433
        %v450 = vunpack.c.l.b16 %v434
        %v451 = vunpack.c.h.b16 %v433
        %v452 = vunpack.c.h.b16 %v434
        %v453 = vunpack.c.l.b16 %v435
        %v454 = vunpack.c.l.b16 %v436
        %v455 = vunpack.c.h.b16 %v435
        %v456 = vunpack.c.h.b16 %v436
        %v457 = vunpack.c.l.b16 %v437
        %v458 = vunpack.c.l.b16 %v438
        %v459 = vunpack.c.h.b16 %v437
        %v460 = vunpack.c.h.b16 %v438
        %v461 = vunpack.c.l.b16 %v439
        %v462 = vunpack.c.l.b16 %v440
        %v463 = vunpack.c.h.b16 %v439
        %v464 = vunpack.c.h.b16 %v440
        %v465 = vpack.c.b16 %v450, %v449
        %v466 = vpack.c.b16 %v452, %v451
        %v467 = vpack.c.b16 %v454, %v453
        %v468 = vpack.c.b16 %v456, %v455
        %v469 = vpack.c.b16 %v458, %v457
        %v470 = vpack.c.b16 %v460, %v459
        %v471 = vpack.c.b16 %v462, %v461
        %v472 = vpack.c.b16 %v464, %v463
        %481 = vst [vmem:[#allocation2] sm:$0xff] %v465
        %482 = vst [vmem:[#allocation2 + $0x8] sm:$0xff] %v466
        %483 = vst [vmem:[#allocation2 + $0x10] sm:$0xff] %v467
        %484 = vst [vmem:[#allocation2 + $0x18] sm:$0xff] %v468
        %485 = vst [vmem:[#allocation2 + $0x20] sm:$0xff] %v469
        %486 = vst [vmem:[#allocation2 + $0x28] sm:$0xff] %v470
        %487 = vst [vmem:[#allocation2 + $0x30] sm:$0xff] %v471
        %488 = vst [vmem:[#allocation2 + $0x38] sm:$0xff] %v472
        %v489 = vld [vmem:[#allocation2] sm:$0xf]
        %v490 = vunpack.c.l.bf16 %v489
        %vm491 = vcmask 261120
        %v493 = vsel %vm491, 0.0, 0
        %495 = vmatprep.subr.mxu0 0.0
        %496 = vmatpush1.msra.mxu0 %v290
        %497 = vmatprep.subr.mxu0 0.0
        %498 = vmatpush1.msra.mxu0 %v291
        %499 = vmatprep.subr.mxu0 0.0
        %500 = vmatpush1.msra.mxu0 %v292
        %501 = vmatprep.subr.mxu0 0.0
        %502 = vmatpush1.msra.mxu0 %v293
        %503 = vmatprep.subr.mxu0 0.0
        %504 = vmatpush1.msra.mxu0 0.0
        %505 = vmatprep.subr.mxu0 0.0
        %506 = vmatpush1.msra.mxu0 0.0
        %507 = vmatprep.subr.mxu0 0.0
        %508 = vmatpush1.msra.mxu0 0.0
        %509 = vmatprep.subr.mxu0 0.0
        %510 = vmatpush1.msra.mxu0 0.0
        %511 = vmatprep.subr.mxu0 0.0
        %512 = vmatpush1.msra.mxu0 0.0
        %513 = vmatprep.subr.mxu0 0.0
        %514 = vmatpush1.msra.mxu0 0.0
        %515 = vmatprep.subr.mxu0 0.0
        %516 = vmatpush1.msra.mxu0 0.0
        %517 = vmatprep.subr.mxu0 0.0
        %518 = vmatpush1.msra.mxu0 0.0
        %519 = vmatprep.subr.mxu0 0.0
        %520 = vmatpush1.msra.mxu0 0.0
        %521 = vmatprep.subr.mxu0 0.0
        %522 = vmatpush1.msra.mxu0 0.0
        %523 = vmatprep.subr.mxu0 0.0
        %524 = vmatpush1.msra.mxu0 0.0
        %525 = vmatprep.subr.mxu0 0.0
        %526 = vmatpush1.msra.mxu0 0.0
        %527 = vmatprep.subr.mxu0 0.0
        %528 = vmatpush1.msra.mxu0 0.0
        %529 = vmatprep.subr.mxu0 0.0
        %530 = vmatpush1.msra.mxu0 0.0
        %531 = vmatprep.subr.mxu0 0.0
        %532 = vmatpush1.msra.mxu0 0.0
        %533 = vmatprep.subr.mxu0 0.0
        %534 = vmatpush1.msra.mxu0 0.0
        %535 = vmatprep.subr.mxu0 0.0
        %536 = vmatpush1.msra.mxu0 0.0
        %537 = vmatprep.subr.mxu0 0.0
        %538 = vmatpush1.msra.mxu0 0.0
        %539 = vmatprep.subr.mxu0 0.0
        %540 = vmatpush1.msra.mxu0 0.0
        %541 = vmatprep.subr.mxu0 0.0
        %542 = vmatpush1.msra.mxu0 0.0
        %543 = vmatprep.subr.mxu0 0.0
        %544 = vmatpush1.msra.mxu0 0.0
        %545 = vmatprep.subr.mxu0 0.0
        %546 = vmatpush1.msra.mxu0 0.0
        %547 = vmatprep.subr.mxu0 0.0
        %548 = vmatpush1.msra.mxu0 0.0
        %549 = vmatprep.subr.mxu0 0.0
        %550 = vmatpush1.msra.mxu0 0.0
        %551 = vmatprep.subr.mxu0 0.0
        %552 = vmatpush1.msra.mxu0 0.0
        %553 = vmatprep.subr.mxu0 0.0
        %554 = vmatpush1.msra.mxu0 0.0
        %555 = vmatprep.subr.mxu0 0.0
        %556 = vmatpush1.msra.mxu0 0.0
        %557 = vmatprep.subr.mxu0 0.0
        %558 = vmatpush1.msra.mxu0 0.0
        %559 = vmatprep.mubr.f32.mxu0 0.0
        %560 = vmatmul.mubr.f32.gmra.mrb[0].mxu0 %v493
        %v561 = vpop.f32.mrb[0].mxu0
        %v562 = vadd.f32 %v490, %v561
        %v563 = vpop.f32.mrb[0].mxu0
        %564 = vdwg.mxu0
        %s565 = scalar_lea.vmem [#allocation2], 56
        %v566 = vld [vmem:[%s565 + $0x4] sm:$0xf]
        %v567 = vunpack.c.l.bf16 %v566
        %568 = vmatprep.subr.mxu0 0.0
        %569 = vmatpush1.msra.mxu0 %v294
        %570 = vmatprep.subr.mxu0 0.0
        %571 = vmatpush1.msra.mxu0 %v295
        %572 = vmatprep.subr.mxu0 0.0
        %573 = vmatpush1.msra.mxu0 %v296
        %574 = vmatprep.subr.mxu0 0.0
        %575 = vmatpush1.msra.mxu0 %v297
        %576 = vmatprep.subr.mxu0 0.0
        %577 = vmatpush1.msra.mxu0 0.0
        %578 = vmatprep.subr.mxu0 0.0
        %579 = vmatpush1.msra.mxu0 0.0
        %580 = vmatprep.subr.mxu0 0.0
        %581 = vmatpush1.msra.mxu0 0.0
        %582 = vmatprep.subr.mxu0 0.0
        %583 = vmatpush1.msra.mxu0 0.0
        %584 = vmatprep.subr.mxu0 0.0
        %585 = vmatpush1.msra.mxu0 0.0
        %586 = vmatprep.subr.mxu0 0.0
        %587 = vmatpush1.msra.mxu0 0.0
        %588 = vmatprep.subr.mxu0 0.0
        %589 = vmatpush1.msra.mxu0 0.0
        %590 = vmatprep.subr.mxu0 0.0
        %591 = vmatpush1.msra.mxu0 0.0
        %592 = vmatprep.subr.mxu0 0.0
        %593 = vmatpush1.msra.mxu0 0.0
        %594 = vmatprep.subr.mxu0 0.0
        %595 = vmatpush1.msra.mxu0 0.0
        %596 = vmatprep.subr.mxu0 0.0
        %597 = vmatpush1.msra.mxu0 0.0
        %598 = vmatprep.subr.mxu0 0.0
        %599 = vmatpush1.msra.mxu0 0.0
        %600 = vmatprep.subr.mxu0 0.0
        %601 = vmatpush1.msra.mxu0 0.0
        %602 = vmatprep.subr.mxu0 0.0
        %603 = vmatpush1.msra.mxu0 0.0
        %604 = vmatprep.subr.mxu0 0.0
        %605 = vmatpush1.msra.mxu0 0.0
        %606 = vmatprep.subr.mxu0 0.0
        %607 = vmatpush1.msra.mxu0 0.0
        %608 = vmatprep.subr.mxu0 0.0
        %609 = vmatpush1.msra.mxu0 0.0
        %610 = vmatprep.subr.mxu0 0.0
        %611 = vmatpush1.msra.mxu0 0.0
        %612 = vmatprep.subr.mxu0 0.0
        %613 = vmatpush1.msra.mxu0 0.0
        %614 = vmatprep.subr.mxu0 0.0
        %615 = vmatpush1.msra.mxu0 0.0
        %616 = vmatprep.subr.mxu0 0.0
        %617 = vmatpush1.msra.mxu0 0.0
        %618 = vmatprep.subr.mxu0 0.0
        %619 = vmatpush1.msra.mxu0 0.0
        %620 = vmatprep.subr.mxu0 0.0
        %621 = vmatpush1.msra.mxu0 0.0
        %622 = vmatprep.subr.mxu0 0.0
        %623 = vmatpush1.msra.mxu0 0.0
        %624 = vmatprep.subr.mxu0 0.0
        %625 = vmatpush1.msra.mxu0 0.0
        %626 = vmatprep.subr.mxu0 0.0
        %627 = vmatpush1.msra.mxu0 0.0
        %628 = vmatprep.subr.mxu0 0.0
        %629 = vmatpush1.msra.mxu0 0.0
        %630 = vmatprep.subr.mxu0 0.0
        %631 = vmatpush1.msra.mxu0 0.0
        %632 = vmatprep.mubr.f32.mxu0 0.0
        %633 = vmatmul.mubr.f32.gmra.mrb[0].mxu0 %v493
        %v634 = vpop.f32.mrb[0].mxu0
        %v635 = vadd.f32 %v567, %v634
        %v636 = vpop.f32.mrb[0].mxu0
        %637 = vdwg.mxu0
        %v638 = vxor.u32 %v562, 2147483648
        %v639 = vmul.f32 %v638, 1.442695
        %v640 = vpow.pop %v639
        %v641 = vadd.f32 %v640, 1.0
        %v642 = vrcp.pop %v641
        %v643 = vmul.f32 1.0, %v642
        %v644 = vtanh.pop %v562
        %v645 = vmul.f32 %v643, 0.0
        %647 = vrot.lane.b32.xlu0 %v644, 64
        %v648 = vpop.permute.xlu0 %647
        %v650 = vmul.f32 %v643, %v648
        %652 = vrot.lane.b32.xlu0 %v650, 32
        %v653 = vpop.permute.xlu0 %652
        %v655 = vadd.f32 %v645, %v653
        %v656 = vtanh.pop %v655
        %658 = vrot.lane.b32.xlu0 %v656, 64
        %v659 = vpop.permute.xlu0 %658
        %v661 = vmul.f32 %v643, %v659
        %v662 = vxor.u32 %v635, 2147483648
        %v663 = vmul.f32 %v662, 1.442695
        %v664 = vpow.pop %v663
        %v665 = vadd.f32 %v664, 1.0
        %v666 = vrcp.pop %v665
        %v667 = vmul.f32 1.0, %v666
        %v668 = vtanh.pop %v635
        %v669 = vmul.f32 %v667, 0.0
        %671 = vrot.lane.b32.xlu0 %v668, 64
        %v672 = vpop.permute.xlu0 %671
        %v674 = vmul.f32 %v667, %v672
        %676 = vrot.lane.b32.xlu0 %v674, 32
        %v677 = vpop.permute.xlu0 %676
        %v679 = vadd.f32 %v669, %v677
        %v680 = vtanh.pop %v679
        %682 = vrot.lane.b32.xlu0 %v680, 64
        %v683 = vpop.permute.xlu0 %682
        %v685 = vmul.f32 %v667, %v683
        %687 = vrot.lane.b32.xlu0 %v661, 32
        %v688 = vpop.permute.xlu0 %687
        %690 = vst.msk [vmem:[#allocation3] sm:$0xff] %vm491, %v688
        %692 = vrot.lane.b32.xlu0 %v685, 32
        %v693 = vpop.permute.xlu0 %692
        %s695 = scalar_lea.vmem [#allocation4], 56
        %696 = vst.msk [vmem:[%s695] sm:$0xff] %vm491, %v693
        %s697 = scalar_lea.vmem [#allocation2], 8
        %v698 = vld [vmem:[%s697] sm:$0xf]
        %v699 = vunpack.c.l.bf16 %v698
        %v700 = vsel %vm491, %v688, 0
        %702 = vmatprep.subr.mxu0 0.0
        %703 = vmatpush1.msra.mxu0 %v290
        %704 = vmatprep.subr.mxu0 0.0
        %705 = vmatpush1.msra.mxu0 %v291
        %706 = vmatprep.subr.mxu0 0.0
        %707 = vmatpush1.msra.mxu0 %v292
        %708 = vmatprep.subr.mxu0 0.0
        %709 = vmatpush1.msra.mxu0 %v293
        %710 = vmatprep.subr.mxu0 0.0
        %711 = vmatpush1.msra.mxu0 0.0
        %712 = vmatprep.subr.mxu0 0.0
        %713 = vmatpush1.msra.mxu0 0.0
        %714 = vmatprep.subr.mxu0 0.0
        %715 = vmatpush1.msra.mxu0 0.0
        %716 = vmatprep.subr.mxu0 0.0
        %717 = vmatpush1.msra.mxu0 0.0
        %718 = vmatprep.subr.mxu0 0.0
        %719 = vmatpush1.msra.mxu0 0.0
        %720 = vmatprep.subr.mxu0 0.0
        %721 = vmatpush1.msra.mxu0 0.0
        %722 = vmatprep.subr.mxu0 0.0
        %723 = vmatpush1.msra.mxu0 0.0
        %724 = vmatprep.subr.mxu0 0.0
        %725 = vmatpush1.msra.mxu0 0.0
        %726 = vmatprep.subr.mxu0 0.0
        %727 = vmatpush1.msra.mxu0 0.0
        %728 = vmatprep.subr.mxu0 0.0
        %729 = vmatpush1.msra.mxu0 0.0
        %730 = vmatprep.subr.mxu0 0.0
        %731 = vmatpush1.msra.mxu0 0.0
        %732 = vmatprep.subr.mxu0 0.0
        %733 = vmatpush1.msra.mxu0 0.0
        %734 = vmatprep.subr.mxu0 0.0
        %735 = vmatpush1.msra.mxu0 0.0
        %736 = vmatprep.subr.mxu0 0.0
        %737 = vmatpush1.msra.mxu0 0.0
        %738 = vmatprep.subr.mxu0 0.0
        %739 = vmatpush1.msra.mxu0 0.0
        %740 = vmatprep.subr.mxu0 0.0
        %741 = vmatpush1.msra.mxu0 0.0
        %742 = vmatprep.subr.mxu0 0.0
        %743 = vmatpush1.msra.mxu0 0.0
        %744 = vmatprep.subr.mxu0 0.0
        %745 = vmatpush1.msra.mxu0 0.0
        %746 = vmatprep.subr.mxu0 0.0
        %747 = vmatpush1.msra.mxu0 0.0
        %748 = vmatprep.subr.mxu0 0.0
        %749 = vmatpush1.msra.mxu0 0.0
        %750 = vmatprep.subr.mxu0 0.0
        %751 = vmatpush1.msra.mxu0 0.0
        %752 = vmatprep.subr.mxu0 0.0
        %753 = vmatpush1.msra.mxu0 0.0
        %754 = vmatprep.subr.mxu0 0.0
        %755 = vmatpush1.msra.mxu0 0.0
        %756 = vmatprep.subr.mxu0 0.0
        %757 = vmatpush1.msra.mxu0 0.0
        %758 = vmatprep.subr.mxu0 0.0
        %759 = vmatpush1.msra.mxu0 0.0
        %760 = vmatprep.subr.mxu0 0.0
        %761 = vmatpush1.msra.mxu0 0.0
        %762 = vmatprep.subr.mxu0 0.0
        %763 = vmatpush1.msra.mxu0 0.0
        %764 = vmatprep.subr.mxu0 0.0
        %765 = vmatpush1.msra.mxu0 0.0
        %766 = vmatprep.mubr.f32.mxu0 0.0
        %767 = vmatmul.mubr.f32.gmra.mrb[0].mxu0 %v700
        %v768 = vpop.f32.mrb[0].mxu0
        %v769 = vadd.f32 %v699, %v768
        %v770 = vpop.f32.mrb[0].mxu0
        %771 = vdwg.mxu0
        %s772 = scalar_lea.vmem [#allocation2], 48
        %v773 = vld [vmem:[%s772 + $0x4] sm:$0xf]
        %v774 = vunpack.c.l.bf16 %v773
        %v775 = vsel %vm491, %v693, 0
        %777 = vmatprep.subr.mxu0 0.0
        %778 = vmatpush1.msra.mxu0 %v294
        %779 = vmatprep.subr.mxu0 0.0
        %780 = vmatpush1.msra.mxu0 %v295
        %781 = vmatprep.subr.mxu0 0.0
        %782 = vmatpush1.msra.mxu0 %v296
        %783 = vmatprep.subr.mxu0 0.0
        %784 = vmatpush1.msra.mxu0 %v297
        %785 = vmatprep.subr.mxu0 0.0
        %786 = vmatpush1.msra.mxu0 0.0
        %787 = vmatprep.subr.mxu0 0.0
        %788 = vmatpush1.msra.mxu0 0.0
        %789 = vmatprep.subr.mxu0 0.0
        %790 = vmatpush1.msra.mxu0 0.0
        %791 = vmatprep.subr.mxu0 0.0
        %792 = vmatpush1.msra.mxu0 0.0
        %793 = vmatprep.subr.mxu0 0.0
        %794 = vmatpush1.msra.mxu0 0.0
        %795 = vmatprep.subr.mxu0 0.0
        %796 = vmatpush1.msra.mxu0 0.0
        %797 = vmatprep.subr.mxu0 0.0
        %798 = vmatpush1.msra.mxu0 0.0
        %799 = vmatprep.subr.mxu0 0.0
        %800 = vmatpush1.msra.mxu0 0.0
        %801 = vmatprep.subr.mxu0 0.0
        %802 = vmatpush1.msra.mxu0 0.0
        %803 = vmatprep.subr.mxu0 0.0
        %804 = vmatpush1.msra.mxu0 0.0
        %805 = vmatprep.subr.mxu0 0.0
        %806 = vmatpush1.msra.mxu0 0.0
        %807 = vmatprep.subr.mxu0 0.0
        %808 = vmatpush1.msra.mxu0 0.0
        %809 = vmatprep.subr.mxu0 0.0
        %810 = vmatpush1.msra.mxu0 0.0
        %811 = vmatprep.subr.mxu0 0.0
        %812 = vmatpush1.msra.mxu0 0.0
        %813 = vmatprep.subr.mxu0 0.0
        %814 = vmatpush1.msra.mxu0 0.0
        %815 = vmatprep.subr.mxu0 0.0
        %816 = vmatpush1.msra.mxu0 0.0
        %817 = vmatprep.subr.mxu0 0.0
        %818 = vmatpush1.msra.mxu0 0.0
        %819 = vmatprep.subr.mxu0 0.0
        %820 = vmatpush1.msra.mxu0 0.0
        %821 = vmatprep.subr.mxu0 0.0
        %822 = vmatpush1.msra.mxu0 0.0
        %823 = vmatprep.subr.mxu0 0.0
        %824 = vmatpush1.msra.mxu0 0.0
        %825 = vmatprep.subr.mxu0 0.0
        %826 = vmatpush1.msra.mxu0 0.0
        %827 = vmatprep.subr.mxu0 0.0
        %828 = vmatpush1.msra.mxu0 0.0
        %829 = vmatprep.subr.mxu0 0.0
        %830 = vmatpush1.msra.mxu0 0.0
        %831 = vmatprep.subr.mxu0 0.0
        %832 = vmatpush1.msra.mxu0 0.0
        %833 = vmatprep.subr.mxu0 0.0
        %834 = vmatpush1.msra.mxu0 0.0
        %835 = vmatprep.subr.mxu0 0.0
        %836 = vmatpush1.msra.mxu0 0.0
        %837 = vmatprep.subr.mxu0 0.0
        %838 = vmatpush1.msra.mxu0 0.0
        %839 = vmatprep.subr.mxu0 0.0
        %840 = vmatpush1.msra.mxu0 0.0
        %841 = vmatprep.mubr.f32.mxu0 0.0
        %842 = vmatmul.mubr.f32.gmra.mrb[0].mxu0 %v775
        %v843 = vpop.f32.mrb[0].mxu0
        %v844 = vadd.f32 %v774, %v843
        %v845 = vpop.f32.mrb[0].mxu0
        %846 = vdwg.mxu0
        %v847 = vxor.u32 %v769, 2147483648
        %v848 = vmul.f32 %v847, 1.442695
        %v849 = vpow.pop %v848
        %v850 = vadd.f32 %v849, 1.0
        %v851 = vrcp.pop %v850
        %v852 = vmul.f32 1.0, %v851
        %v853 = vtanh.pop %v769
        %v854 = vmul.f32 %v852, %v655
        %856 = vrot.lane.b32.xlu0 %v853, 64
        %v857 = vpop.permute.xlu0 %856
        %v859 = vmul.f32 %v852, %v857
        %861 = vrot.lane.b32.xlu0 %v859, 32
        %v862 = vpop.permute.xlu0 %861
        %v864 = vadd.f32 %v854, %v862
        %v865 = vtanh.pop %v864
        %867 = vrot.lane.b32.xlu0 %v865, 64
        %v868 = vpop.permute.xlu0 %867
        %v870 = vmul.f32 %v852, %v868
        %v871 = vxor.u32 %v844, 2147483648
        %v872 = vmul.f32 %v871, 1.442695
        %v873 = vpow.pop %v872
        %v874 = vadd.f32 %v873, 1.0
        %v875 = vrcp.pop %v874
        %v876 = vmul.f32 1.0, %v875
        %v877 = vtanh.pop %v844
        %v878 = vmul.f32 %v876, %v679
        %880 = vrot.lane.b32.xlu0 %v877, 64
        %v881 = vpop.permute.xlu0 %880
        %v883 = vmul.f32 %v876, %v881
        %885 = vrot.lane.b32.xlu0 %v883, 32
        %v886 = vpop.permute.xlu0 %885
        %v888 = vadd.f32 %v878, %v886
        %v889 = vtanh.pop %v888
        %891 = vrot.lane.b32.xlu0 %v889, 64
        %v892 = vpop.permute.xlu0 %891
        %v894 = vmul.f32 %v876, %v892
        %896 = vrot.lane.b32.xlu0 %v870, 32
        %v897 = vpop.permute.xlu0 %896
        %s899 = scalar_lea.vmem [#allocation3], 8
        %900 = vst.msk [vmem:[%s899] sm:$0xff] %vm491, %v897
        %902 = vrot.lane.b32.xlu0 %v894, 32
        %v903 = vpop.permute.xlu0 %902
        %s905 = scalar_lea.vmem [#allocation4], 48
        %906 = vst.msk [vmem:[%s905] sm:$0xff] %vm491, %v903
        %s907 = scalar_lea.vmem [#allocation2], 16
        %v908 = vld [vmem:[%s907] sm:$0xf]
        %v909 = vunpack.c.l.bf16 %v908
        %v910 = vsel %vm491, %v897, 0
        %912 = vmatprep.subr.mxu0 0.0
        %913 = vmatpush1.msra.mxu0 %v290
        %914 = vmatprep.subr.mxu0 0.0
        %915 = vmatpush1.msra.mxu0 %v291
        %916 = vmatprep.subr.mxu0 0.0
        %917 = vmatpush1.msra.mxu0 %v292
        %918 = vmatprep.subr.mxu0 0.0
        %919 = vmatpush1.msra.mxu0 %v293
        %920 = vmatprep.subr.mxu0 0.0
        %921 = vmatpush1.msra.mxu0 0.0
        %922 = vmatprep.subr.mxu0 0.0
        %923 = vmatpush1.msra.mxu0 0.0
        %924 = vmatprep.subr.mxu0 0.0
        %925 = vmatpush1.msra.mxu0 0.0
        %926 = vmatprep.subr.mxu0 0.0
        %927 = vmatpush1.msra.mxu0 0.0
        %928 = vmatprep.subr.mxu0 0.0
        %929 = vmatpush1.msra.mxu0 0.0
        %930 = vmatprep.subr.mxu0 0.0
        %931 = vmatpush1.msra.mxu0 0.0
        %932 = vmatprep.subr.mxu0 0.0
        %933 = vmatpush1.msra.mxu0 0.0
        %934 = vmatprep.subr.mxu0 0.0
        %935 = vmatpush1.msra.mxu0 0.0
        %936 = vmatprep.subr.mxu0 0.0
        %937 = vmatpush1.msra.mxu0 0.0
        %938 = vmatprep.subr.mxu0 0.0
        %939 = vmatpush1.msra.mxu0 0.0
        %940 = vmatprep.subr.mxu0 0.0
        %941 = vmatpush1.msra.mxu0 0.0
        %942 = vmatprep.subr.mxu0 0.0
        %943 = vmatpush1.msra.mxu0 0.0
        %944 = vmatprep.subr.mxu0 0.0
        %945 = vmatpush1.msra.mxu0 0.0
        %946 = vmatprep.subr.mxu0 0.0
        %947 = vmatpush1.msra.mxu0 0.0
        %948 = vmatprep.subr.mxu0 0.0
        %949 = vmatpush1.msra.mxu0 0.0
        %950 = vmatprep.subr.mxu0 0.0
        %951 = vmatpush1.msra.mxu0 0.0
        %952 = vmatprep.subr.mxu0 0.0
        %953 = vmatpush1.msra.mxu0 0.0
        %954 = vmatprep.subr.mxu0 0.0
        %955 = vmatpush1.msra.mxu0 0.0
        %956 = vmatprep.subr.mxu0 0.0
        %957 = vmatpush1.msra.mxu0 0.0
        %958 = vmatprep.subr.mxu0 0.0
        %959 = vmatpush1.msra.mxu0 0.0
        %960 = vmatprep.subr.mxu0 0.0
        %961 = vmatpush1.msra.mxu0 0.0
        %962 = vmatprep.subr.mxu0 0.0
        %963 = vmatpush1.msra.mxu0 0.0
        %964 = vmatprep.subr.mxu0 0.0
        %965 = vmatpush1.msra.mxu0 0.0
        %966 = vmatprep.subr.mxu0 0.0
        %967 = vmatpush1.msra.mxu0 0.0
        %968 = vmatprep.subr.mxu0 0.0
        %969 = vmatpush1.msra.mxu0 0.0
        %970 = vmatprep.subr.mxu0 0.0
        %971 = vmatpush1.msra.mxu0 0.0
        %972 = vmatprep.subr.mxu0 0.0
        %973 = vmatpush1.msra.mxu0 0.0
        %974 = vmatprep.subr.mxu0 0.0
        %975 = vmatpush1.msra.mxu0 0.0
        %976 = vmatprep.mubr.f32.mxu0 0.0
        %977 = vmatmul.mubr.f32.gmra.mrb[0].mxu0 %v910
        %v978 = vpop.f32.mrb[0].mxu0
        %v979 = vadd.f32 %v909, %v978
        %v980 = vpop.f32.mrb[0].mxu0
        %981 = vdwg.mxu0
        %s982 = scalar_lea.vmem [#allocation2], 40
        %v983 = vld [vmem:[%s982 + $0x4] sm:$0xf]
        %v984 = vunpack.c.l.bf16 %v983
        %v985 = vsel %vm491, %v903, 0
        %987 = vmatprep.subr.mxu0 0.0
        %988 = vmatpush1.msra.mxu0 %v294
        %989 = vmatprep.subr.mxu0 0.0
        %990 = vmatpush1.msra.mxu0 %v295
        %991 = vmatprep.subr.mxu0 0.0
        %992 = vmatpush1.msra.mxu0 %v296
        %993 = vmatprep.subr.mxu0 0.0
        %994 = vmatpush1.msra.mxu0 %v297
        %995 = vmatprep.subr.mxu0 0.0
        %996 = vmatpush1.msra.mxu0 0.0
        %997 = vmatprep.subr.mxu0 0.0
        %998 = vmatpush1.msra.mxu0 0.0
        %999 = vmatprep.subr.mxu0 0.0
        %1000 = vmatpush1.msra.mxu0 0.0
        %1001 = vmatprep.subr.mxu0 0.0
        %1002 = vmatpush1.msra.mxu0 0.0
        %1003 = vmatprep.subr.mxu0 0.0
        %1004 = vmatpush1.msra.mxu0 0.0
        %1005 = vmatprep.subr.mxu0 0.0
        %1006 = vmatpush1.msra.mxu0 0.0
        %1007 = vmatprep.subr.mxu0 0.0
        %1008 = vmatpush1.msra.mxu0 0.0
        %1009 = vmatprep.subr.mxu0 0.0
        %1010 = vmatpush1.msra.mxu0 0.0
        %1011 = vmatprep.subr.mxu0 0.0
        %1012 = vmatpush1.msra.mxu0 0.0
        %1013 = vmatprep.subr.mxu0 0.0
        %1014 = vmatpush1.msra.mxu0 0.0
        %1015 = vmatprep.subr.mxu0 0.0
        %1016 = vmatpush1.msra.mxu0 0.0
        %1017 = vmatprep.subr.mxu0 0.0
        %1018 = vmatpush1.msra.mxu0 0.0
        %1019 = vmatprep.subr.mxu0 0.0
        %1020 = vmatpush1.msra.mxu0 0.0
        %1021 = vmatprep.subr.mxu0 0.0
        %1022 = vmatpush1.msra.mxu0 0.0
        %1023 = vmatprep.subr.mxu0 0.0
        %1024 = vmatpush1.msra.mxu0 0.0
        %1025 = vmatprep.subr.mxu0 0.0
        %1026 = vmatpush1.msra.mxu0 0.0
        %1027 = vmatprep.subr.mxu0 0.0
        %1028 = vmatpush1.msra.mxu0 0.0
        %1029 = vmatprep.subr.mxu0 0.0
        %1030 = vmatpush1.msra.mxu0 0.0
        %1031 = vmatprep.subr.mxu0 0.0
        %1032 = vmatpush1.msra.mxu0 0.0
        %1033 = vmatprep.subr.mxu0 0.0
        %1034 = vmatpush1.msra.mxu0 0.0
        %1035 = vmatprep.subr.mxu0 0.0
        %1036 = vmatpush1.msra.mxu0 0.0
        %1037 = vmatprep.subr.mxu0 0.0
        %1038 = vmatpush1.msra.mxu0 0.0
        %1039 = vmatprep.subr.mxu0 0.0
        %1040 = vmatpush1.msra.mxu0 0.0
        %1041 = vmatprep.subr.mxu0 0.0
        %1042 = vmatpush1.msra.mxu0 0.0
        %1043 = vmatprep.subr.mxu0 0.0
        %1044 = vmatpush1.msra.mxu0 0.0
        %1045 = vmatprep.subr.mxu0 0.0
        %1046 = vmatpush1.msra.mxu0 0.0
        %1047 = vmatprep.subr.mxu0 0.0
        %1048 = vmatpush1.msra.mxu0 0.0
        %1049 = vmatprep.subr.mxu0 0.0
        %1050 = vmatpush1.msra.mxu0 0.0
        %1051 = vmatprep.mubr.f32.mxu0 0.0
        %1052 = vmatmul.mubr.f32.gmra.mrb[0].mxu0 %v985
        %v1053 = vpop.f32.mrb[0].mxu0
        %v1054 = vadd.f32 %v984, %v1053
        %v1055 = vpop.f32.mrb[0].mxu0
        %1056 = vdwg.mxu0
        %v1057 = vxor.u32 %v979, 2147483648
        %v1058 = vmul.f32 %v1057, 1.442695
        %v1059 = vpow.pop %v1058
        %v1060 = vadd.f32 %v1059, 1.0
        %v1061 = vrcp.pop %v1060
        %v1062 = vmul.f32 1.0, %v1061
        %v1063 = vtanh.pop %v979
        %v1064 = vmul.f32 %v1062, %v864
        %1066 = vrot.lane.b32.xlu0 %v1063, 64
        %v1067 = vpop.permute.xlu0 %1066
        %v1069 = vmul.f32 %v1062, %v1067
        %1071 = vrot.lane.b32.xlu0 %v1069, 32
        %v1072 = vpop.permute.xlu0 %1071
        %v1074 = vadd.f32 %v1064, %v1072
        %v1075 = vtanh.pop %v1074
        %1077 = vrot.lane.b32.xlu0 %v1075, 64
        %v1078 = vpop.permute.xlu0 %1077
        %v1080 = vmul.f32 %v1062, %v1078
        %v1081 = vxor.u32 %v1054, 2147483648
        %v1082 = vmul.f32 %v1081, 1.442695
        %v1083 = vpow.pop %v1082
        %v1084 = vadd.f32 %v1083, 1.0
        %v1085 = vrcp.pop %v1084
        %v1086 = vmul.f32 1.0, %v1085
        %v1087 = vtanh.pop %v1054
        %v1088 = vmul.f32 %v1086, %v888
        %1090 = vrot.lane.b32.xlu0 %v1087, 64
        %v1091 = vpop.permute.xlu0 %1090
        %v1093 = vmul.f32 %v1086, %v1091
        %1095 = vrot.lane.b32.xlu0 %v1093, 32
        %v1096 = vpop.permute.xlu0 %1095
        %v1098 = vadd.f32 %v1088, %v1096
        %v1099 = vtanh.pop %v1098
        %1101 = vrot.lane.b32.xlu0 %v1099, 64
        %v1102 = vpop.permute.xlu0 %1101
        %v1104 = vmul.f32 %v1086, %v1102
        %1106 = vrot.lane.b32.xlu0 %v1080, 32
        %v1107 = vpop.permute.xlu0 %1106
        %s1109 = scalar_lea.vmem [#allocation3], 16
        %1110 = vst.msk [vmem:[%s1109] sm:$0xff] %vm491, %v1107
        %1112 = vrot.lane.b32.xlu0 %v1104, 32
        %v1113 = vpop.permute.xlu0 %1112
        %s1115 = scalar_lea.vmem [#allocation4], 40
        %1116 = vst.msk [vmem:[%s1115] sm:$0xff] %vm491, %v1113
        %s1117 = scalar_lea.vmem [#allocation2], 24
        %v1118 = vld [vmem:[%s1117] sm:$0xf]
        %v1119 = vunpack.c.l.bf16 %v1118
        %v1120 = vsel %vm491, %v1107, 0
        %1122 = vmatprep.subr.mxu0 0.0
        %1123 = vmatpush1.msra.mxu0 %v290
        %1124 = vmatprep.subr.mxu0 0.0
        %1125 = vmatpush1.msra.mxu0 %v291
        %1126 = vmatprep.subr.mxu0 0.0
        %1127 = vmatpush1.msra.mxu0 %v292
        %1128 = vmatprep.subr.mxu0 0.0
        %1129 = vmatpush1.msra.mxu0 %v293
        %1130 = vmatprep.subr.mxu0 0.0
        %1131 = vmatpush1.msra.mxu0 0.0
        %1132 = vmatprep.subr.mxu0 0.0
        %1133 = vmatpush1.msra.mxu0 0.0
        %1134 = vmatprep.subr.mxu0 0.0
        %1135 = vmatpush1.msra.mxu0 0.0
        %1136 = vmatprep.subr.mxu0 0.0
        %1137 = vmatpush1.msra.mxu0 0.0
        %1138 = vmatprep.subr.mxu0 0.0
        %1139 = vmatpush1.msra.mxu0 0.0
        %1140 = vmatprep.subr.mxu0 0.0
        %1141 = vmatpush1.msra.mxu0 0.0
        %1142 = vmatprep.subr.mxu0 0.0
        %1143 = vmatpush1.msra.mxu0 0.0
        %1144 = vmatprep.subr.mxu0 0.0
        %1145 = vmatpush1.msra.mxu0 0.0
        %1146 = vmatprep.subr.mxu0 0.0
        %1147 = vmatpush1.msra.mxu0 0.0
        %1148 = vmatprep.subr.mxu0 0.0
        %1149 = vmatpush1.msra.mxu0 0.0
        %1150 = vmatprep.subr.mxu0 0.0
        %1151 = vmatpush1.msra.mxu0 0.0
        %1152 = vmatprep.subr.mxu0 0.0
        %1153 = vmatpush1.msra.mxu0 0.0
        %1154 = vmatprep.subr.mxu0 0.0
        %1155 = vmatpush1.msra.mxu0 0.0
        %1156 = vmatprep.subr.mxu0 0.0
        %1157 = vmatpush1.msra.mxu0 0.0
        %1158 = vmatprep.subr.mxu0 0.0
        %1159 = vmatpush1.msra.mxu0 0.0
        %1160 = vmatprep.subr.mxu0 0.0
        %1161 = vmatpush1.msra.mxu0 0.0
        %1162 = vmatprep.subr.mxu0 0.0
        %1163 = vmatpush1.msra.mxu0 0.0
        %1164 = vmatprep.subr.mxu0 0.0
        %1165 = vmatpush1.msra.mxu0 0.0
        %1166 = vmatprep.subr.mxu0 0.0
        %1167 = vmatpush1.msra.mxu0 0.0
        %1168 = vmatprep.subr.mxu0 0.0
        %1169 = vmatpush1.msra.mxu0 0.0
        %1170 = vmatprep.subr.mxu0 0.0
        %1171 = vmatpush1.msra.mxu0 0.0
        %1172 = vmatprep.subr.mxu0 0.0
        %1173 = vmatpush1.msra.mxu0 0.0
        %1174 = vmatprep.subr.mxu0 0.0
        %1175 = vmatpush1.msra.mxu0 0.0
        %1176 = vmatprep.subr.mxu0 0.0
        %1177 = vmatpush1.msra.mxu0 0.0
        %1178 = vmatprep.subr.mxu0 0.0
        %1179 = vmatpush1.msra.mxu0 0.0
        %1180 = vmatprep.subr.mxu0 0.0
        %1181 = vmatpush1.msra.mxu0 0.0
        %1182 = vmatprep.subr.mxu0 0.0
        %1183 = vmatpush1.msra.mxu0 0.0
        %1184 = vmatprep.subr.mxu0 0.0
        %1185 = vmatpush1.msra.mxu0 0.0
        %1186 = vmatprep.mubr.f32.mxu0 0.0
        %1187 = vmatmul.mubr.f32.gmra.mrb[0].mxu0 %v1120
        %v1188 = vpop.f32.mrb[0].mxu0
        %v1189 = vadd.f32 %v1119, %v1188
        %v1190 = vpop.f32.mrb[0].mxu0
        %1191 = vdwg.mxu0
        %s1192 = scalar_lea.vmem [#allocation2], 32
        %v1193 = vld [vmem:[%s1192 + $0x4] sm:$0xf]
        %v1194 = vunpack.c.l.bf16 %v1193
        %v1195 = vsel %vm491, %v1113, 0
        %1197 = vmatprep.subr.mxu0 0.0
        %1198 = vmatpush1.msra.mxu0 %v294
        %1199 = vmatprep.subr.mxu0 0.0
        %1200 = vmatpush1.msra.mxu0 %v295
        %1201 = vmatprep.subr.mxu0 0.0
        %1202 = vmatpush1.msra.mxu0 %v296
        %1203 = vmatprep.subr.mxu0 0.0
        %1204 = vmatpush1.msra.mxu0 %v297
        %1205 = vmatprep.subr.mxu0 0.0
        %1206 = vmatpush1.msra.mxu0 0.0
        %1207 = vmatprep.subr.mxu0 0.0
        %1208 = vmatpush1.msra.mxu0 0.0
        %1209 = vmatprep.subr.mxu0 0.0
        %1210 = vmatpush1.msra.mxu0 0.0
        %1211 = vmatprep.subr.mxu0 0.0
        %1212 = vmatpush1.msra.mxu0 0.0
        %1213 = vmatprep.subr.mxu0 0.0
        %1214 = vmatpush1.msra.mxu0 0.0
        %1215 = vmatprep.subr.mxu0 0.0
        %1216 = vmatpush1.msra.mxu0 0.0
        %1217 = vmatprep.subr.mxu0 0.0
        %1218 = vmatpush1.msra.mxu0 0.0
        %1219 = vmatprep.subr.mxu0 0.0
        %1220 = vmatpush1.msra.mxu0 0.0
        %1221 = vmatprep.subr.mxu0 0.0
        %1222 = vmatpush1.msra.mxu0 0.0
        %1223 = vmatprep.subr.mxu0 0.0
        %1224 = vmatpush1.msra.mxu0 0.0
        %1225 = vmatprep.subr.mxu0 0.0
        %1226 = vmatpush1.msra.mxu0 0.0
        %1227 = vmatprep.subr.mxu0 0.0
        %1228 = vmatpush1.msra.mxu0 0.0
        %1229 = vmatprep.subr.mxu0 0.0
        %1230 = vmatpush1.msra.mxu0 0.0
        %1231 = vmatprep.subr.mxu0 0.0
        %1232 = vmatpush1.msra.mxu0 0.0
        %1233 = vmatprep.subr.mxu0 0.0
        %1234 = vmatpush1.msra.mxu0 0.0
        %1235 = vmatprep.subr.mxu0 0.0
        %1236 = vmatpush1.msra.mxu0 0.0
        %1237 = vmatprep.subr.mxu0 0.0
        %1238 = vmatpush1.msra.mxu0 0.0
        %1239 = vmatprep.subr.mxu0 0.0
        %1240 = vmatpush1.msra.mxu0 0.0
        %1241 = vmatprep.subr.mxu0 0.0
        %1242 = vmatpush1.msra.mxu0 0.0
        %1243 = vmatprep.subr.mxu0 0.0
        %1244 = vmatpush1.msra.mxu0 0.0
        %1245 = vmatprep.subr.mxu0 0.0
        %1246 = vmatpush1.msra.mxu0 0.0
        %1247 = vmatprep.subr.mxu0 0.0
        %1248 = vmatpush1.msra.mxu0 0.0
        %1249 = vmatprep.subr.mxu0 0.0
        %1250 = vmatpush1.msra.mxu0 0.0
        %1251 = vmatprep.subr.mxu0 0.0
        %1252 = vmatpush1.msra.mxu0 0.0
        %1253 = vmatprep.subr.mxu0 0.0
        %1254 = vmatpush1.msra.mxu0 0.0
        %1255 = vmatprep.subr.mxu0 0.0
        %1256 = vmatpush1.msra.mxu0 0.0
        %1257 = vmatprep.subr.mxu0 0.0
        %1258 = vmatpush1.msra.mxu0 0.0
        %1259 = vmatprep.subr.mxu0 0.0
        %1260 = vmatpush1.msra.mxu0 0.0
        %1261 = vmatprep.mubr.f32.mxu0 0.0
        %1262 = vmatmul.mubr.f32.gmra.mrb[0].mxu0 %v1195
        %v1263 = vpop.f32.mrb[0].mxu0
        %v1264 = vadd.f32 %v1194, %v1263
        %v1265 = vpop.f32.mrb[0].mxu0
        %1266 = vdwg.mxu0
        %v1267 = vxor.u32 %v1189, 2147483648
        %v1268 = vmul.f32 %v1267, 1.442695
        %v1269 = vpow.pop %v1268
        %v1270 = vadd.f32 %v1269, 1.0
        %v1271 = vrcp.pop %v1270
        %v1272 = vmul.f32 1.0, %v1271
        %v1273 = vtanh.pop %v1189
        %v1274 = vmul.f32 %v1272, %v1074
        %1276 = vrot.lane.b32.xlu0 %v1273, 64
        %v1277 = vpop.permute.xlu0 %1276
        %v1279 = vmul.f32 %v1272, %v1277
        %1281 = vrot.lane.b32.xlu0 %v1279, 32
        %v1282 = vpop.permute.xlu0 %1281
        %v1284 = vadd.f32 %v1274, %v1282
        %v1285 = vtanh.pop %v1284
        %1287 = vrot.lane.b32.xlu0 %v1285, 64
        %v1288 = vpop.permute.xlu0 %1287
        %v1290 = vmul.f32 %v1272, %v1288
        %v1291 = vxor.u32 %v1264, 2147483648
        %v1292 = vmul.f32 %v1291, 1.442695
        %v1293 = vpow.pop %v1292
        %v1294 = vadd.f32 %v1293, 1.0
        %v1295 = vrcp.pop %v1294
        %v1296 = vmul.f32 1.0, %v1295
        %v1297 = vtanh.pop %v1264
        %v1298 = vmul.f32 %v1296, %v1098
        %1300 = vrot.lane.b32.xlu0 %v1297, 64
        %v1301 = vpop.permute.xlu0 %1300
        %v1303 = vmul.f32 %v1296, %v1301
        %1305 = vrot.lane.b32.xlu0 %v1303, 32
        %v1306 = vpop.permute.xlu0 %1305
        %v1308 = vadd.f32 %v1298, %v1306
        %v1309 = vtanh.pop %v1308
        %1311 = vrot.lane.b32.xlu0 %v1309, 64
        %v1312 = vpop.permute.xlu0 %1311
        %v1314 = vmul.f32 %v1296, %v1312
        %1316 = vrot.lane.b32.xlu0 %v1290, 32
        %v1317 = vpop.permute.xlu0 %1316
        %s1319 = scalar_lea.vmem [#allocation3], 24
        %1320 = vst.msk [vmem:[%s1319] sm:$0xff] %vm491, %v1317
        %1322 = vrot.lane.b32.xlu0 %v1314, 32
        %v1323 = vpop.permute.xlu0 %1322
        %s1325 = scalar_lea.vmem [#allocation4], 32
        %1326 = vst.msk [vmem:[%s1325] sm:$0xff] %vm491, %v1323
        %v1327 = vld [vmem:[%s1192] sm:$0xf]
        %v1328 = vunpack.c.l.bf16 %v1327
        %v1329 = vsel %vm491, %v1317, 0
        %1331 = vmatprep.subr.mxu0 0.0
        %1332 = vmatpush1.msra.mxu0 %v290
        %1333 = vmatprep.subr.mxu0 0.0
        %1334 = vmatpush1.msra.mxu0 %v291
        %1335 = vmatprep.subr.mxu0 0.0
        %1336 = vmatpush1.msra.mxu0 %v292
        %1337 = vmatprep.subr.mxu0 0.0
        %1338 = vmatpush1.msra.mxu0 %v293
        %1339 = vmatprep.subr.mxu0 0.0
        %1340 = vmatpush1.msra.mxu0 0.0
        %1341 = vmatprep.subr.mxu0 0.0
        %1342 = vmatpush1.msra.mxu0 0.0
        %1343 = vmatprep.subr.mxu0 0.0
        %1344 = vmatpush1.msra.mxu0 0.0
        %1345 = vmatprep.subr.mxu0 0.0
        %1346 = vmatpush1.msra.mxu0 0.0
        %1347 = vmatprep.subr.mxu0 0.0
        %1348 = vmatpush1.msra.mxu0 0.0
        %1349 = vmatprep.subr.mxu0 0.0
        %1350 = vmatpush1.msra.mxu0 0.0
        %1351 = vmatprep.subr.mxu0 0.0
        %1352 = vmatpush1.msra.mxu0 0.0
        %1353 = vmatprep.subr.mxu0 0.0
        %1354 = vmatpush1.msra.mxu0 0.0
        %1355 = vmatprep.subr.mxu0 0.0
        %1356 = vmatpush1.msra.mxu0 0.0
        %1357 = vmatprep.subr.mxu0 0.0
        %1358 = vmatpush1.msra.mxu0 0.0
        %1359 = vmatprep.subr.mxu0 0.0
        %1360 = vmatpush1.msra.mxu0 0.0
        %1361 = vmatprep.subr.mxu0 0.0
        %1362 = vmatpush1.msra.mxu0 0.0
        %1363 = vmatprep.subr.mxu0 0.0
        %1364 = vmatpush1.msra.mxu0 0.0
        %1365 = vmatprep.subr.mxu0 0.0
        %1366 = vmatpush1.msra.mxu0 0.0
        %1367 = vmatprep.subr.mxu0 0.0
        %1368 = vmatpush1.msra.mxu0 0.0
        %1369 = vmatprep.subr.mxu0 0.0
        %1370 = vmatpush1.msra.mxu0 0.0
        %1371 = vmatprep.subr.mxu0 0.0
        %1372 = vmatpush1.msra.mxu0 0.0
        %1373 = vmatprep.subr.mxu0 0.0
        %1374 = vmatpush1.msra.mxu0 0.0
        %1375 = vmatprep.subr.mxu0 0.0
        %1376 = vmatpush1.msra.mxu0 0.0
        %1377 = vmatprep.subr.mxu0 0.0
        %1378 = vmatpush1.msra.mxu0 0.0
        %1379 = vmatprep.subr.mxu0 0.0
        %1380 = vmatpush1.msra.mxu0 0.0
        %1381 = vmatprep.subr.mxu0 0.0
        %1382 = vmatpush1.msra.mxu0 0.0
        %1383 = vmatprep.subr.mxu0 0.0
        %1384 = vmatpush1.msra.mxu0 0.0
        %1385 = vmatprep.subr.mxu0 0.0
        %1386 = vmatpush1.msra.mxu0 0.0
        %1387 = vmatprep.subr.mxu0 0.0
        %1388 = vmatpush1.msra.mxu0 0.0
        %1389 = vmatprep.subr.mxu0 0.0
        %1390 = vmatpush1.msra.mxu0 0.0
        %1391 = vmatprep.subr.mxu0 0.0
        %1392 = vmatpush1.msra.mxu0 0.0
        %1393 = vmatprep.subr.mxu0 0.0
        %1394 = vmatpush1.msra.mxu0 0.0
        %1395 = vmatprep.mubr.f32.mxu0 0.0
        %1396 = vmatmul.mubr.f32.gmra.mrb[0].mxu0 %v1329
        %v1397 = vpop.f32.mrb[0].mxu0
        %v1398 = vadd.f32 %v1328, %v1397
        %v1399 = vpop.f32.mrb[0].mxu0
        %1400 = vdwg.mxu0
        %v1401 = vld [vmem:[%s1117 + $0x4] sm:$0xf]
        %v1402 = vunpack.c.l.bf16 %v1401
        %v1403 = vsel %vm491, %v1323, 0
        %1405 = vmatprep.subr.mxu0 0.0
        %1406 = vmatpush1.msra.mxu0 %v294
        %1407 = vmatprep.subr.mxu0 0.0
        %1408 = vmatpush1.msra.mxu0 %v295
        %1409 = vmatprep.subr.mxu0 0.0
        %1410 = vmatpush1.msra.mxu0 %v296
        %1411 = vmatprep.subr.mxu0 0.0
        %1412 = vmatpush1.msra.mxu0 %v297
        %1413 = vmatprep.subr.mxu0 0.0
        %1414 = vmatpush1.msra.mxu0 0.0
        %1415 = vmatprep.subr.mxu0 0.0
        %1416 = vmatpush1.msra.mxu0 0.0
        %1417 = vmatprep.subr.mxu0 0.0
        %1418 = vmatpush1.msra.mxu0 0.0
        %1419 = vmatprep.subr.mxu0 0.0
        %1420 = vmatpush1.msra.mxu0 0.0
        %1421 = vmatprep.subr.mxu0 0.0
        %1422 = vmatpush1.msra.mxu0 0.0
        %1423 = vmatprep.subr.mxu0 0.0
        %1424 = vmatpush1.msra.mxu0 0.0
        %1425 = vmatprep.subr.mxu0 0.0
        %1426 = vmatpush1.msra.mxu0 0.0
        %1427 = vmatprep.subr.mxu0 0.0
        %1428 = vmatpush1.msra.mxu0 0.0
        %1429 = vmatprep.subr.mxu0 0.0
        %1430 = vmatpush1.msra.mxu0 0.0
        %1431 = vmatprep.subr.mxu0 0.0
        %1432 = vmatpush1.msra.mxu0 0.0
        %1433 = vmatprep.subr.mxu0 0.0
        %1434 = vmatpush1.msra.mxu0 0.0
        %1435 = vmatprep.subr.mxu0 0.0
        %1436 = vmatpush1.msra.mxu0 0.0
        %1437 = vmatprep.subr.mxu0 0.0
        %1438 = vmatpush1.msra.mxu0 0.0
        %1439 = vmatprep.subr.mxu0 0.0
        %1440 = vmatpush1.msra.mxu0 0.0
        %1441 = vmatprep.subr.mxu0 0.0
        %1442 = vmatpush1.msra.mxu0 0.0
        %1443 = vmatprep.subr.mxu0 0.0
        %1444 = vmatpush1.msra.mxu0 0.0
        %1445 = vmatprep.subr.mxu0 0.0
        %1446 = vmatpush1.msra.mxu0 0.0
        %1447 = vmatprep.subr.mxu0 0.0
        %1448 = vmatpush1.msra.mxu0 0.0
        %1449 = vmatprep.subr.mxu0 0.0
        %1450 = vmatpush1.msra.mxu0 0.0
        %1451 = vmatprep.subr.mxu0 0.0
        %1452 = vmatpush1.msra.mxu0 0.0
        %1453 = vmatprep.subr.mxu0 0.0
        %1454 = vmatpush1.msra.mxu0 0.0
        %1455 = vmatprep.subr.mxu0 0.0
        %1456 = vmatpush1.msra.mxu0 0.0
        %1457 = vmatprep.subr.mxu0 0.0
        %1458 = vmatpush1.msra.mxu0 0.0
        %1459 = vmatprep.subr.mxu0 0.0
        %1460 = vmatpush1.msra.mxu0 0.0
        %1461 = vmatprep.subr.mxu0 0.0
        %1462 = vmatpush1.msra.mxu0 0.0
        %1463 = vmatprep.subr.mxu0 0.0
        %1464 = vmatpush1.msra.mxu0 0.0
        %1465 = vmatprep.subr.mxu0 0.0
        %1466 = vmatpush1.msra.mxu0 0.0
        %1467 = vmatprep.subr.mxu0 0.0
        %1468 = vmatpush1.msra.mxu0 0.0
        %1469 = vmatprep.mubr.f32.mxu0 0.0
        %1470 = vmatmul.mubr.f32.gmra.mrb[0].mxu0 %v1403
        %v1471 = vpop.f32.mrb[0].mxu0
        %v1472 = vadd.f32 %v1402, %v1471
        %v1473 = vpop.f32.mrb[0].mxu0
        %1474 = vdwg.mxu0
        %v1475 = vxor.u32 %v1398, 2147483648
        %v1476 = vmul.f32 %v1475, 1.442695
        %v1477 = vpow.pop %v1476
        %v1478 = vadd.f32 %v1477, 1.0
        %v1479 = vrcp.pop %v1478
        %v1480 = vmul.f32 1.0, %v1479
        %v1481 = vtanh.pop %v1398
        %v1482 = vmul.f32 %v1480, %v1284
        %1484 = vrot.lane.b32.xlu0 %v1481, 64
        %v1485 = vpop.permute.xlu0 %1484
        %v1487 = vmul.f32 %v1480, %v1485
        %1489 = vrot.lane.b32.xlu0 %v1487, 32
        %v1490 = vpop.permute.xlu0 %1489
        %v1492 = vadd.f32 %v1482, %v1490
        %v1493 = vtanh.pop %v1492
        %1495 = vrot.lane.b32.xlu0 %v1493, 64
        %v1496 = vpop.permute.xlu0 %1495
        %v1498 = vmul.f32 %v1480, %v1496
        %v1499 = vxor.u32 %v1472, 2147483648
        %v1500 = vmul.f32 %v1499, 1.442695
        %v1501 = vpow.pop %v1500
        %v1502 = vadd.f32 %v1501, 1.0
        %v1503 = vrcp.pop %v1502
        %v1504 = vmul.f32 1.0, %v1503
        %v1505 = vtanh.pop %v1472
        %v1506 = vmul.f32 %v1504, %v1308
        %1508 = vrot.lane.b32.xlu0 %v1505, 64
        %v1509 = vpop.permute.xlu0 %1508
        %v1511 = vmul.f32 %v1504, %v1509
        %1513 = vrot.lane.b32.xlu0 %v1511, 32
        %v1514 = vpop.permute.xlu0 %1513
        %v1516 = vadd.f32 %v1506, %v1514
        %v1517 = vtanh.pop %v1516
        %1519 = vrot.lane.b32.xlu0 %v1517, 64
        %v1520 = vpop.permute.xlu0 %1519
        %v1522 = vmul.f32 %v1504, %v1520
        %1524 = vrot.lane.b32.xlu0 %v1498, 32
        %v1525 = vpop.permute.xlu0 %1524
        %s1527 = scalar_lea.vmem [#allocation3], 32
        %1528 = vst.msk [vmem:[%s1527] sm:$0xff] %vm491, %v1525
        %1530 = vrot.lane.b32.xlu0 %v1522, 32
        %v1531 = vpop.permute.xlu0 %1530
        %s1533 = scalar_lea.vmem [#allocation4], 24
        %1534 = vst.msk [vmem:[%s1533] sm:$0xff] %vm491, %v1531
        %v1535 = vld [vmem:[%s982] sm:$0xf]
        %v1536 = vunpack.c.l.bf16 %v1535
        %v1537 = vsel %vm491, %v1525, 0
        %1539 = vmatprep.subr.mxu0 0.0
        %1540 = vmatpush1.msra.mxu0 %v290
        %1541 = vmatprep.subr.mxu0 0.0
        %1542 = vmatpush1.msra.mxu0 %v291
        %1543 = vmatprep.subr.mxu0 0.0
        %1544 = vmatpush1.msra.mxu0 %v292
        %1545 = vmatprep.subr.mxu0 0.0
        %1546 = vmatpush1.msra.mxu0 %v293
        %1547 = vmatprep.subr.mxu0 0.0
        %1548 = vmatpush1.msra.mxu0 0.0
        %1549 = vmatprep.subr.mxu0 0.0
        %1550 = vmatpush1.msra.mxu0 0.0
        %1551 = vmatprep.subr.mxu0 0.0
        %1552 = vmatpush1.msra.mxu0 0.0
        %1553 = vmatprep.subr.mxu0 0.0
        %1554 = vmatpush1.msra.mxu0 0.0
        %1555 = vmatprep.subr.mxu0 0.0
        %1556 = vmatpush1.msra.mxu0 0.0
        %1557 = vmatprep.subr.mxu0 0.0
        %1558 = vmatpush1.msra.mxu0 0.0
        %1559 = vmatprep.subr.mxu0 0.0
        %1560 = vmatpush1.msra.mxu0 0.0
        %1561 = vmatprep.subr.mxu0 0.0
        %1562 = vmatpush1.msra.mxu0 0.0
        %1563 = vmatprep.subr.mxu0 0.0
        %1564 = vmatpush1.msra.mxu0 0.0
        %1565 = vmatprep.subr.mxu0 0.0
        %1566 = vmatpush1.msra.mxu0 0.0
        %1567 = vmatprep.subr.mxu0 0.0
        %1568 = vmatpush1.msra.mxu0 0.0
        %1569 = vmatprep.subr.mxu0 0.0
        %1570 = vmatpush1.msra.mxu0 0.0
        %1571 = vmatprep.subr.mxu0 0.0
        %1572 = vmatpush1.msra.mxu0 0.0
        %1573 = vmatprep.subr.mxu0 0.0
        %1574 = vmatpush1.msra.mxu0 0.0
        %1575 = vmatprep.subr.mxu0 0.0
        %1576 = vmatpush1.msra.mxu0 0.0
        %1577 = vmatprep.subr.mxu0 0.0
        %1578 = vmatpush1.msra.mxu0 0.0
        %1579 = vmatprep.subr.mxu0 0.0
        %1580 = vmatpush1.msra.mxu0 0.0
        %1581 = vmatprep.subr.mxu0 0.0
        %1582 = vmatpush1.msra.mxu0 0.0
        %1583 = vmatprep.subr.mxu0 0.0
        %1584 = vmatpush1.msra.mxu0 0.0
        %1585 = vmatprep.subr.mxu0 0.0
        %1586 = vmatpush1.msra.mxu0 0.0
        %1587 = vmatprep.subr.mxu0 0.0
        %1588 = vmatpush1.msra.mxu0 0.0
        %1589 = vmatprep.subr.mxu0 0.0
        %1590 = vmatpush1.msra.mxu0 0.0
        %1591 = vmatprep.subr.mxu0 0.0
        %1592 = vmatpush1.msra.mxu0 0.0
        %1593 = vmatprep.subr.mxu0 0.0
        %1594 = vmatpush1.msra.mxu0 0.0
        %1595 = vmatprep.subr.mxu0 0.0
        %1596 = vmatpush1.msra.mxu0 0.0
        %1597 = vmatprep.subr.mxu0 0.0
        %1598 = vmatpush1.msra.mxu0 0.0
        %1599 = vmatprep.subr.mxu0 0.0
        %1600 = vmatpush1.msra.mxu0 0.0
        %1601 = vmatprep.subr.mxu0 0.0
        %1602 = vmatpush1.msra.mxu0 0.0
        %1603 = vmatprep.mubr.f32.mxu0 0.0
        %1604 = vmatmul.mubr.f32.gmra.mrb[0].mxu0 %v1537
        %v1605 = vpop.f32.mrb[0].mxu0
        %v1606 = vadd.f32 %v1536, %v1605
        %v1607 = vpop.f32.mrb[0].mxu0
        %1608 = vdwg.mxu0
        %v1609 = vld [vmem:[%s907 + $0x4] sm:$0xf]
        %v1610 = vunpack.c.l.bf16 %v1609
        %v1611 = vsel %vm491, %v1531, 0
        %1613 = vmatprep.subr.mxu0 0.0
        %1614 = vmatpush1.msra.mxu0 %v294
        %1615 = vmatprep.subr.mxu0 0.0
        %1616 = vmatpush1.msra.mxu0 %v295
        %1617 = vmatprep.subr.mxu0 0.0
        %1618 = vmatpush1.msra.mxu0 %v296
        %1619 = vmatprep.subr.mxu0 0.0
        %1620 = vmatpush1.msra.mxu0 %v297
        %1621 = vmatprep.subr.mxu0 0.0
        %1622 = vmatpush1.msra.mxu0 0.0
        %1623 = vmatprep.subr.mxu0 0.0
        %1624 = vmatpush1.msra.mxu0 0.0
        %1625 = vmatprep.subr.mxu0 0.0
        %1626 = vmatpush1.msra.mxu0 0.0
        %1627 = vmatprep.subr.mxu0 0.0
        %1628 = vmatpush1.msra.mxu0 0.0
        %1629 = vmatprep.subr.mxu0 0.0
        %1630 = vmatpush1.msra.mxu0 0.0
        %1631 = vmatprep.subr.mxu0 0.0
        %1632 = vmatpush1.msra.mxu0 0.0
        %1633 = vmatprep.subr.mxu0 0.0
        %1634 = vmatpush1.msra.mxu0 0.0
        %1635 = vmatprep.subr.mxu0 0.0
        %1636 = vmatpush1.msra.mxu0 0.0
        %1637 = vmatprep.subr.mxu0 0.0
        %1638 = vmatpush1.msra.mxu0 0.0
        %1639 = vmatprep.subr.mxu0 0.0
        %1640 = vmatpush1.msra.mxu0 0.0
        %1641 = vmatprep.subr.mxu0 0.0
        %1642 = vmatpush1.msra.mxu0 0.0
        %1643 = vmatprep.subr.mxu0 0.0
        %1644 = vmatpush1.msra.mxu0 0.0
        %1645 = vmatprep.subr.mxu0 0.0
        %1646 = vmatpush1.msra.mxu0 0.0
        %1647 = vmatprep.subr.mxu0 0.0
        %1648 = vmatpush1.msra.mxu0 0.0
        %1649 = vmatprep.subr.mxu0 0.0
        %1650 = vmatpush1.msra.mxu0 0.0
        %1651 = vmatprep.subr.mxu0 0.0
        %1652 = vmatpush1.msra.mxu0 0.0
        %1653 = vmatprep.subr.mxu0 0.0
        %1654 = vmatpush1.msra.mxu0 0.0
        %1655 = vmatprep.subr.mxu0 0.0
        %1656 = vmatpush1.msra.mxu0 0.0
        %1657 = vmatprep.subr.mxu0 0.0
        %1658 = vmatpush1.msra.mxu0 0.0
        %1659 = vmatprep.subr.mxu0 0.0
        %1660 = vmatpush1.msra.mxu0 0.0
        %1661 = vmatprep.subr.mxu0 0.0
        %1662 = vmatpush1.msra.mxu0 0.0
        %1663 = vmatprep.subr.mxu0 0.0
        %1664 = vmatpush1.msra.mxu0 0.0
        %1665 = vmatprep.subr.mxu0 0.0
        %1666 = vmatpush1.msra.mxu0 0.0
        %1667 = vmatprep.subr.mxu0 0.0
        %1668 = vmatpush1.msra.mxu0 0.0
        %1669 = vmatprep.subr.mxu0 0.0
        %1670 = vmatpush1.msra.mxu0 0.0
        %1671 = vmatprep.subr.mxu0 0.0
        %1672 = vmatpush1.msra.mxu0 0.0
        %1673 = vmatprep.subr.mxu0 0.0
        %1674 = vmatpush1.msra.mxu0 0.0
        %1675 = vmatprep.subr.mxu0 0.0
        %1676 = vmatpush1.msra.mxu0 0.0
        %1677 = vmatprep.mubr.f32.mxu0 0.0
        %1678 = vmatmul.mubr.f32.gmra.mrb[0].mxu0 %v1611
        %v1679 = vpop.f32.mrb[0].mxu0
        %v1680 = vadd.f32 %v1610, %v1679
        %v1681 = vpop.f32.mrb[0].mxu0
        %1682 = vdwg.mxu0
        %v1683 = vxor.u32 %v1606, 2147483648
        %v1684 = vmul.f32 %v1683, 1.442695
        %v1685 = vpow.pop %v1684
        %v1686 = vadd.f32 %v1685, 1.0
        %v1687 = vrcp.pop %v1686
        %v1688 = vmul.f32 1.0, %v1687
        %v1689 = vtanh.pop %v1606
        %v1690 = vmul.f32 %v1688, %v1492
        %1692 = vrot.lane.b32.xlu0 %v1689, 64
        %v1693 = vpop.permute.xlu0 %1692
        %v1695 = vmul.f32 %v1688, %v1693
        %1697 = vrot.lane.b32.xlu0 %v1695, 32
        %v1698 = vpop.permute.xlu0 %1697
        %v1700 = vadd.f32 %v1690, %v1698
        %v1701 = vtanh.pop %v1700
        %1703 = vrot.lane.b32.xlu0 %v1701, 64
        %v1704 = vpop.permute.xlu0 %1703
        %v1706 = vmul.f32 %v1688, %v1704
        %v1707 = vxor.u32 %v1680, 2147483648
        %v1708 = vmul.f32 %v1707, 1.442695
        %v1709 = vpow.pop %v1708
        %v1710 = vadd.f32 %v1709, 1.0
        %v1711 = vrcp.pop %v1710
        %v1712 = vmul.f32 1.0, %v1711
        %v1713 = vtanh.pop %v1680
        %v1714 = vmul.f32 %v1712, %v1516
        %1716 = vrot.lane.b32.xlu0 %v1713, 64
        %v1717 = vpop.permute.xlu0 %1716
        %v1719 = vmul.f32 %v1712, %v1717
        %1721 = vrot.lane.b32.xlu0 %v1719, 32
        %v1722 = vpop.permute.xlu0 %1721
        %v1724 = vadd.f32 %v1714, %v1722
        %v1725 = vtanh.pop %v1724
        %1727 = vrot.lane.b32.xlu0 %v1725, 64
        %v1728 = vpop.permute.xlu0 %1727
        %v1730 = vmul.f32 %v1712, %v1728
        %1732 = vrot.lane.b32.xlu0 %v1706, 32
        %v1733 = vpop.permute.xlu0 %1732
        %s1735 = scalar_lea.vmem [#allocation3], 40
        %1736 = vst.msk [vmem:[%s1735] sm:$0xff] %vm491, %v1733
        %1738 = vrot.lane.b32.xlu0 %v1730, 32
        %v1739 = vpop.permute.xlu0 %1738
        %s1741 = scalar_lea.vmem [#allocation4], 16
        %1742 = vst.msk [vmem:[%s1741] sm:$0xff] %vm491, %v1739
        %v1743 = vld [vmem:[%s772] sm:$0xf]
        %v1744 = vunpack.c.l.bf16 %v1743
        %v1745 = vsel %vm491, %v1733, 0
        %1747 = vmatprep.subr.mxu0 0.0
        %1748 = vmatpush1.msra.mxu0 %v290
        %1749 = vmatprep.subr.mxu0 0.0
        %1750 = vmatpush1.msra.mxu0 %v291
        %1751 = vmatprep.subr.mxu0 0.0
        %1752 = vmatpush1.msra.mxu0 %v292
        %1753 = vmatprep.subr.mxu0 0.0
        %1754 = vmatpush1.msra.mxu0 %v293
        %1755 = vmatprep.subr.mxu0 0.0
        %1756 = vmatpush1.msra.mxu0 0.0
        %1757 = vmatprep.subr.mxu0 0.0
        %1758 = vmatpush1.msra.mxu0 0.0
        %1759 = vmatprep.subr.mxu0 0.0
        %1760 = vmatpush1.msra.mxu0 0.0
        %1761 = vmatprep.subr.mxu0 0.0
        %1762 = vmatpush1.msra.mxu0 0.0
        %1763 = vmatprep.subr.mxu0 0.0
        %1764 = vmatpush1.msra.mxu0 0.0
        %1765 = vmatprep.subr.mxu0 0.0
        %1766 = vmatpush1.msra.mxu0 0.0
        %1767 = vmatprep.subr.mxu0 0.0
        %1768 = vmatpush1.msra.mxu0 0.0
        %1769 = vmatprep.subr.mxu0 0.0
        %1770 = vmatpush1.msra.mxu0 0.0
        %1771 = vmatprep.subr.mxu0 0.0
        %1772 = vmatpush1.msra.mxu0 0.0
        %1773 = vmatprep.subr.mxu0 0.0
        %1774 = vmatpush1.msra.mxu0 0.0
        %1775 = vmatprep.subr.mxu0 0.0
        %1776 = vmatpush1.msra.mxu0 0.0
        %1777 = vmatprep.subr.mxu0 0.0
        %1778 = vmatpush1.msra.mxu0 0.0
        %1779 = vmatprep.subr.mxu0 0.0
        %1780 = vmatpush1.msra.mxu0 0.0
        %1781 = vmatprep.subr.mxu0 0.0
        %1782 = vmatpush1.msra.mxu0 0.0
        %1783 = vmatprep.subr.mxu0 0.0
        %1784 = vmatpush1.msra.mxu0 0.0
        %1785 = vmatprep.subr.mxu0 0.0
        %1786 = vmatpush1.msra.mxu0 0.0
        %1787 = vmatprep.subr.mxu0 0.0
        %1788 = vmatpush1.msra.mxu0 0.0
        %1789 = vmatprep.subr.mxu0 0.0
        %1790 = vmatpush1.msra.mxu0 0.0
        %1791 = vmatprep.subr.mxu0 0.0
        %1792 = vmatpush1.msra.mxu0 0.0
        %1793 = vmatprep.subr.mxu0 0.0
        %1794 = vmatpush1.msra.mxu0 0.0
        %1795 = vmatprep.subr.mxu0 0.0
        %1796 = vmatpush1.msra.mxu0 0.0
        %1797 = vmatprep.subr.mxu0 0.0
        %1798 = vmatpush1.msra.mxu0 0.0
        %1799 = vmatprep.subr.mxu0 0.0
        %1800 = vmatpush1.msra.mxu0 0.0
        %1801 = vmatprep.subr.mxu0 0.0
        %1802 = vmatpush1.msra.mxu0 0.0
        %1803 = vmatprep.subr.mxu0 0.0
        %1804 = vmatpush1.msra.mxu0 0.0
        %1805 = vmatprep.subr.mxu0 0.0
        %1806 = vmatpush1.msra.mxu0 0.0
        %1807 = vmatprep.subr.mxu0 0.0
        %1808 = vmatpush1.msra.mxu0 0.0
        %1809 = vmatprep.subr.mxu0 0.0
        %1810 = vmatpush1.msra.mxu0 0.0
        %1811 = vmatprep.mubr.f32.mxu0 0.0
        %1812 = vmatmul.mubr.f32.gmra.mrb[0].mxu0 %v1745
        %v1813 = vpop.f32.mrb[0].mxu0
        %v1814 = vadd.f32 %v1744, %v1813
        %v1815 = vpop.f32.mrb[0].mxu0
        %1816 = vdwg.mxu0
        %v1817 = vld [vmem:[%s697 + $0x4] sm:$0xf]
        %v1818 = vunpack.c.l.bf16 %v1817
        %v1819 = vsel %vm491, %v1739, 0
        %1821 = vmatprep.subr.mxu0 0.0
        %1822 = vmatpush1.msra.mxu0 %v294
        %1823 = vmatprep.subr.mxu0 0.0
        %1824 = vmatpush1.msra.mxu0 %v295
        %1825 = vmatprep.subr.mxu0 0.0
        %1826 = vmatpush1.msra.mxu0 %v296
        %1827 = vmatprep.subr.mxu0 0.0
        %1828 = vmatpush1.msra.mxu0 %v297
        %1829 = vmatprep.subr.mxu0 0.0
        %1830 = vmatpush1.msra.mxu0 0.0
        %1831 = vmatprep.subr.mxu0 0.0
        %1832 = vmatpush1.msra.mxu0 0.0
        %1833 = vmatprep.subr.mxu0 0.0
        %1834 = vmatpush1.msra.mxu0 0.0
        %1835 = vmatprep.subr.mxu0 0.0
        %1836 = vmatpush1.msra.mxu0 0.0
        %1837 = vmatprep.subr.mxu0 0.0
        %1838 = vmatpush1.msra.mxu0 0.0
        %1839 = vmatprep.subr.mxu0 0.0
        %1840 = vmatpush1.msra.mxu0 0.0
        %1841 = vmatprep.subr.mxu0 0.0
        %1842 = vmatpush1.msra.mxu0 0.0
        %1843 = vmatprep.subr.mxu0 0.0
        %1844 = vmatpush1.msra.mxu0 0.0
        %1845 = vmatprep.subr.mxu0 0.0
        %1846 = vmatpush1.msra.mxu0 0.0
        %1847 = vmatprep.subr.mxu0 0.0
        %1848 = vmatpush1.msra.mxu0 0.0
        %1849 = vmatprep.subr.mxu0 0.0
        %1850 = vmatpush1.msra.mxu0 0.0
        %1851 = vmatprep.subr.mxu0 0.0
        %1852 = vmatpush1.msra.mxu0 0.0
        %1853 = vmatprep.subr.mxu0 0.0
        %1854 = vmatpush1.msra.mxu0 0.0
        %1855 = vmatprep.subr.mxu0 0.0
        %1856 = vmatpush1.msra.mxu0 0.0
        %1857 = vmatprep.subr.mxu0 0.0
        %1858 = vmatpush1.msra.mxu0 0.0
        %1859 = vmatprep.subr.mxu0 0.0
        %1860 = vmatpush1.msra.mxu0 0.0
        %1861 = vmatprep.subr.mxu0 0.0
        %1862 = vmatpush1.msra.mxu0 0.0
        %1863 = vmatprep.subr.mxu0 0.0
        %1864 = vmatpush1.msra.mxu0 0.0
        %1865 = vmatprep.subr.mxu0 0.0
        %1866 = vmatpush1.msra.mxu0 0.0
        %1867 = vmatprep.subr.mxu0 0.0
        %1868 = vmatpush1.msra.mxu0 0.0
        %1869 = vmatprep.subr.mxu0 0.0
        %1870 = vmatpush1.msra.mxu0 0.0
        %1871 = vmatprep.subr.mxu0 0.0
        %1872 = vmatpush1.msra.mxu0 0.0
        %1873 = vmatprep.subr.mxu0 0.0
        %1874 = vmatpush1.msra.mxu0 0.0
        %1875 = vmatprep.subr.mxu0 0.0
        %1876 = vmatpush1.msra.mxu0 0.0
        %1877 = vmatprep.subr.mxu0 0.0
        %1878 = vmatpush1.msra.mxu0 0.0
        %1879 = vmatprep.subr.mxu0 0.0
        %1880 = vmatpush1.msra.mxu0 0.0
        %1881 = vmatprep.subr.mxu0 0.0
        %1882 = vmatpush1.msra.mxu0 0.0
        %1883 = vmatprep.subr.mxu0 0.0
        %1884 = vmatpush1.msra.mxu0 0.0
        %1885 = vmatprep.mubr.f32.mxu0 0.0
        %1886 = vmatmul.mubr.f32.gmra.mrb[0].mxu0 %v1819
        %v1887 = vpop.f32.mrb[0].mxu0
        %v1888 = vadd.f32 %v1818, %v1887
        %v1889 = vpop.f32.mrb[0].mxu0
        %1890 = vdwg.mxu0
        %v1891 = vxor.u32 %v1814, 2147483648
        %v1892 = vmul.f32 %v1891, 1.442695
        %v1893 = vpow.pop %v1892
        %v1894 = vadd.f32 %v1893, 1.0
        %v1895 = vrcp.pop %v1894
        %v1896 = vmul.f32 1.0, %v1895
        %v1897 = vtanh.pop %v1814
        %v1898 = vmul.f32 %v1896, %v1700
        %1900 = vrot.lane.b32.xlu0 %v1897, 64
        %v1901 = vpop.permute.xlu0 %1900
        %v1903 = vmul.f32 %v1896, %v1901
        %1905 = vrot.lane.b32.xlu0 %v1903, 32
        %v1906 = vpop.permute.xlu0 %1905
        %v1908 = vadd.f32 %v1898, %v1906
        %v1909 = vtanh.pop %v1908
        %1911 = vrot.lane.b32.xlu0 %v1909, 64
        %v1912 = vpop.permute.xlu0 %1911
        %v1914 = vmul.f32 %v1896, %v1912
        %v1915 = vxor.u32 %v1888, 2147483648
        %v1916 = vmul.f32 %v1915, 1.442695
        %v1917 = vpow.pop %v1916
        %v1918 = vadd.f32 %v1917, 1.0
        %v1919 = vrcp.pop %v1918
        %v1920 = vmul.f32 1.0, %v1919
        %v1921 = vtanh.pop %v1888
        %v1922 = vmul.f32 %v1920, %v1724
        %1924 = vrot.lane.b32.xlu0 %v1921, 64
        %v1925 = vpop.permute.xlu0 %1924
        %v1927 = vmul.f32 %v1920, %v1925
        %1929 = vrot.lane.b32.xlu0 %v1927, 32
        %v1930 = vpop.permute.xlu0 %1929
        %v1932 = vadd.f32 %v1922, %v1930
        %v1933 = vtanh.pop %v1932
        %1935 = vrot.lane.b32.xlu0 %v1933, 64
        %v1936 = vpop.permute.xlu0 %1935
        %v1938 = vmul.f32 %v1920, %v1936
        %1940 = vrot.lane.b32.xlu0 %v1914, 32
        %v1941 = vpop.permute.xlu0 %1940
        %s1943 = scalar_lea.vmem [#allocation3], 48
        %1944 = vst.msk [vmem:[%s1943] sm:$0xff] %vm491, %v1941
        %1946 = vrot.lane.b32.xlu0 %v1938, 32
        %v1947 = vpop.permute.xlu0 %1946
        %s1949 = scalar_lea.vmem [#allocation4], 8
        %1950 = vst.msk [vmem:[%s1949] sm:$0xff] %vm491, %v1947
        %v1951 = vld [vmem:[%s565] sm:$0xf]
        %v1952 = vunpack.c.l.bf16 %v1951
        %v1953 = vsel %vm491, %v1941, 0
        %1955 = vmatprep.subr.mxu0 0.0
        %1956 = vmatpush1.msra.mxu0 %v290
        %1957 = vmatprep.subr.mxu0 0.0
        %1958 = vmatpush1.msra.mxu0 %v291
        %1959 = vmatprep.subr.mxu0 0.0
        %1960 = vmatpush1.msra.mxu0 %v292
        %1961 = vmatprep.subr.mxu0 0.0
        %1962 = vmatpush1.msra.mxu0 %v293
        %1963 = vmatprep.subr.mxu0 0.0
        %1964 = vmatpush1.msra.mxu0 0.0
        %1965 = vmatprep.subr.mxu0 0.0
        %1966 = vmatpush1.msra.mxu0 0.0
        %1967 = vmatprep.subr.mxu0 0.0
        %1968 = vmatpush1.msra.mxu0 0.0
        %1969 = vmatprep.subr.mxu0 0.0
        %1970 = vmatpush1.msra.mxu0 0.0
        %1971 = vmatprep.subr.mxu0 0.0
        %1972 = vmatpush1.msra.mxu0 0.0
        %1973 = vmatprep.subr.mxu0 0.0
        %1974 = vmatpush1.msra.mxu0 0.0
        %1975 = vmatprep.subr.mxu0 0.0
        %1976 = vmatpush1.msra.mxu0 0.0
        %1977 = vmatprep.subr.mxu0 0.0
        %1978 = vmatpush1.msra.mxu0 0.0
        %1979 = vmatprep.subr.mxu0 0.0
        %1980 = vmatpush1.msra.mxu0 0.0
        %1981 = vmatprep.subr.mxu0 0.0
        %1982 = vmatpush1.msra.mxu0 0.0
        %1983 = vmatprep.subr.mxu0 0.0
        %1984 = vmatpush1.msra.mxu0 0.0
        %1985 = vmatprep.subr.mxu0 0.0
        %1986 = vmatpush1.msra.mxu0 0.0
        %1987 = vmatprep.subr.mxu0 0.0
        %1988 = vmatpush1.msra.mxu0 0.0
        %1989 = vmatprep.subr.mxu0 0.0
        %1990 = vmatpush1.msra.mxu0 0.0
        %1991 = vmatprep.subr.mxu0 0.0
        %1992 = vmatpush1.msra.mxu0 0.0
        %1993 = vmatprep.subr.mxu0 0.0
        %1994 = vmatpush1.msra.mxu0 0.0
        %1995 = vmatprep.subr.mxu0 0.0
        %1996 = vmatpush1.msra.mxu0 0.0
        %1997 = vmatprep.subr.mxu0 0.0
        %1998 = vmatpush1.msra.mxu0 0.0
        %1999 = vmatprep.subr.mxu0 0.0
        %2000 = vmatpush1.msra.mxu0 0.0
        %2001 = vmatprep.subr.mxu0 0.0
        %2002 = vmatpush1.msra.mxu0 0.0
        %2003 = vmatprep.subr.mxu0 0.0
        %2004 = vmatpush1.msra.mxu0 0.0
        %2005 = vmatprep.subr.mxu0 0.0
        %2006 = vmatpush1.msra.mxu0 0.0
        %2007 = vmatprep.subr.mxu0 0.0
        %2008 = vmatpush1.msra.mxu0 0.0
        %2009 = vmatprep.subr.mxu0 0.0
        %2010 = vmatpush1.msra.mxu0 0.0
        %2011 = vmatprep.subr.mxu0 0.0
        %2012 = vmatpush1.msra.mxu0 0.0
        %2013 = vmatprep.subr.mxu0 0.0
        %2014 = vmatpush1.msra.mxu0 0.0
        %2015 = vmatprep.subr.mxu0 0.0
        %2016 = vmatpush1.msra.mxu0 0.0
        %2017 = vmatprep.subr.mxu0 0.0
        %2018 = vmatpush1.msra.mxu0 0.0
        %2019 = vmatprep.mubr.f32.mxu0 0.0
        %2020 = vmatmul.mubr.f32.gmra.mrb[0].mxu0 %v1953
        %v2021 = vpop.f32.mrb[0].mxu0
        %v2022 = vadd.f32 %v1952, %v2021
        %v2023 = vpop.f32.mrb[0].mxu0
        %2024 = vdwg.mxu0
        %v2025 = vld [vmem:[#allocation2 + $0x4] sm:$0xf]
        %v2026 = vunpack.c.l.bf16 %v2025
        %v2027 = vsel %vm491, %v1947, 0
        %2029 = vmatprep.subr.mxu0 0.0
        %2030 = vmatpush1.msra.mxu0 %v294
        %2031 = vmatprep.subr.mxu0 0.0
        %2032 = vmatpush1.msra.mxu0 %v295
        %2033 = vmatprep.subr.mxu0 0.0
        %2034 = vmatpush1.msra.mxu0 %v296
        %2035 = vmatprep.subr.mxu0 0.0
        %2036 = vmatpush1.msra.mxu0 %v297
        %2037 = vmatprep.subr.mxu0 0.0
        %2038 = vmatpush1.msra.mxu0 0.0
        %2039 = vmatprep.subr.mxu0 0.0
        %2040 = vmatpush1.msra.mxu0 0.0
        %2041 = vmatprep.subr.mxu0 0.0
        %2042 = vmatpush1.msra.mxu0 0.0
        %2043 = vmatprep.subr.mxu0 0.0
        %2044 = vmatpush1.msra.mxu0 0.0
        %2045 = vmatprep.subr.mxu0 0.0
        %2046 = vmatpush1.msra.mxu0 0.0
        %2047 = vmatprep.subr.mxu0 0.0
        %2048 = vmatpush1.msra.mxu0 0.0
        %2049 = vmatprep.subr.mxu0 0.0
        %2050 = vmatpush1.msra.mxu0 0.0
        %2051 = vmatprep.subr.mxu0 0.0
        %2052 = vmatpush1.msra.mxu0 0.0
        %2053 = vmatprep.subr.mxu0 0.0
        %2054 = vmatpush1.msra.mxu0 0.0
        %2055 = vmatprep.subr.mxu0 0.0
        %2056 = vmatpush1.msra.mxu0 0.0
        %2057 = vmatprep.subr.mxu0 0.0
        %2058 = vmatpush1.msra.mxu0 0.0
        %2059 = vmatprep.subr.mxu0 0.0
        %2060 = vmatpush1.msra.mxu0 0.0
        %2061 = vmatprep.subr.mxu0 0.0
        %2062 = vmatpush1.msra.mxu0 0.0
        %2063 = vmatprep.subr.mxu0 0.0
        %2064 = vmatpush1.msra.mxu0 0.0
        %2065 = vmatprep.subr.mxu0 0.0
        %2066 = vmatpush1.msra.mxu0 0.0
        %2067 = vmatprep.subr.mxu0 0.0
        %2068 = vmatpush1.msra.mxu0 0.0
        %2069 = vmatprep.subr.mxu0 0.0
        %2070 = vmatpush1.msra.mxu0 0.0
        %2071 = vmatprep.subr.mxu0 0.0
        %2072 = vmatpush1.msra.mxu0 0.0
        %2073 = vmatprep.subr.mxu0 0.0
        %2074 = vmatpush1.msra.mxu0 0.0
        %2075 = vmatprep.subr.mxu0 0.0
        %2076 = vmatpush1.msra.mxu0 0.0
        %2077 = vmatprep.subr.mxu0 0.0
        %2078 = vmatpush1.msra.mxu0 0.0
        %2079 = vmatprep.subr.mxu0 0.0
        %2080 = vmatpush1.msra.mxu0 0.0
        %2081 = vmatprep.subr.mxu0 0.0
        %2082 = vmatpush1.msra.mxu0 0.0
        %2083 = vmatprep.subr.mxu0 0.0
        %2084 = vmatpush1.msra.mxu0 0.0
        %2085 = vmatprep.subr.mxu0 0.0
        %2086 = vmatpush1.msra.mxu0 0.0
        %2087 = vmatprep.subr.mxu0 0.0
        %2088 = vmatpush1.msra.mxu0 0.0
        %2089 = vmatprep.subr.mxu0 0.0
        %2090 = vmatpush1.msra.mxu0 0.0
        %2091 = vmatprep.subr.mxu0 0.0
        %2092 = vmatpush1.msra.mxu0 0.0
        %2093 = vmatprep.mubr.f32.mxu0 0.0
        %2094 = vmatmul.mubr.f32.gmra.mrb[0].mxu0 %v2027
        %v2095 = vpop.f32.mrb[0].mxu0
        %v2096 = vadd.f32 %v2026, %v2095
        %v2097 = vpop.f32.mrb[0].mxu0
        %2098 = vdwg.mxu0
        %v2099 = vxor.u32 %v2022, 2147483648
        %v2100 = vmul.f32 %v2099, 1.442695
        %v2101 = vpow.pop %v2100
        %v2102 = vadd.f32 %v2101, 1.0
        %v2103 = vrcp.pop %v2102
        %v2104 = vmul.f32 1.0, %v2103
        %v2105 = vtanh.pop %v2022
        %v2106 = vmul.f32 %v2104, %v1908
        %2108 = vrot.lane.b32.xlu0 %v2105, 64
        %v2109 = vpop.permute.xlu0 %2108
        %v2111 = vmul.f32 %v2104, %v2109
        %2113 = vrot.lane.b32.xlu0 %v2111, 32
        %v2114 = vpop.permute.xlu0 %2113
        %v2116 = vadd.f32 %v2106, %v2114
        %v2117 = vtanh.pop %v2116
        %2119 = vrot.lane.b32.xlu0 %v2117, 64
        %v2120 = vpop.permute.xlu0 %2119
        %v2122 = vmul.f32 %v2104, %v2120
        %v2123 = vxor.u32 %v2096, 2147483648
        %v2124 = vmul.f32 %v2123, 1.442695
        %v2125 = vpow.pop %v2124
        %v2126 = vadd.f32 %v2125, 1.0
        %v2127 = vrcp.pop %v2126
        %v2128 = vmul.f32 1.0, %v2127
        %v2129 = vtanh.pop %v2096
        %v2130 = vmul.f32 %v2128, %v1932
        %2132 = vrot.lane.b32.xlu0 %v2129, 64
        %v2133 = vpop.permute.xlu0 %2132
        %v2135 = vmul.f32 %v2128, %v2133
        %2137 = vrot.lane.b32.xlu0 %v2135, 32
        %v2138 = vpop.permute.xlu0 %2137
        %v2140 = vadd.f32 %v2130, %v2138
        %v2141 = vtanh.pop %v2140
        %2143 = vrot.lane.b32.xlu0 %v2141, 64
        %v2144 = vpop.permute.xlu0 %2143
        %v2146 = vmul.f32 %v2128, %v2144
        %2148 = vrot.lane.b32.xlu0 %v2122, 32
        %v2149 = vpop.permute.xlu0 %2148
        %s2151 = scalar_lea.vmem [#allocation3], 56
        %2152 = vst.msk [vmem:[%s2151] sm:$0xff] %vm491, %v2149
        %2154 = vrot.lane.b32.xlu0 %v2146, 32
        %v2155 = vpop.permute.xlu0 %2154
        %2157 = vst.msk [vmem:[#allocation4] sm:$0xff] %vm491, %v2155
        %v2158 = vld [vmem:[#allocation3] sm:$0xff]
        %v2159 = vld [vmem:[#allocation3 + $0x8] sm:$0xff]
        %v2160 = vld [vmem:[#allocation3 + $0x10] sm:$0xff]
        %v2161 = vld [vmem:[#allocation3 + $0x18] sm:$0xff]
        %v2162 = vld [vmem:[#allocation3 + $0x20] sm:$0xff]
        %v2163 = vld [vmem:[#allocation3 + $0x28] sm:$0xff]
        %v2164 = vld [vmem:[#allocation3 + $0x30] sm:$0xff]
        %v2165 = vld [vmem:[#allocation3 + $0x38] sm:$0xff]
        %2166 = vst.msk [vmem:[%s285] sm:$0xff] %vm491, %v2158
        %2167 = vst.msk [vmem:[%s285 + $0x8] sm:$0xff] %vm491, %v2159
        %2168 = vst.msk [vmem:[%s285 + $0x10] sm:$0xff] %vm491, %v2160
        %2169 = vst.msk [vmem:[%s285 + $0x18] sm:$0xff] %vm491, %v2161
        %2170 = vst.msk [vmem:[%s285 + $0x20] sm:$0xff] %vm491, %v2162
        %2171 = vst.msk [vmem:[%s285 + $0x28] sm:$0xff] %vm491, %v2163
        %2172 = vst.msk [vmem:[%s285 + $0x30] sm:$0xff] %vm491, %v2164
        %2173 = vst.msk [vmem:[%s285 + $0x38] sm:$0xff] %vm491, %v2165
        %v2174 = vld [vmem:[#allocation4] sm:$0xff]
        %v2175 = vld [vmem:[#allocation4 + $0x8] sm:$0xff]
        %v2176 = vld [vmem:[#allocation4 + $0x10] sm:$0xff]
        %v2177 = vld [vmem:[#allocation4 + $0x18] sm:$0xff]
        %v2178 = vld [vmem:[#allocation4 + $0x20] sm:$0xff]
        %v2179 = vld [vmem:[#allocation4 + $0x28] sm:$0xff]
        %v2180 = vld [vmem:[#allocation4 + $0x30] sm:$0xff]
        %v2181 = vld [vmem:[#allocation4 + $0x38] sm:$0xff]
        %2190 = vrot.lane.b32.xlu0 %v2174, 32
        %v2191 = vpop.permute.xlu0 %2190
        %2192 = vrot.lane.b32.xlu0 %v2175, 32
        %v2193 = vpop.permute.xlu0 %2192
        %2194 = vrot.lane.b32.xlu0 %v2176, 32
        %v2195 = vpop.permute.xlu0 %2194
        %2196 = vrot.lane.b32.xlu0 %v2177, 32
        %v2197 = vpop.permute.xlu0 %2196
        %2198 = vrot.lane.b32.xlu0 %v2178, 32
        %v2199 = vpop.permute.xlu0 %2198
        %2200 = vrot.lane.b32.xlu0 %v2179, 32
        %v2201 = vpop.permute.xlu0 %2200
        %2202 = vrot.lane.b32.xlu0 %v2180, 32
        %v2203 = vpop.permute.xlu0 %2202
        %2204 = vrot.lane.b32.xlu0 %v2181, 32
        %v2205 = vpop.permute.xlu0 %2204
        %vm2214 = vcmask 523520
        %2215 = vst.msk [vmem:[%s285] sm:$0xff] %vm2214, %v2191
        %2216 = vst.msk [vmem:[%s285 + $0x8] sm:$0xff] %vm2214, %v2193
        %2217 = vst.msk [vmem:[%s285 + $0x10] sm:$0xff] %vm2214, %v2195
        %2218 = vst.msk [vmem:[%s285 + $0x18] sm:$0xff] %vm2214, %v2197
        %2219 = vst.msk [vmem:[%s285 + $0x20] sm:$0xff] %vm2214, %v2199
        %2220 = vst.msk [vmem:[%s285 + $0x28] sm:$0xff] %vm2214, %v2201
        %2221 = vst.msk [vmem:[%s285 + $0x30] sm:$0xff] %vm2214, %v2203
        %2222 = vst.msk [vmem:[%s285 + $0x38] sm:$0xff] %vm2214, %v2205
        %s2223 = sand.u32 %s142, 1
        %s2224 = scalar_lea.sflag [#allocation7], %s2223
        %s2225 = sand.u32 %s142, 1
        %s2226 = smul.addr %s2225, 64
        %s2227 = scalar_lea.vmem [#allocation13], %s2226
        // Predicated region
        $region57: #{tpu_custom_call.1} parent=39 // pred_check
          %p2228 = pneg %p152
        $region58: #{tpu_custom_call.1} parent=39 // pred_check_branch
          %2230 = sbr.rel (%p2228) target = $region60
        $region59: #{tpu_custom_call.1} parent=39 // pred_region
          %s2232 = ssub.s32 1024, 1024
          %2233 = vsyncadd %s2224, %s2232
          %s2234 = smul.addr %s24, 128
          %s2235 = scalar_lea.hbm %s5, %s2234
          %s2236 = sshll.u32 %s2227, 4
          %s2237 = int_to_ptr.vmem [resolvable:$true] %s2236
          %2242 = dma.vmem_to_hbm [thread:$0]  %s2237, 1024, %s2235, %s2224, 128, 256, 8
        $region60: #{tpu_custom_call.1} parent=39 // pred_fallthru
          _
      $region40: #{tpu_custom_call.1} parent=5 // pred_fallthru
        _
      %p2243 = scmp.le.s32.totalorder 2, %s19
      // Predicated region
      $region61: #{tpu_custom_call.1} parent=5 // pred_check
        %p2244 = pneg %p2243
      $region62: #{tpu_custom_call.1} parent=5 // pred_check_branch
        %2246 = sbr.rel (%p2244) target = $region64
      $region63: #{tpu_custom_call.1} parent=5 // pred_region
        %s2247 = ssub.s32 %s19, 2
        // Predicated region
        $region65: #{tpu_custom_call.1} parent=63 // pred_check
          %p2248 = pneg %p158
        $region66: #{tpu_custom_call.1} parent=63 // pred_check_branch
          %2250 = sbr.rel (%p2248) target = $region68
        $region67: #{tpu_custom_call.1} parent=63 // pred_region
          %s2251 = sand.u32 %s143, 1
          %s2252 = scalar_lea.sflag [#allocation7], %s2251
          %s2253 = sand.u32 %s143, 1
          %s2254 = smul.addr %s2253, 64
          %s2255 = scalar_lea.vmem [#allocation13], %s2254
          %2256 = dma.done %s2252, 1024
        $region68: #{tpu_custom_call.1} parent=63 // pred_fallthru
          _
      $region64: #{tpu_custom_call.1} parent=5 // pred_fallthru
        _
    $region6: #{tpu_custom_call.1} parent=1 // loop_footer
      %s23 = sadd.s32 1, %s19
    $region7: #{tpu_custom_call.1} parent=1 // loop_footer_branch
      %18 = sbr.rel target = $region3
    $region8: #{tpu_custom_call.1} parent=1 // loop_exit
      _
    %2257 = vsyncpa [#allocation6], 1
    %s2258 = scalar_lea.sflag [#allocation6], 1
    %2259 = vsyncpa %s2258, 1
    %2260 = vsyncpa [#allocation9], 1
    %2261 = vsyncpa [#allocation12], 1
    %2262 = vsyncpa [#allocation7], 1
    %s2263 = scalar_lea.sflag [#allocation7], 1
    %2264 = vsyncpa %s2263, 1

</llo_original>
